<compile_context>
chip_gen: v6e
topology: v6e:2x2x1
jax: 0.10.0
libtpu: 0.0.40
codegen_flags: <defaults>
</compile_context>

<pallas_src>
import jax
import jax.numpy as jnp
from jax.experimental import pallas as pl
from jax.experimental.pallas import tpu as pltpu


def _attention_kernel(enc_ref, dec_ref, wet_ref, be_ref, wdt_ref, bd_ref,
                      wf_ref, awe_ref, alpha_ref):
    tb, P, E = enc_ref.shape
    A = wet_ref.shape[1]

    enc3 = enc_ref[...]                         # (TB, P, E)
    enc2 = enc3.reshape(tb * P, E)              # fold batch*pixels -> rows

    # encoder projection for all TB*P rows at once  -> (TB*P, A)
    att1 = jnp.dot(enc2, wet_ref[...],
                   preferred_element_type=jnp.float32) + be_ref[...]
    # decoder projection                            -> (TB, A)
    att2 = jnp.dot(dec_ref[...], wdt_ref[...],
                   preferred_element_type=jnp.float32) + bd_ref[...]

    # relu(att1 + att2.unsqueeze(1))                -> (TB, P, A)
    h = jnp.maximum(att1.reshape(tb, P, A) + att2[:, None, :], 0.0)

    # score projection: VPU multiply by the Wf row + lane reduction over A.
    # (bf is omitted: a bias constant over pixels cancels under the softmax.)
    wf = wf_ref[...]                            # (1, A)
    scores = jnp.sum(h * wf[None, :, :], axis=-1)      # (TB, P), pixels on lanes

    # lane-major softmax over the pixel axis
    m = jnp.max(scores, axis=-1, keepdims=True)
    e = jnp.exp(scores - m)
    alpha = e * pl.reciprocal(jnp.sum(e, axis=-1, keepdims=True), approx=False)
    alpha_ref[...] = alpha                      # (TB, P)

    # attention-weighted encoding: sum_p alpha[b, p] * enc[b, p, :]  -> (TB, E)
    awe_ref[...] = jnp.sum(enc3 * alpha[:, :, None], axis=1)


def attention_pallas(encoder_out, decoder_hidden, params, tile_b=8):
    B, P, E = encoder_out.shape
    D = decoder_hidden.shape[1]
    A = params["We"].shape[0]

    tile_b = max(1, min(tile_b, B))
    n_tiles = pl.cdiv(B, tile_b)
    Bp = n_tiles * tile_b
    if Bp != B:                                 # pad batch to a tile multiple
        encoder_out = jnp.pad(encoder_out, ((0, Bp - B), (0, 0), (0, 0)))
        decoder_hidden = jnp.pad(decoder_hidden, ((0, Bp - B), (0, 0)))

    we_t = params["We"].T.astype(jnp.float32)   # (E, A)
    wd_t = params["Wd"].T.astype(jnp.float32)   # (D, A)
    be = params["be"].reshape(1, A).astype(jnp.float32)
    bd = params["bd"].reshape(1, A).astype(jnp.float32)
    wf = params["Wf"].reshape(1, A).astype(jnp.float32)
    # TODO(synk): at realistic sizes (E~2048, A~512) cast we_t/wd_t/enc to bf16
    # for the MXU path on v6e/v7x; kept f32 here for exactness at toy sizes.

    grid_spec = pltpu.PrefetchScalarGridSpec(
        num_scalar_prefetch=0,
        grid=(n_tiles,),
        in_specs=[
            pl.BlockSpec((tile_b, P, E), lambda b: (b, 0, 0)),  # encoder_out
            pl.BlockSpec((tile_b, D),    lambda b: (b, 0)),     # decoder_hidden
            pl.BlockSpec((E, A),         lambda b: (0, 0)),     # We^T (grid-constant)
            pl.BlockSpec((1, A),         lambda b: (0, 0)),     # be
            pl.BlockSpec((D, A),         lambda b: (0, 0)),     # Wd^T (grid-constant)
            pl.BlockSpec((1, A),         lambda b: (0, 0)),     # bd
            pl.BlockSpec((1, A),         lambda b: (0, 0)),     # Wf
        ],
        out_specs=[
            pl.BlockSpec((tile_b, E), lambda b: (b, 0)),        # awe
            pl.BlockSpec((tile_b, P), lambda b: (b, 0)),        # alpha
        ],
    )

    awe, alpha = pl.pallas_call(
        _attention_kernel,
        out_shape=(
            jax.ShapeDtypeStruct((Bp, E), jnp.float32),
            jax.ShapeDtypeStruct((Bp, P), jnp.float32),
        ),
        grid_spec=grid_spec,
        compiler_params=pltpu.CompilerParams(
            dimension_semantics=("parallel",)),
    )(encoder_out, decoder_hidden, we_t, be, wd_t, bd, wf)
    return awe[:B], alpha[:B]


def attention_reference(encoder_out, decoder_hidden, params):
    """Pure-JAX reference mirroring the PyTorch forward (keeps bf)."""
    att1 = encoder_out @ params["We"].T + params["be"]              # (B, P, A)
    att2 = decoder_hidden @ params["Wd"].T + params["bd"]           # (B, A)
    h = jnp.maximum(att1 + att2[:, None, :], 0.0)                   # (B, P, A)
    att = (h @ params["Wf"].reshape(-1, 1) + params["bf"])[..., 0]  # (B, P)
    alpha = jax.nn.softmax(att, axis=1)
    awe = jnp.sum(encoder_out * alpha[:, :, None], axis=1)          # (B, E)
    return awe, alpha


def init_params(key, encoder_dim, decoder_dim, attention_dim):
    ks = jax.random.split(key, 6)
    s = 0.1
    return {
        "We": s * jax.random.normal(ks[0], (attention_dim, encoder_dim), jnp.float32),
        "be": s * jax.random.normal(ks[1], (attention_dim,), jnp.float32),
        "Wd": s * jax.random.normal(ks[2], (attention_dim, decoder_dim), jnp.float32),
        "bd": s * jax.random.normal(ks[3], (attention_dim,), jnp.float32),
        "Wf": s * jax.random.normal(ks[4], (attention_dim,), jnp.float32),
        "bf": s * jax.random.normal(ks[5], (1,), jnp.float32),
    }


if __name__ == "__main__":
    # Lane-aligned toy sizes: P, E, A multiples of 128 so the softmax, matmuls
    # and output stores are all lane-dense; TILE_B=8 folds 8*128=1024 rows per
    # MXU matmul and leaves 2 grid steps so both v7x TensorCores get work.
    B, P = 16, 128            # batch, num_pixels
    E, D, A = 128, 64, 128    # encoder_dim, decoder_dim, attention_dim
    TILE_B = 8

    key = jax.random.PRNGKey(0)
    k_enc, k_dec, k_par = jax.random.split(key, 3)
    encoder_out = jax.random.normal(k_enc, (B, P, E), jnp.float32)
    decoder_hidden = jax.random.normal(k_dec, (B, D), jnp.float32)
    params = init_params(k_par, E, D, A)

    awe, alpha = attention_pallas(encoder_out, decoder_hidden, params,
                                  tile_b=TILE_B)
    jax.block_until_ready((awe, alpha))

    awe_ref, alpha_ref = attention_reference(encoder_out, decoder_hidden, params)
    assert jnp.allclose(awe, awe_ref, atol=1e-4, rtol=1e-4), \
        float(jnp.max(jnp.abs(awe - awe_ref)))
    assert jnp.allclose(alpha, alpha_ref, atol=2e-5, rtol=1e-4), \
        float(jnp.max(jnp.abs(alpha - alpha_ref)))

    print("KERNEL_OK")
</pallas_src>

<mosaic_0001>
module attributes {stable_mosaic.version = 11 : i64} {
  func.func @_attention_kernel(%arg0: i32, %arg1: memref<8x128x128xf32, #tpu.memory_space<vmem>>, %arg2: memref<8x64xf32, #tpu.memory_space<vmem>>, %arg3: memref<128x128xf32, #tpu.memory_space<vmem>>, %arg4: memref<1x128xf32, #tpu.memory_space<vmem>>, %arg5: memref<64x128xf32, #tpu.memory_space<vmem>>, %arg6: memref<1x128xf32, #tpu.memory_space<vmem>>, %arg7: memref<1x128xf32, #tpu.memory_space<vmem>>, %arg8: memref<8x128xf32, #tpu.memory_space<vmem>>, %arg9: memref<8x128xf32, #tpu.memory_space<vmem>>) attributes {dimension_semantics = [#tpu.dimension_semantics<parallel>], iteration_bounds = array<i64: 2>, scalar_prefetch = 0 : i64, scratch_operands = 0 : i64, tpu.core_type = #tpu.core_type<tc>, window_params = [{transform_indices = @transform_0, window_bounds = array<i64: 8, 128, 128>}, {transform_indices = @transform_1, window_bounds = array<i64: 8, 64>}, {pipeline_mode = #tpu.pipeline_mode<synchronous>, transform_indices = @transform_2, window_bounds = array<i64: 128, 128>}, {pipeline_mode = #tpu.pipeline_mode<synchronous>, transform_indices = @transform_3, window_bounds = array<i64: 1, 128>}, {pipeline_mode = #tpu.pipeline_mode<synchronous>, transform_indices = @transform_4, window_bounds = array<i64: 64, 128>}, {pipeline_mode = #tpu.pipeline_mode<synchronous>, transform_indices = @transform_5, window_bounds = array<i64: 1, 128>}, {pipeline_mode = #tpu.pipeline_mode<synchronous>, transform_indices = @transform_6, window_bounds = array<i64: 1, 128>}, {transform_indices = @transform_7, window_bounds = array<i64: 8, 128>}, {transform_indices = @transform_8, window_bounds = array<i64: 8, 128>}]} {
    %c0 = arith.constant 0 : index
    %c0_0 = arith.constant 0 : index
    %c0_1 = arith.constant 0 : index
    %0 = vector.load %arg1[%c0, %c0_0, %c0_1] : memref<8x128x128xf32, #tpu.memory_space<vmem>>, vector<8x128x128xf32>
    %1 = vector.shape_cast %0 : vector<8x128x128xf32> to vector<1024x128xf32>
    %c0_2 = arith.constant 0 : index
    %c0_3 = arith.constant 0 : index
    %2 = vector.load %arg3[%c0_2, %c0_3] : memref<128x128xf32, #tpu.memory_space<vmem>>, vector<128x128xf32>
    %cst = arith.constant dense<0.000000e+00> : vector<1024x128xf32>
    %3 = tpu.matmul %1, %2, %cst {dimension_numbers = #tpu.dot_dimension_numbers<[1], [0], [0], [1], [0, 0, 1, 1], [], []>} : vector<1024x128xf32>, vector<128x128xf32>, vector<1024x128xf32> -> vector<1024x128xf32>
    %c0_4 = arith.constant 0 : index
    %c0_5 = arith.constant 0 : index
    %4 = vector.load %arg4[%c0_4, %c0_5] : memref<1x128xf32, #tpu.memory_space<vmem>>, vector<1x128xf32>
    %5 = vector.broadcast %4 : vector<1x128xf32> to vector<1024x128xf32>
    %6 = arith.addf %3, %5 : vector<1024x128xf32>
    %c0_6 = arith.constant 0 : index
    %c0_7 = arith.constant 0 : index
    %7 = vector.load %arg2[%c0_6, %c0_7] : memref<8x64xf32, #tpu.memory_space<vmem>>, vector<8x64xf32>
    %c0_8 = arith.constant 0 : index
    %c0_9 = arith.constant 0 : index
    %8 = vector.load %arg5[%c0_8, %c0_9] : memref<64x128xf32, #tpu.memory_space<vmem>>, vector<64x128xf32>
    %cst_10 = arith.constant dense<0.000000e+00> : vector<8x128xf32>
    %9 = tpu.matmul %7, %8, %cst_10 {dimension_numbers = #tpu.dot_dimension_numbers<[1], [0], [0], [1], [0, 0, 1, 1], [], []>} : vector<8x64xf32>, vector<64x128xf32>, vector<8x128xf32> -> vector<8x128xf32>
    %c0_11 = arith.constant 0 : index
    %c0_12 = arith.constant 0 : index
    %10 = vector.load %arg6[%c0_11, %c0_12] : memref<1x128xf32, #tpu.memory_space<vmem>>, vector<1x128xf32>
    %11 = vector.broadcast %10 : vector<1x128xf32> to vector<8x128xf32>
    %12 = arith.addf %9, %11 : vector<8x128xf32>
    %13 = vector.shape_cast %6 : vector<1024x128xf32> to vector<8x128x128xf32>
    %14 = vector.shape_cast %12 : vector<8x128xf32> to vector<8x1x128xf32>
    %15 = vector.broadcast %14 : vector<8x1x128xf32> to vector<8x128x128xf32>
    %16 = arith.addf %13, %15 : vector<8x128x128xf32>
    %cst_13 = arith.constant 0.000000e+00 : f32
    %17 = vector.broadcast %cst_13 : f32 to vector<8x128x128xf32>
    %18 = arith.maximumf %16, %17 : vector<8x128x128xf32>
    %c0_14 = arith.constant 0 : index
    %c0_15 = arith.constant 0 : index
    %19 = vector.load %arg7[%c0_14, %c0_15] : memref<1x128xf32, #tpu.memory_space<vmem>>, vector<1x128xf32>
    %20 = vector.shape_cast %19 : vector<1x128xf32> to vector<1x1x128xf32>
    %21 = vector.broadcast %20 : vector<1x1x128xf32> to vector<8x128x128xf32>
    %22 = arith.mulf %18, %21 : vector<8x128x128xf32>
    %cst_16 = arith.constant dense<0.000000e+00> : vector<8x128xf32>
    %23 = vector.multi_reduction <add>, %22, %cst_16 [2] : vector<8x128x128xf32> to vector<8x128xf32>
    %cst_17 = arith.constant dense<0xFF800000> : vector<8xf32>
    %24 = vector.multi_reduction <maximumf>, %23, %cst_17 [1] : vector<8x128xf32> to vector<8xf32>
    %25 = vector.shape_cast %24 : vector<8xf32> to vector<8x1xf32>
    %26 = vector.broadcast %25 : vector<8x1xf32> to vector<8x128xf32>
    %27 = arith.subf %23, %26 : vector<8x128xf32>
    %28 = math.exp %27 : vector<8x128xf32>
    %cst_18 = arith.constant dense<0.000000e+00> : vector<8xf32>
    %29 = vector.multi_reduction <add>, %28, %cst_18 [1] : vector<8x128xf32> to vector<8xf32>
    %30 = vector.shape_cast %29 : vector<8xf32> to vector<8x1xf32>
    %31 = tpu.reciprocal %30 : vector<8x1xf32> -> vector<8x1xf32>
    %32 = vector.broadcast %31 : vector<8x1xf32> to vector<8x128xf32>
    %33 = arith.mulf %28, %32 : vector<8x128xf32>
    %c0_19 = arith.constant 0 : index
    %c0_20 = arith.constant 0 : index
    %34 = vector.load %arg9[%c0_19, %c0_20] : memref<8x128xf32, #tpu.memory_space<vmem>>, vector<8x128xf32>
    tpu.vector_store %arg9[%c0_19, %c0_20], %33 {strides = array<i32>} : memref<8x128xf32, #tpu.memory_space<vmem>>, vector<8x128xf32>,
    %35 = vector.shape_cast %33 : vector<8x128xf32> to vector<8x128x1xf32>
    %36 = vector.broadcast %35 : vector<8x128x1xf32> to vector<8x128x128xf32>
    %37 = arith.mulf %0, %36 : vector<8x128x128xf32>
    %cst_21 = arith.constant dense<0.000000e+00> : vector<8x128xf32>
    %38 = vector.multi_reduction <add>, %37, %cst_21 [1] : vector<8x128x128xf32> to vector<8x128xf32>
    %c0_22 = arith.constant 0 : index
    %c0_23 = arith.constant 0 : index
    %39 = vector.load %arg8[%c0_22, %c0_23] : memref<8x128xf32, #tpu.memory_space<vmem>>, vector<8x128xf32>
    tpu.vector_store %arg8[%c0_22, %c0_23], %38 {strides = array<i32>} : memref<8x128xf32, #tpu.memory_space<vmem>>, vector<8x128xf32>,
    return
  }
  func.func @transform_0(%arg0: i32) -> (i32, i32, i32) {
    %c0_i32 = arith.constant 0 : i32
    %c0_i32_0 = arith.constant 0 : i32
    %c0_i32_1 = arith.constant 0 : i32
    return %arg0, %c0_i32, %c0_i32_0 : i32, i32, i32
  }
  func.func @transform_1(%arg0: i32) -> (i32, i32) {
    %c0_i32 = arith.constant 0 : i32
    %c0_i32_0 = arith.constant 0 : i32
    return %arg0, %c0_i32 : i32, i32
  }
  func.func @transform_2(%arg0: i32) -> (i32, i32) {
    %c0_i32 = arith.constant 0 : i32
    %c0_i32_0 = arith.constant 0 : i32
    %c0_i32_1 = arith.constant 0 : i32
    return %c0_i32, %c0_i32_0 : i32, i32
  }
  func.func @transform_3(%arg0: i32) -> (i32, i32) {
    %c0_i32 = arith.constant 0 : i32
    %c0_i32_0 = arith.constant 0 : i32
    %c0_i32_1 = arith.constant 0 : i32
    return %c0_i32, %c0_i32_0 : i32, i32
  }
  func.func @transform_4(%arg0: i32) -> (i32, i32) {
    %c0_i32 = arith.constant 0 : i32
    %c0_i32_0 = arith.constant 0 : i32
    %c0_i32_1 = arith.constant 0 : i32
    return %c0_i32, %c0_i32_0 : i32, i32
  }
  func.func @transform_5(%arg0: i32) -> (i32, i32) {
    %c0_i32 = arith.constant 0 : i32
    %c0_i32_0 = arith.constant 0 : i32
    %c0_i32_1 = arith.constant 0 : i32
    return %c0_i32, %c0_i32_0 : i32, i32
  }
  func.func @transform_6(%arg0: i32) -> (i32, i32) {
    %c0_i32 = arith.constant 0 : i32
    %c0_i32_0 = arith.constant 0 : i32
    %c0_i32_1 = arith.constant 0 : i32
    return %c0_i32, %c0_i32_0 : i32, i32
  }
  func.func @transform_7(%arg0: i32) -> (i32, i32) {
    %c0_i32 = arith.constant 0 : i32
    %c0_i32_0 = arith.constant 0 : i32
    return %arg0, %c0_i32 : i32, i32
  }
  func.func @transform_8(%arg0: i32) -> (i32, i32) {
    %c0_i32 = arith.constant 0 : i32
    %c0_i32_0 = arith.constant 0 : i32
    return %arg0, %c0_i32 : i32, i32
  }
}

</mosaic_0001>

<llo_original>
// kernel: tpu_custom_call.1
$region0: #{tpu_custom_call.1}
  #allocation0 [shape = 'u32[]', space=smem, size = 0x4, offset = 0x4, fixed_abs, tag = 'smem constant byte address 0x4 - core index']
  #allocation1 [shape = 'u32[144,128]{1,0:T(1,128)}', space=vmem, size = 0x12000, scoped, tag = 'internal scratch']
  %s0 = inlined_call_operand.hbm [shape: f32[16,128,128], index: 0, kind: input, shape index: {}]
  %s1 = inlined_call_operand.hbm [shape: f32[16,64], index: 1, kind: input, shape index: {}]
  %s2 = inlined_call_operand.hbm [shape: f32[128,128], index: 2, kind: input, shape index: {}]
  %s3 = inlined_call_operand.vmem [shape: f32[1,128], index: 3, kind: input, shape index: {}]
  %s4 = inlined_call_operand.hbm [shape: f32[64,128], index: 4, kind: input, shape index: {}]
  %s5 = inlined_call_operand.vmem [shape: f32[1,128], index: 5, kind: input, shape index: {}]
  %s6 = inlined_call_operand.vmem [shape: f32[1,128], index: 6, kind: input, shape index: {}]
  %s7 = inlined_call_operand.hbm [shape: f32[16,128], index: 7, kind: output, shape index: {0}]
  %s8 = inlined_call_operand.hbm [shape: f32[16,128], index: 8, kind: output, shape index: {1}]
  %9 = xla_tuple %s7, %s8
  %s10 = sld [smem:[#allocation0]]
  $region85: #{tpu_custom_call.1} parent=0
    _
  %s12 = ssub.s32 1, %s10
  %s13 = scalar_select 0, %s12, %s10
  $region1: #{tpu_custom_call.1} parent=0
    #allocation2 [shape = 'u8[1048576]{0}', space=vmem, size = 0x100000, scoped, tag = 'input window, operand 0']
    #allocation3 [shape = 's32[2]{0}', space=sflag, size = 0x8, scoped, tag = 'scoped memory for tpu_custom_call.1']
    #allocation4 [shape = 's32[2]{0}', space=sflag, size = 0x8, scoped, tag = 'scoped memory for tpu_custom_call.1']
    #allocation5 [shape = 'u8[8192]{0}', space=vmem, size = 0x2000, scoped, tag = 'input window, operand 1']
    #allocation6 [shape = 's32[2]{0}', space=sflag, size = 0x8, scoped, tag = 'scoped memory for tpu_custom_call.1']
    #allocation7 [shape = 'u8[65536]{0}', space=vmem, size = 0x10000, scoped, tag = 'input window, operand 2, single buffered']
    #allocation8 [shape = 'u8[32768]{0}', space=vmem, size = 0x8000, scoped, tag = 'input window, operand 4, single buffered']
    #allocation9 [shape = 's32[1]{0}', space=sflag, size = 0x4, scoped, tag = 'scoped memory for tpu_custom_call.1']
    #allocation10 [shape = 'u8[8192]{0}', space=vmem, size = 0x2000, scoped, tag = 'output window, operand 0']
    #allocation11 [shape = 'u8[8192]{0}', space=vmem, size = 0x2000, scoped, tag = 'output window, operand 1']
    #allocation12 [shape = 's32[2]{0}', space=sflag, size = 0x8, scoped, tag = 'scoped memory for tpu_custom_call.1']
    %14 = vsyncpa [#allocation3], 0
    %s15 = scalar_lea.sflag [#allocation3], 1
    %16 = vsyncpa %s15, 0
    %17 = vsyncpa [#allocation6], 0
    %s18 = scalar_lea.sflag [#allocation6], 1
    %19 = vsyncpa %s18, 0
    %20 = vsyncpa [#allocation9], 0
    %21 = vsyncpa [#allocation4], 0
    %s22 = scalar_lea.sflag [#allocation4], 1
    %23 = vsyncpa %s22, 0
    %24 = vsyncpa [#allocation12], 0
    %s25 = scalar_lea.sflag [#allocation12], 1
    %26 = vsyncpa %s25, 0
    loop: start=0, step=1, limit=4
    $region2: #{tpu_custom_call.1} parent=1 // loop_pre_header
      _
    $region3: #{tpu_custom_call.1} parent=1 // loop_header
      %s28 = sphi 0, %s32
      %p29 = scmp.ge.s32.totalorder %s28, 4
      %s38 = sphi 0, %s40
      %s41 = sphi 0, %s38
      %s42 = sphi 0, %s41
      %s58 = sphi 0, %s42
      %s64 = sphi 0, %s66
      %s67 = sphi 0, %s64
      %s68 = sphi 0, %s67
      %s84 = sphi 0, %s68
      %s88 = sphi 0, %s88
      %s90 = sphi 0, %s88
      %s91 = sphi 0, %s90
      %s105 = sphi 0, %s91
      %s109 = sphi 0, %s109
      %s111 = sphi 0, %s109
      %s112 = sphi 0, %s111
      %s126 = sphi 0, %s112
      %s130 = sphi 0, %s130
      %s132 = sphi 0, %s130
      %s133 = sphi 0, %s132
      %s147 = sphi 0, %s133
      %s151 = sphi 0, %s151
      %s153 = sphi 0, %s151
      %s154 = sphi 0, %s153
      %s168 = sphi 0, %s154
      %s172 = sphi 0, %s172
      %s174 = sphi 0, %s172
      %s175 = sphi 0, %s174
      %s189 = sphi 0, %s175
      %s195 = sphi 0, %s197
      %s198 = sphi 0, %s195
      %s199 = sphi 0, %s198
      %s215 = sphi 0, %s199
      %s221 = sphi 0, %s223
      %s224 = sphi 0, %s221
      %s225 = sphi 0, %s224
      %s241 = sphi 0, %s225
    $region4: #{tpu_custom_call.1} parent=1 // loop_header_branch
      %31 = sbr.rel (%p29) target = $region8
    $region5: #{tpu_custom_call.1} parent=1 // loop_body
      %s33 = ssub.s32 %s28, 1
      %s34 = ssub.s32 %s28, 2
      %s35 = sadd.s32 %s28, 1
      %s36 = ssub.s32 %s28, %s35
      %p37 = scmp.eq.s32.totalorder %s36, 0
      %s39 = sadd.s32 %s38, 1
      %s40 = scalar_select %p37, %s38, %s39
      %p43 = pneg %p37
      %p44 = scmp.eq.s32.totalorder %s28, 1
      %p45 = por %p43, %p44
      %p46 = scmp.ne.s32.totalorder %s38, %s41
      %p47 = scmp.eq.s32.totalorder %s28, 0
      %p48 = por %p46, %p47
      %p49 = scmp.ne.s32.totalorder %s38, %s41
      %p50 = scmp.eq.s32.totalorder %s33, 1
      %p51 = por %p49, %p50
      %p52 = scmp.ne.s32.totalorder %s41, %s42
      %p53 = scmp.eq.s32.totalorder %s33, 0
      %p54 = por %p52, %p53
      %p55 = scmp.ne.s32.totalorder %s41, %s42
      %p56 = scmp.eq.s32.totalorder %s34, 1
      %p57 = por %p55, %p56
      %p59 = scmp.ne.s32.totalorder %s42, %s58
      %p60 = scmp.eq.s32.totalorder %s34, 0
      %p61 = por %p59, %p60
      %s62 = ssub.s32 %s28, %s35
      %p63 = scmp.eq.s32.totalorder %s62, 0
      %s65 = sadd.s32 %s64, 1
      %s66 = scalar_select %p63, %s64, %s65
      %p69 = pneg %p63
      %p70 = scmp.eq.s32.totalorder %s28, 1
      %p71 = por %p69, %p70
      %p72 = scmp.ne.s32.totalorder %s64, %s67
      %p73 = scmp.eq.s32.totalorder %s28, 0
      %p74 = por %p72, %p73
      %p75 = scmp.ne.s32.totalorder %s64, %s67
      %p76 = scmp.eq.s32.totalorder %s33, 1
      %p77 = por %p75, %p76
      %p78 = scmp.ne.s32.totalorder %s67, %s68
      %p79 = scmp.eq.s32.totalorder %s33, 0
      %p80 = por %p78, %p79
      %p81 = scmp.ne.s32.totalorder %s67, %s68
      %p82 = scmp.eq.s32.totalorder %s34, 1
      %p83 = por %p81, %p82
      %p85 = scmp.ne.s32.totalorder %s68, %s84
      %p86 = scmp.eq.s32.totalorder %s34, 0
      %p87 = por %p85, %p86
      %s89 = sadd.s32 %s88, 1
      %p92 = scmp.eq.s32.totalorder %s28, 1
      %p93 = scmp.ne.s32.totalorder %s88, %s90
      %p94 = scmp.eq.s32.totalorder %s28, 0
      %p95 = por %p93, %p94
      %p96 = scmp.ne.s32.totalorder %s88, %s90
      %p97 = scmp.eq.s32.totalorder %s33, 1
      %p98 = por %p96, %p97
      %p99 = scmp.ne.s32.totalorder %s90, %s91
      %p100 = scmp.eq.s32.totalorder %s33, 0
      %p101 = por %p99, %p100
      %p102 = scmp.ne.s32.totalorder %s90, %s91
      %p103 = scmp.eq.s32.totalorder %s34, 1
      %p104 = por %p102, %p103
      %p106 = scmp.ne.s32.totalorder %s91, %s105
      %p107 = scmp.eq.s32.totalorder %s34, 0
      %p108 = por %p106, %p107
      %s110 = sadd.s32 %s109, 1
      %p113 = scmp.eq.s32.totalorder %s28, 1
      %p114 = scmp.ne.s32.totalorder %s109, %s111
      %p115 = scmp.eq.s32.totalorder %s28, 0
      %p116 = por %p114, %p115
      %p117 = scmp.ne.s32.totalorder %s109, %s111
      %p118 = scmp.eq.s32.totalorder %s33, 1
      %p119 = por %p117, %p118
      %p120 = scmp.ne.s32.totalorder %s111, %s112
      %p121 = scmp.eq.s32.totalorder %s33, 0
      %p122 = por %p120, %p121
      %p123 = scmp.ne.s32.totalorder %s111, %s112
      %p124 = scmp.eq.s32.totalorder %s34, 1
      %p125 = por %p123, %p124
      %p127 = scmp.ne.s32.totalorder %s112, %s126
      %p128 = scmp.eq.s32.totalorder %s34, 0
      %p129 = por %p127, %p128
      %s131 = sadd.s32 %s130, 1
      %p134 = scmp.eq.s32.totalorder %s28, 1
      %p135 = scmp.ne.s32.totalorder %s130, %s132
      %p136 = scmp.eq.s32.totalorder %s28, 0
      %p137 = por %p135, %p136
      %p138 = scmp.ne.s32.totalorder %s130, %s132
      %p139 = scmp.eq.s32.totalorder %s33, 1
      %p140 = por %p138, %p139
      %p141 = scmp.ne.s32.totalorder %s132, %s133
      %p142 = scmp.eq.s32.totalorder %s33, 0
      %p143 = por %p141, %p142
      %p144 = scmp.ne.s32.totalorder %s132, %s133
      %p145 = scmp.eq.s32.totalorder %s34, 1
      %p146 = por %p144, %p145
      %p148 = scmp.ne.s32.totalorder %s133, %s147
      %p149 = scmp.eq.s32.totalorder %s34, 0
      %p150 = por %p148, %p149
      %s152 = sadd.s32 %s151, 1
      %p155 = scmp.eq.s32.totalorder %s28, 1
      %p156 = scmp.ne.s32.totalorder %s151, %s153
      %p157 = scmp.eq.s32.totalorder %s28, 0
      %p158 = por %p156, %p157
      %p159 = scmp.ne.s32.totalorder %s151, %s153
      %p160 = scmp.eq.s32.totalorder %s33, 1
      %p161 = por %p159, %p160
      %p162 = scmp.ne.s32.totalorder %s153, %s154
      %p163 = scmp.eq.s32.totalorder %s33, 0
      %p164 = por %p162, %p163
      %p165 = scmp.ne.s32.totalorder %s153, %s154
      %p166 = scmp.eq.s32.totalorder %s34, 1
      %p167 = por %p165, %p166
      %p169 = scmp.ne.s32.totalorder %s154, %s168
      %p170 = scmp.eq.s32.totalorder %s34, 0
      %p171 = por %p169, %p170
      %s173 = sadd.s32 %s172, 1
      %p176 = scmp.eq.s32.totalorder %s28, 1
      %p177 = scmp.ne.s32.totalorder %s172, %s174
      %p178 = scmp.eq.s32.totalorder %s28, 0
      %p179 = por %p177, %p178
      %p180 = scmp.ne.s32.totalorder %s172, %s174
      %p181 = scmp.eq.s32.totalorder %s33, 1
      %p182 = por %p180, %p181
      %p183 = scmp.ne.s32.totalorder %s174, %s175
      %p184 = scmp.eq.s32.totalorder %s33, 0
      %p185 = por %p183, %p184
      %p186 = scmp.ne.s32.totalorder %s174, %s175
      %p187 = scmp.eq.s32.totalorder %s34, 1
      %p188 = por %p186, %p187
      %p190 = scmp.ne.s32.totalorder %s175, %s189
      %p191 = scmp.eq.s32.totalorder %s34, 0
      %p192 = por %p190, %p191
      %s193 = ssub.s32 %s28, %s35
      %p194 = scmp.eq.s32.totalorder %s193, 0
      %s196 = sadd.s32 %s195, 1
      %s197 = scalar_select %p194, %s195, %s196
      %p200 = pneg %p194
      %p201 = scmp.eq.s32.totalorder %s28, 1
      %p202 = por %p200, %p201
      %p203 = scmp.ne.s32.totalorder %s195, %s198
      %p204 = scmp.eq.s32.totalorder %s28, 0
      %p205 = por %p203, %p204
      %p206 = scmp.ne.s32.totalorder %s195, %s198
      %p207 = scmp.eq.s32.totalorder %s33, 1
      %p208 = por %p206, %p207
      %p209 = scmp.ne.s32.totalorder %s198, %s199
      %p210 = scmp.eq.s32.totalorder %s33, 0
      %p211 = por %p209, %p210
      %p212 = scmp.ne.s32.totalorder %s198, %s199
      %p213 = scmp.eq.s32.totalorder %s34, 1
      %p214 = por %p212, %p213
      %p216 = scmp.ne.s32.totalorder %s199, %s215
      %p217 = scmp.eq.s32.totalorder %s34, 0
      %p218 = por %p216, %p217
      %s219 = ssub.s32 %s28, %s35
      %p220 = scmp.eq.s32.totalorder %s219, 0
      %s222 = sadd.s32 %s221, 1
      %s223 = scalar_select %p220, %s221, %s222
      %p226 = pneg %p220
      %p227 = scmp.eq.s32.totalorder %s28, 1
      %p228 = por %p226, %p227
      %p229 = scmp.ne.s32.totalorder %s221, %s224
      %p230 = scmp.eq.s32.totalorder %s28, 0
      %p231 = por %p229, %p230
      %p232 = scmp.ne.s32.totalorder %s221, %s224
      %p233 = scmp.eq.s32.totalorder %s33, 1
      %p234 = por %p232, %p233
      %p235 = scmp.ne.s32.totalorder %s224, %s225
      %p236 = scmp.eq.s32.totalorder %s33, 0
      %p237 = por %p235, %p236
      %p238 = scmp.ne.s32.totalorder %s224, %s225
      %p239 = scmp.eq.s32.totalorder %s34, 1
      %p240 = por %p238, %p239
      %p242 = scmp.ne.s32.totalorder %s225, %s241
      %p243 = scmp.eq.s32.totalorder %s34, 0
      %p244 = por %p242, %p243
      %p245 = scmp.le.s32.totalorder 1, %s28
      %p246 = scmp.lt.s32.totalorder %s28, 3
      %p247 = pnand %p245, %p246
      %p248 = pneg %p247
      // Predicated region
      $region9: #{tpu_custom_call.1} parent=5 // pred_check
        _
      $region10: #{tpu_custom_call.1} parent=5 // pred_check_branch
        %250 = sbr.rel (%p247) target = $region12
      $region11: #{tpu_custom_call.1} parent=5 // pred_region
        %s251 = ssub.s32 %s28, 1
        // Predicated region
        $region13: #{tpu_custom_call.1} parent=11 // pred_check
          %p252 = pneg %p101
        $region14: #{tpu_custom_call.1} parent=11 // pred_check_branch
          %254 = sbr.rel (%p252) target = $region16
        $region15: #{tpu_custom_call.1} parent=11 // pred_region
          %s256 = ssub.s32 2048, 2048
          %257 = vsyncadd [#allocation6], %s256
          %s258 = sshll.u32 [#allocation7], 4
          %s259 = int_to_ptr.vmem [resolvable:$true] %s258
          %264 = dma.hbm_to_vmem [thread:$0]  %s2, 2048, %s259, [#allocation6], 128, 128, 8
        $region16: #{tpu_custom_call.1} parent=11 // pred_fallthru
          _
        // Predicated region
        $region17: #{tpu_custom_call.1} parent=11 // pred_check
          %p265 = pneg %p122
        $region18: #{tpu_custom_call.1} parent=11 // pred_check_branch
          %267 = sbr.rel (%p265) target = $region20
        $region19: #{tpu_custom_call.1} parent=11 // pred_region
          _
        $region20: #{tpu_custom_call.1} parent=11 // pred_fallthru
          _
        // Predicated region
        $region21: #{tpu_custom_call.1} parent=11 // pred_check
          %p268 = pneg %p143
        $region22: #{tpu_custom_call.1} parent=11 // pred_check_branch
          %270 = sbr.rel (%p268) target = $region24
        $region23: #{tpu_custom_call.1} parent=11 // pred_region
          %s272 = ssub.s32 1024, 1024
          %273 = vsyncadd [#allocation9], %s272
          %s274 = sshll.u32 [#allocation8], 4
          %s275 = int_to_ptr.vmem [resolvable:$true] %s274
          %280 = dma.hbm_to_vmem [thread:$0]  %s4, 1024, %s275, [#allocation9], 128, 128, 8
        $region24: #{tpu_custom_call.1} parent=11 // pred_fallthru
          _
        // Predicated region
        $region25: #{tpu_custom_call.1} parent=11 // pred_check
          %p281 = pneg %p164
        $region26: #{tpu_custom_call.1} parent=11 // pred_check_branch
          %283 = sbr.rel (%p281) target = $region28
        $region27: #{tpu_custom_call.1} parent=11 // pred_region
          _
        $region28: #{tpu_custom_call.1} parent=11 // pred_fallthru
          _
        // Predicated region
        $region29: #{tpu_custom_call.1} parent=11 // pred_check
          %p284 = pneg %p185
        $region30: #{tpu_custom_call.1} parent=11 // pred_check_branch
          %286 = sbr.rel (%p284) target = $region32
        $region31: #{tpu_custom_call.1} parent=11 // pred_region
          _
        $region32: #{tpu_custom_call.1} parent=11 // pred_fallthru
          _
      $region12: #{tpu_custom_call.1} parent=5 // pred_fallthru
        _
      %p287 = scmp.lt.s32.totalorder %s28, 2
      // Predicated region
      $region33: #{tpu_custom_call.1} parent=5 // pred_check
        %p288 = pneg %p287
      $region34: #{tpu_custom_call.1} parent=5 // pred_check_branch
        %290 = sbr.rel (%p288) target = $region36
      $region35: #{tpu_custom_call.1} parent=5 // pred_region
        // Predicated region
        $region37: #{tpu_custom_call.1} parent=35 // pred_check
          %p291 = pneg %p48
        $region38: #{tpu_custom_call.1} parent=35 // pred_check_branch
          %293 = sbr.rel (%p291) target = $region40
        $region39: #{tpu_custom_call.1} parent=35 // pred_region
          %s294 = sand.u32 %s38, 1
          %s295 = scalar_lea.sflag [#allocation3], %s294
          %s296 = sand.u32 %s38, 1
          %s297 = smul.addr %s296, 1024
          %s298 = scalar_lea.vmem [#allocation2], %s297
          %s299 = smul.u32 8, %s28
          %s301 = ssub.s32 16384, 16384
          %302 = vsyncadd %s295, %s301
          %s303 = smul.addr %s299, 16
          %s304 = smul.addr %s303, 128
          %s305 = scalar_lea.hbm %s0, %s304
          %s306 = sshll.u32 %s298, 4
          %s307 = int_to_ptr.vmem [resolvable:$true] %s306
          %312 = dma.hbm_to_vmem [thread:$0]  %s305, 16384, %s307, %s295, 128, 128, 8
        $region40: #{tpu_custom_call.1} parent=35 // pred_fallthru
          _
        // Predicated region
        $region41: #{tpu_custom_call.1} parent=35 // pred_check
          %p313 = pneg %p74
        $region42: #{tpu_custom_call.1} parent=35 // pred_check_branch
          %315 = sbr.rel (%p313) target = $region44
        $region43: #{tpu_custom_call.1} parent=35 // pred_region
          %s316 = sand.u32 %s28, 1
          %s317 = scalar_lea.sflag [#allocation6], %s316
          %s318 = sand.u32 %s64, 1
          %s319 = smul.addr %s318, 8
          %s320 = scalar_lea.vmem [#allocation5], %s319
          %s322 = ssub.s32 128, 128
          %323 = vsyncadd %s317, %s322
          %s324 = smul.addr %s28, 128
          %s325 = scalar_lea.hbm %s1, %s324
          %s327 = sshll.u32 %s320, 4
          %s328 = int_to_ptr.vmem [resolvable:$true] %s327
          %330 = dma.hbm_to_vmem [thread:$0]  %s325, 128, %s328, %s317
        $region44: #{tpu_custom_call.1} parent=35 // pred_fallthru
          _
      $region36: #{tpu_custom_call.1} parent=5 // pred_fallthru
        _
      %p331 = scmp.le.s32.totalorder 1, %s28
      %p332 = scmp.lt.s32.totalorder %s28, 3
      %p333 = pnand %p331, %p332
      %p334 = pneg %p333
      // Predicated region
      $region45: #{tpu_custom_call.1} parent=5 // pred_check
        _
      $region46: #{tpu_custom_call.1} parent=5 // pred_check_branch
        %336 = sbr.rel (%p333) target = $region48
      $region47: #{tpu_custom_call.1} parent=5 // pred_region
        %s337 = ssub.s32 %s28, 1
        %s338 = sand.u32 %s41, 1
        %s339 = scalar_lea.sflag [#allocation3], %s338
        %s340 = sand.u32 %s41, 1
        %s341 = smul.addr %s340, 1024
        %s342 = scalar_lea.vmem [#allocation2], %s341
        // Predicated region
        $region49: #{tpu_custom_call.1} parent=47 // pred_check
          %p343 = pneg %p54
        $region50: #{tpu_custom_call.1} parent=47 // pred_check_branch
          %345 = sbr.rel (%p343) target = $region52
        $region51: #{tpu_custom_call.1} parent=47 // pred_region
          %346 = dma.done %s339, 16384
        $region52: #{tpu_custom_call.1} parent=47 // pred_fallthru
          _
        %s347 = sand.u32 %s33, 1
        %s348 = scalar_lea.sflag [#allocation6], %s347
        %s349 = sand.u32 %s67, 1
        %s350 = smul.addr %s349, 8
        %s351 = scalar_lea.vmem [#allocation5], %s350
        // Predicated region
        $region53: #{tpu_custom_call.1} parent=47 // pred_check
          %p352 = pneg %p80
        $region54: #{tpu_custom_call.1} parent=47 // pred_check_branch
          %354 = sbr.rel (%p352) target = $region56
        $region55: #{tpu_custom_call.1} parent=47 // pred_region
          %355 = dma.done %s348, 128
        $region56: #{tpu_custom_call.1} parent=47 // pred_fallthru
          _
        // Predicated region
        $region57: #{tpu_custom_call.1} parent=47 // pred_check
          %p356 = pneg %p101
        $region58: #{tpu_custom_call.1} parent=47 // pred_check_branch
          %358 = sbr.rel (%p356) target = $region60
        $region59: #{tpu_custom_call.1} parent=47 // pred_region
          %359 = dma.done [#allocation6], 2048
        $region60: #{tpu_custom_call.1} parent=47 // pred_fallthru
          _
        // Predicated region
        $region61: #{tpu_custom_call.1} parent=47 // pred_check
          %p360 = pneg %p143
        $region62: #{tpu_custom_call.1} parent=47 // pred_check_branch
          %362 = sbr.rel (%p360) target = $region64
        $region63: #{tpu_custom_call.1} parent=47 // pred_region
          %363 = dma.done [#allocation9], 1024
        $region64: #{tpu_custom_call.1} parent=47 // pred_fallthru
          _
        %s364 = sand.u32 %s41, 1
        %s365 = scalar_lea.sflag [#allocation3], %s364
        %s366 = sand.u32 %s41, 1
        %s367 = smul.addr %s366, 1024
        %s368 = scalar_lea.vmem [#allocation2], %s367
        %p369 = pneg %p54
        %p370 = pneg %p51
        %s371 = sand.u32 %s33, 1
        %s372 = scalar_lea.sflag [#allocation6], %s371
        %s373 = sand.u32 %s67, 1
        %s374 = smul.addr %s373, 8
        %s375 = scalar_lea.vmem [#allocation5], %s374
        %p376 = pneg %p80
        %p377 = pneg %p77
        %p378 = pneg %p101
        %p379 = pneg %p98
        %p380 = pneg %p122
        %p381 = pneg %p119
        %p382 = pneg %p143
        %p383 = pneg %p140
        %p384 = pneg %p164
        %p385 = pneg %p161
        %p386 = pneg %p185
        %p387 = pneg %p182
        %p388 = pneg %p211
        %p389 = pneg %p208
        %s390 = sand.u32 %s198, 1
        %s391 = scalar_lea.sflag [#allocation4], %s390
        %s392 = sand.u32 %s198, 1
        %s393 = smul.addr %s392, 8
        %s394 = scalar_lea.vmem [#allocation10], %s393
        %p395 = pneg %p237
        %p396 = pneg %p234
        %s397 = sand.u32 %s224, 1
        %s398 = scalar_lea.sflag [#allocation12], %s397
        %s399 = sand.u32 %s224, 1
        %s400 = smul.addr %s399, 8
        %s401 = scalar_lea.vmem [#allocation11], %s400
        %s402 = smul.u32 8, %s33
        %v403 = vld [vmem:[%s342] sm:$0xff]
        %v404 = vld [vmem:[%s342 + $0x8] sm:$0xff]
        %v405 = vld [vmem:[%s342 + $0x10] sm:$0xff]
        %v406 = vld [vmem:[%s342 + $0x18] sm:$0xff]
        %v407 = vld [vmem:[%s342 + $0x20] sm:$0xff]
        %v408 = vld [vmem:[%s342 + $0x28] sm:$0xff]
        %v409 = vld [vmem:[%s342 + $0x30] sm:$0xff]
        %v410 = vld [vmem:[%s342 + $0x38] sm:$0xff]
        %v411 = vld [vmem:[%s342 + $0x40] sm:$0xff]
        %v412 = vld [vmem:[%s342 + $0x48] sm:$0xff]
        %v413 = vld [vmem:[%s342 + $0x50] sm:$0xff]
        %v414 = vld [vmem:[%s342 + $0x58] sm:$0xff]
        %v415 = vld [vmem:[%s342 + $0x60] sm:$0xff]
        %v416 = vld [vmem:[%s342 + $0x68] sm:$0xff]
        %v417 = vld [vmem:[%s342 + $0x70] sm:$0xff]
        %v418 = vld [vmem:[%s342 + $0x78] sm:$0xff]
        %v419 = vld [vmem:[%s342 + $0x80] sm:$0xff]
        %v420 = vld [vmem:[%s342 + $0x88] sm:$0xff]
        %v421 = vld [vmem:[%s342 + $0x90] sm:$0xff]
        %v422 = vld [vmem:[%s342 + $0x98] sm:$0xff]
        %v423 = vld [vmem:[%s342 + $0xa0] sm:$0xff]
        %v424 = vld [vmem:[%s342 + $0xa8] sm:$0xff]
        %v425 = vld [vmem:[%s342 + $0xb0] sm:$0xff]
        %v426 = vld [vmem:[%s342 + $0xb8] sm:$0xff]
        %v427 = vld [vmem:[%s342 + $0xc0] sm:$0xff]
        %v428 = vld [vmem:[%s342 + $0xc8] sm:$0xff]
        %v429 = vld [vmem:[%s342 + $0xd0] sm:$0xff]
        %v430 = vld [vmem:[%s342 + $0xd8] sm:$0xff]
        %v431 = vld [vmem:[%s342 + $0xe0] sm:$0xff]
        %v432 = vld [vmem:[%s342 + $0xe8] sm:$0xff]
        %v433 = vld [vmem:[%s342 + $0xf0] sm:$0xff]
        %v434 = vld [vmem:[%s342 + $0xf8] sm:$0xff]
        %v435 = vld [vmem:[%s342 + $0x100] sm:$0xff]
        %v436 = vld [vmem:[%s342 + $0x108] sm:$0xff]
        %v437 = vld [vmem:[%s342 + $0x110] sm:$0xff]
        %v438 = vld [vmem:[%s342 + $0x118] sm:$0xff]
        %v439 = vld [vmem:[%s342 + $0x120] sm:$0xff]
        %v440 = vld [vmem:[%s342 + $0x128] sm:$0xff]
        %v441 = vld [vmem:[%s342 + $0x130] sm:$0xff]
        %v442 = vld [vmem:[%s342 + $0x138] sm:$0xff]
        %v443 = vld [vmem:[%s342 + $0x140] sm:$0xff]
        %v444 = vld [vmem:[%s342 + $0x148] sm:$0xff]
        %v445 = vld [vmem:[%s342 + $0x150] sm:$0xff]
        %v446 = vld [vmem:[%s342 + $0x158] sm:$0xff]
        %v447 = vld [vmem:[%s342 + $0x160] sm:$0xff]
        %v448 = vld [vmem:[%s342 + $0x168] sm:$0xff]
        %v449 = vld [vmem:[%s342 + $0x170] sm:$0xff]
        %v450 = vld [vmem:[%s342 + $0x178] sm:$0xff]
        %v451 = vld [vmem:[%s342 + $0x180] sm:$0xff]
        %v452 = vld [vmem:[%s342 + $0x188] sm:$0xff]
        %v453 = vld [vmem:[%s342 + $0x190] sm:$0xff]
        %v454 = vld [vmem:[%s342 + $0x198] sm:$0xff]
        %v455 = vld [vmem:[%s342 + $0x1a0] sm:$0xff]
        %v456 = vld [vmem:[%s342 + $0x1a8] sm:$0xff]
        %v457 = vld [vmem:[%s342 + $0x1b0] sm:$0xff]
        %v458 = vld [vmem:[%s342 + $0x1b8] sm:$0xff]
        %v459 = vld [vmem:[%s342 + $0x1c0] sm:$0xff]
        %v460 = vld [vmem:[%s342 + $0x1c8] sm:$0xff]
        %v461 = vld [vmem:[%s342 + $0x1d0] sm:$0xff]
        %v462 = vld [vmem:[%s342 + $0x1d8] sm:$0xff]
        %v463 = vld [vmem:[%s342 + $0x1e0] sm:$0xff]
        %v464 = vld [vmem:[%s342 + $0x1e8] sm:$0xff]
        %v465 = vld [vmem:[%s342 + $0x1f0] sm:$0xff]
        %v466 = vld [vmem:[%s342 + $0x1f8] sm:$0xff]
        %v467 = vld [vmem:[%s342 + $0x200] sm:$0xff]
        %v468 = vld [vmem:[%s342 + $0x208] sm:$0xff]
        %v469 = vld [vmem:[%s342 + $0x210] sm:$0xff]
        %v470 = vld [vmem:[%s342 + $0x218] sm:$0xff]
        %v471 = vld [vmem:[%s342 + $0x220] sm:$0xff]
        %v472 = vld [vmem:[%s342 + $0x228] sm:$0xff]
        %v473 = vld [vmem:[%s342 + $0x230] sm:$0xff]
        %v474 = vld [vmem:[%s342 + $0x238] sm:$0xff]
        %v475 = vld [vmem:[%s342 + $0x240] sm:$0xff]
        %v476 = vld [vmem:[%s342 + $0x248] sm:$0xff]
        %v477 = vld [vmem:[%s342 + $0x250] sm:$0xff]
        %v478 = vld [vmem:[%s342 + $0x258] sm:$0xff]
        %v479 = vld [vmem:[%s342 + $0x260] sm:$0xff]
        %v480 = vld [vmem:[%s342 + $0x268] sm:$0xff]
        %v481 = vld [vmem:[%s342 + $0x270] sm:$0xff]
        %v482 = vld [vmem:[%s342 + $0x278] sm:$0xff]
        %v483 = vld [vmem:[%s342 + $0x280] sm:$0xff]
        %v484 = vld [vmem:[%s342 + $0x288] sm:$0xff]
        %v485 = vld [vmem:[%s342 + $0x290] sm:$0xff]
        %v486 = vld [vmem:[%s342 + $0x298] sm:$0xff]
        %v487 = vld [vmem:[%s342 + $0x2a0] sm:$0xff]
        %v488 = vld [vmem:[%s342 + $0x2a8] sm:$0xff]
        %v489 = vld [vmem:[%s342 + $0x2b0] sm:$0xff]
        %v490 = vld [vmem:[%s342 + $0x2b8] sm:$0xff]
        %v491 = vld [vmem:[%s342 + $0x2c0] sm:$0xff]
        %v492 = vld [vmem:[%s342 + $0x2c8] sm:$0xff]
        %v493 = vld [vmem:[%s342 + $0x2d0] sm:$0xff]
        %v494 = vld [vmem:[%s342 + $0x2d8] sm:$0xff]
        %v495 = vld [vmem:[%s342 + $0x2e0] sm:$0xff]
        %v496 = vld [vmem:[%s342 + $0x2e8] sm:$0xff]
        %v497 = vld [vmem:[%s342 + $0x2f0] sm:$0xff]
        %v498 = vld [vmem:[%s342 + $0x2f8] sm:$0xff]
        %v499 = vld [vmem:[%s342 + $0x300] sm:$0xff]
        %v500 = vld [vmem:[%s342 + $0x308] sm:$0xff]
        %v501 = vld [vmem:[%s342 + $0x310] sm:$0xff]
        %v502 = vld [vmem:[%s342 + $0x318] sm:$0xff]
        %v503 = vld [vmem:[%s342 + $0x320] sm:$0xff]
        %v504 = vld [vmem:[%s342 + $0x328] sm:$0xff]
        %v505 = vld [vmem:[%s342 + $0x330] sm:$0xff]
        %v506 = vld [vmem:[%s342 + $0x338] sm:$0xff]
        %v507 = vld [vmem:[%s342 + $0x340] sm:$0xff]
        %v508 = vld [vmem:[%s342 + $0x348] sm:$0xff]
        %v509 = vld [vmem:[%s342 + $0x350] sm:$0xff]
        %v510 = vld [vmem:[%s342 + $0x358] sm:$0xff]
        %v511 = vld [vmem:[%s342 + $0x360] sm:$0xff]
        %v512 = vld [vmem:[%s342 + $0x368] sm:$0xff]
        %v513 = vld [vmem:[%s342 + $0x370] sm:$0xff]
        %v514 = vld [vmem:[%s342 + $0x378] sm:$0xff]
        %v515 = vld [vmem:[%s342 + $0x380] sm:$0xff]
        %v516 = vld [vmem:[%s342 + $0x388] sm:$0xff]
        %v517 = vld [vmem:[%s342 + $0x390] sm:$0xff]
        %v518 = vld [vmem:[%s342 + $0x398] sm:$0xff]
        %v519 = vld [vmem:[%s342 + $0x3a0] sm:$0xff]
        %v520 = vld [vmem:[%s342 + $0x3a8] sm:$0xff]
        %v521 = vld [vmem:[%s342 + $0x3b0] sm:$0xff]
        %v522 = vld [vmem:[%s342 + $0x3b8] sm:$0xff]
        %v523 = vld [vmem:[%s342 + $0x3c0] sm:$0xff]
        %v524 = vld [vmem:[%s342 + $0x3c8] sm:$0xff]
        %v525 = vld [vmem:[%s342 + $0x3d0] sm:$0xff]
        %v526 = vld [vmem:[%s342 + $0x3d8] sm:$0xff]
        %v527 = vld [vmem:[%s342 + $0x3e0] sm:$0xff]
        %v528 = vld [vmem:[%s342 + $0x3e8] sm:$0xff]
        %v529 = vld [vmem:[%s342 + $0x3f0] sm:$0xff]
        %v530 = vld [vmem:[%s342 + $0x3f8] sm:$0xff]
        %v531 = vld [vmem:[#allocation7] sm:$0xff]
        %v532 = vld [vmem:[#allocation7 + $0x8] sm:$0xff]
        %v533 = vld [vmem:[#allocation7 + $0x10] sm:$0xff]
        %v534 = vld [vmem:[#allocation7 + $0x18] sm:$0xff]
        %v535 = vld [vmem:[#allocation7 + $0x20] sm:$0xff]
        %v536 = vld [vmem:[#allocation7 + $0x28] sm:$0xff]
        %v537 = vld [vmem:[#allocation7 + $0x30] sm:$0xff]
        %v538 = vld [vmem:[#allocation7 + $0x38] sm:$0xff]
        %v539 = vld [vmem:[#allocation7 + $0x40] sm:$0xff]
        %v540 = vld [vmem:[#allocation7 + $0x48] sm:$0xff]
        %v541 = vld [vmem:[#allocation7 + $0x50] sm:$0xff]
        %v542 = vld [vmem:[#allocation7 + $0x58] sm:$0xff]
        %v543 = vld [vmem:[#allocation7 + $0x60] sm:$0xff]
        %v544 = vld [vmem:[#allocation7 + $0x68] sm:$0xff]
        %v545 = vld [vmem:[#allocation7 + $0x70] sm:$0xff]
        %v546 = vld [vmem:[#allocation7 + $0x78] sm:$0xff]
        %v547 = vld [vmem:[%s3] sm:$0x1]
        %v549 = vlaneseq
        %v550 = vshrl.u32 %v549, 7
        %v551 = vsub.s32 0, %v550
        %v552 = vrot.slane %v547, %v551
        %554 = vmatprep.subr.mxu0 0.0
        %555 = vmatpush1.msra.mxu0 %v546
        %556 = vmatprep.subr.mxu0 0.0
        %557 = vmatpush1.msra.mxu0 %v545
        %558 = vmatprep.subr.mxu0 0.0
        %559 = vmatpush1.msra.mxu0 %v544
        %560 = vmatprep.subr.mxu0 0.0
        %561 = vmatpush1.msra.mxu0 %v543
        %562 = vmatprep.subr.mxu0 0.0
        %563 = vmatpush1.msra.mxu0 %v542
        %564 = vmatprep.subr.mxu0 0.0
        %565 = vmatpush1.msra.mxu0 %v541
        %566 = vmatprep.subr.mxu0 0.0
        %567 = vmatpush1.msra.mxu0 %v540
        %568 = vmatprep.subr.mxu0 0.0
        %569 = vmatpush1.msra.mxu0 %v539
        %570 = vmatprep.subr.mxu0 0.0
        %571 = vmatpush1.msra.mxu0 %v538
        %572 = vmatprep.subr.mxu0 0.0
        %573 = vmatpush1.msra.mxu0 %v537
        %574 = vmatprep.subr.mxu0 0.0
        %575 = vmatpush1.msra.mxu0 %v536
        %576 = vmatprep.subr.mxu0 0.0
        %577 = vmatpush1.msra.mxu0 %v535
        %578 = vmatprep.subr.mxu0 0.0
        %579 = vmatpush1.msra.mxu0 %v534
        %580 = vmatprep.subr.mxu0 0.0
        %581 = vmatpush1.msra.mxu0 %v533
        %582 = vmatprep.subr.mxu0 0.0
        %583 = vmatpush1.msra.mxu0 %v532
        %584 = vmatprep.subr.mxu0 0.0
        %585 = vmatpush1.msra.mxu0 %v531
        %586 = vmatprep.subr.mxu0 0.0
        %587 = vmatpush2.msra.mxu0 0.0
        %588 = vmatprep.subr.mxu0 0.0
        %589 = vmatpush2.msra.mxu0 0.0
        %590 = vmatprep.subr.mxu0 0.0
        %591 = vmatpush2.msra.mxu0 0.0
        %592 = vmatprep.subr.mxu0 0.0
        %593 = vmatpush2.msra.mxu0 0.0
        %594 = vmatprep.subr.mxu0 0.0
        %595 = vmatpush2.msra.mxu0 0.0
        %596 = vmatprep.subr.mxu0 0.0
        %597 = vmatpush2.msra.mxu0 0.0
        %598 = vmatprep.subr.mxu0 0.0
        %599 = vmatpush2.msra.mxu0 0.0
        %600 = vmatprep.subr.mxu0 0.0
        %601 = vmatpush2.msra.mxu0 0.0
        %602 = vmatprep.subr.mxu0 0.0
        %603 = vmatpush2.msra.mxu0 0.0
        %604 = vmatprep.subr.mxu0 0.0
        %605 = vmatpush2.msra.mxu0 0.0
        %606 = vmatprep.subr.mxu0 0.0
        %607 = vmatpush2.msra.mxu0 0.0
        %608 = vmatprep.subr.mxu0 0.0
        %609 = vmatpush2.msra.mxu0 0.0
        %610 = vmatprep.subr.mxu0 0.0
        %611 = vmatpush2.msra.mxu0 0.0
        %612 = vmatprep.subr.mxu0 0.0
        %613 = vmatpush2.msra.mxu0 0.0
        %614 = vmatprep.subr.mxu0 0.0
        %615 = vmatpush2.msra.mxu0 0.0
        %616 = vmatprep.subr.mxu0 0.0
        %617 = vmatpush2.msra.mxu0 0.0
        %618 = vmatprep.mubr.f32.mxu0 0.0
        %619 = vmatmul.mubr.f32.gmra.mxu0 %v403
        %v620 = vpop.f32.mrf.mxu0
        %v621 = vadd.f32 %v552, %v620
        %v622 = vpop.f32.mrf.mxu0
        %623 = vmatprep.mubr.f32.mxu0 0.0
        %624 = vmatmul.mubr.f32.gmra.mxu0 %v404
        %v625 = vpop.f32.mrf.mxu0
        %v626 = vadd.f32 %v552, %v625
        %v627 = vpop.f32.mrf.mxu0
        %628 = vmatprep.mubr.f32.mxu0 0.0
        %629 = vmatmul.mubr.f32.gmra.mxu0 %v405
        %v630 = vpop.f32.mrf.mxu0
        %v631 = vadd.f32 %v552, %v630
        %v632 = vpop.f32.mrf.mxu0
        %633 = vmatprep.mubr.f32.mxu0 0.0
        %634 = vmatmul.mubr.f32.gmra.mxu0 %v406
        %v635 = vpop.f32.mrf.mxu0
        %v636 = vadd.f32 %v552, %v635
        %v637 = vpop.f32.mrf.mxu0
        %638 = vmatprep.mubr.f32.mxu0 0.0
        %639 = vmatmul.mubr.f32.gmra.mxu0 %v407
        %v640 = vpop.f32.mrf.mxu0
        %v641 = vadd.f32 %v552, %v640
        %v642 = vpop.f32.mrf.mxu0
        %643 = vmatprep.mubr.f32.mxu0 0.0
        %644 = vmatmul.mubr.f32.gmra.mxu0 %v408
        %v645 = vpop.f32.mrf.mxu0
        %v646 = vadd.f32 %v552, %v645
        %v647 = vpop.f32.mrf.mxu0
        %648 = vmatprep.mubr.f32.mxu0 0.0
        %649 = vmatmul.mubr.f32.gmra.mxu0 %v409
        %v650 = vpop.f32.mrf.mxu0
        %v651 = vadd.f32 %v552, %v650
        %v652 = vpop.f32.mrf.mxu0
        %653 = vmatprep.mubr.f32.mxu0 0.0
        %654 = vmatmul.mubr.f32.gmra.mxu0 %v410
        %v655 = vpop.f32.mrf.mxu0
        %v656 = vadd.f32 %v552, %v655
        %v657 = vpop.f32.mrf.mxu0
        %658 = vmatprep.mubr.f32.mxu0 0.0
        %659 = vmatmul.mubr.f32.gmra.mxu0 %v411
        %v660 = vpop.f32.mrf.mxu0
        %v661 = vadd.f32 %v552, %v660
        %v662 = vpop.f32.mrf.mxu0
        %663 = vmatprep.mubr.f32.mxu0 0.0
        %664 = vmatmul.mubr.f32.gmra.mxu0 %v412
        %v665 = vpop.f32.mrf.mxu0
        %v666 = vadd.f32 %v552, %v665
        %v667 = vpop.f32.mrf.mxu0
        %668 = vmatprep.mubr.f32.mxu0 0.0
        %669 = vmatmul.mubr.f32.gmra.mxu0 %v413
        %v670 = vpop.f32.mrf.mxu0
        %v671 = vadd.f32 %v552, %v670
        %v672 = vpop.f32.mrf.mxu0
        %673 = vmatprep.mubr.f32.mxu0 0.0
        %674 = vmatmul.mubr.f32.gmra.mxu0 %v414
        %v675 = vpop.f32.mrf.mxu0
        %v676 = vadd.f32 %v552, %v675
        %v677 = vpop.f32.mrf.mxu0
        %678 = vmatprep.mubr.f32.mxu0 0.0
        %679 = vmatmul.mubr.f32.gmra.mxu0 %v415
        %v680 = vpop.f32.mrf.mxu0
        %v681 = vadd.f32 %v552, %v680
        %v682 = vpop.f32.mrf.mxu0
        %683 = vmatprep.mubr.f32.mxu0 0.0
        %684 = vmatmul.mubr.f32.gmra.mxu0 %v416
        %v685 = vpop.f32.mrf.mxu0
        %v686 = vadd.f32 %v552, %v685
        %v687 = vpop.f32.mrf.mxu0
        %688 = vmatprep.mubr.f32.mxu0 0.0
        %689 = vmatmul.mubr.f32.gmra.mxu0 %v417
        %v690 = vpop.f32.mrf.mxu0
        %v691 = vadd.f32 %v552, %v690
        %v692 = vpop.f32.mrf.mxu0
        %693 = vmatprep.mubr.f32.mxu0 0.0
        %694 = vmatmul.mubr.f32.gmra.mxu0 %v418
        %v695 = vpop.f32.mrf.mxu0
        %v696 = vadd.f32 %v552, %v695
        %v697 = vpop.f32.mrf.mxu0
        %698 = vmatprep.mubr.f32.mxu0 0.0
        %699 = vmatmul.mubr.f32.gmra.mxu0 %v419
        %v700 = vpop.f32.mrf.mxu0
        %v701 = vadd.f32 %v552, %v700
        %v702 = vpop.f32.mrf.mxu0
        %703 = vmatprep.mubr.f32.mxu0 0.0
        %704 = vmatmul.mubr.f32.gmra.mxu0 %v420
        %v705 = vpop.f32.mrf.mxu0
        %v706 = vadd.f32 %v552, %v705
        %v707 = vpop.f32.mrf.mxu0
        %708 = vmatprep.mubr.f32.mxu0 0.0
        %709 = vmatmul.mubr.f32.gmra.mxu0 %v421
        %v710 = vpop.f32.mrf.mxu0
        %v711 = vadd.f32 %v552, %v710
        %v712 = vpop.f32.mrf.mxu0
        %713 = vmatprep.mubr.f32.mxu0 0.0
        %714 = vmatmul.mubr.f32.gmra.mxu0 %v422
        %v715 = vpop.f32.mrf.mxu0
        %v716 = vadd.f32 %v552, %v715
        %v717 = vpop.f32.mrf.mxu0
        %718 = vmatprep.mubr.f32.mxu0 0.0
        %719 = vmatmul.mubr.f32.gmra.mxu0 %v423
        %v720 = vpop.f32.mrf.mxu0
        %v721 = vadd.f32 %v552, %v720
        %v722 = vpop.f32.mrf.mxu0
        %723 = vmatprep.mubr.f32.mxu0 0.0
        %724 = vmatmul.mubr.f32.gmra.mxu0 %v424
        %v725 = vpop.f32.mrf.mxu0
        %v726 = vadd.f32 %v552, %v725
        %v727 = vpop.f32.mrf.mxu0
        %728 = vmatprep.mubr.f32.mxu0 0.0
        %729 = vmatmul.mubr.f32.gmra.mxu0 %v425
        %v730 = vpop.f32.mrf.mxu0
        %v731 = vadd.f32 %v552, %v730
        %v732 = vpop.f32.mrf.mxu0
        %733 = vmatprep.mubr.f32.mxu0 0.0
        %734 = vmatmul.mubr.f32.gmra.mxu0 %v426
        %v735 = vpop.f32.mrf.mxu0
        %v736 = vadd.f32 %v552, %v735
        %v737 = vpop.f32.mrf.mxu0
        %738 = vmatprep.mubr.f32.mxu0 0.0
        %739 = vmatmul.mubr.f32.gmra.mxu0 %v427
        %v740 = vpop.f32.mrf.mxu0
        %v741 = vadd.f32 %v552, %v740
        %v742 = vpop.f32.mrf.mxu0
        %743 = vmatprep.mubr.f32.mxu0 0.0
        %744 = vmatmul.mubr.f32.gmra.mxu0 %v428
        %v745 = vpop.f32.mrf.mxu0
        %v746 = vadd.f32 %v552, %v745
        %v747 = vpop.f32.mrf.mxu0
        %748 = vmatprep.mubr.f32.mxu0 0.0
        %749 = vmatmul.mubr.f32.gmra.mxu0 %v429
        %v750 = vpop.f32.mrf.mxu0
        %v751 = vadd.f32 %v552, %v750
        %v752 = vpop.f32.mrf.mxu0
        %753 = vmatprep.mubr.f32.mxu0 0.0
        %754 = vmatmul.mubr.f32.gmra.mxu0 %v430
        %v755 = vpop.f32.mrf.mxu0
        %v756 = vadd.f32 %v552, %v755
        %v757 = vpop.f32.mrf.mxu0
        %758 = vmatprep.mubr.f32.mxu0 0.0
        %759 = vmatmul.mubr.f32.gmra.mxu0 %v431
        %v760 = vpop.f32.mrf.mxu0
        %v761 = vadd.f32 %v552, %v760
        %v762 = vpop.f32.mrf.mxu0
        %763 = vmatprep.mubr.f32.mxu0 0.0
        %764 = vmatmul.mubr.f32.gmra.mxu0 %v432
        %v765 = vpop.f32.mrf.mxu0
        %v766 = vadd.f32 %v552, %v765
        %v767 = vpop.f32.mrf.mxu0
        %768 = vmatprep.mubr.f32.mxu0 0.0
        %769 = vmatmul.mubr.f32.gmra.mxu0 %v433
        %v770 = vpop.f32.mrf.mxu0
        %v771 = vadd.f32 %v552, %v770
        %v772 = vpop.f32.mrf.mxu0
        %773 = vmatprep.mubr.f32.mxu0 0.0
        %774 = vmatmul.mubr.f32.gmra.mxu0 %v434
        %v775 = vpop.f32.mrf.mxu0
        %v776 = vadd.f32 %v552, %v775
        %v777 = vpop.f32.mrf.mxu0
        %778 = vmatprep.mubr.f32.mxu0 0.0
        %779 = vmatmul.mubr.f32.gmra.mxu0 %v435
        %v780 = vpop.f32.mrf.mxu0
        %v781 = vadd.f32 %v552, %v780
        %v782 = vpop.f32.mrf.mxu0
        %783 = vmatprep.mubr.f32.mxu0 0.0
        %784 = vmatmul.mubr.f32.gmra.mxu0 %v436
        %v785 = vpop.f32.mrf.mxu0
        %v786 = vadd.f32 %v552, %v785
        %v787 = vpop.f32.mrf.mxu0
        %788 = vmatprep.mubr.f32.mxu0 0.0
        %789 = vmatmul.mubr.f32.gmra.mxu0 %v437
        %v790 = vpop.f32.mrf.mxu0
        %v791 = vadd.f32 %v552, %v790
        %v792 = vpop.f32.mrf.mxu0
        %793 = vmatprep.mubr.f32.mxu0 0.0
        %794 = vmatmul.mubr.f32.gmra.mxu0 %v438
        %v795 = vpop.f32.mrf.mxu0
        %v796 = vadd.f32 %v552, %v795
        %v797 = vpop.f32.mrf.mxu0
        %798 = vmatprep.mubr.f32.mxu0 0.0
        %799 = vmatmul.mubr.f32.gmra.mxu0 %v439
        %v800 = vpop.f32.mrf.mxu0
        %v801 = vadd.f32 %v552, %v800
        %v802 = vpop.f32.mrf.mxu0
        %803 = vmatprep.mubr.f32.mxu0 0.0
        %804 = vmatmul.mubr.f32.gmra.mxu0 %v440
        %v805 = vpop.f32.mrf.mxu0
        %v806 = vadd.f32 %v552, %v805
        %v807 = vpop.f32.mrf.mxu0
        %808 = vmatprep.mubr.f32.mxu0 0.0
        %809 = vmatmul.mubr.f32.gmra.mxu0 %v441
        %v810 = vpop.f32.mrf.mxu0
        %v811 = vadd.f32 %v552, %v810
        %v812 = vpop.f32.mrf.mxu0
        %813 = vmatprep.mubr.f32.mxu0 0.0
        %814 = vmatmul.mubr.f32.gmra.mxu0 %v442
        %v815 = vpop.f32.mrf.mxu0
        %v816 = vadd.f32 %v552, %v815
        %v817 = vpop.f32.mrf.mxu0
        %818 = vmatprep.mubr.f32.mxu0 0.0
        %819 = vmatmul.mubr.f32.gmra.mxu0 %v443
        %v820 = vpop.f32.mrf.mxu0
        %v821 = vadd.f32 %v552, %v820
        %v822 = vpop.f32.mrf.mxu0
        %823 = vmatprep.mubr.f32.mxu0 0.0
        %824 = vmatmul.mubr.f32.gmra.mxu0 %v444
        %v825 = vpop.f32.mrf.mxu0
        %v826 = vadd.f32 %v552, %v825
        %v827 = vpop.f32.mrf.mxu0
        %828 = vmatprep.mubr.f32.mxu0 0.0
        %829 = vmatmul.mubr.f32.gmra.mxu0 %v445
        %v830 = vpop.f32.mrf.mxu0
        %v831 = vadd.f32 %v552, %v830
        %v832 = vpop.f32.mrf.mxu0
        %833 = vmatprep.mubr.f32.mxu0 0.0
        %834 = vmatmul.mubr.f32.gmra.mxu0 %v446
        %v835 = vpop.f32.mrf.mxu0
        %v836 = vadd.f32 %v552, %v835
        %v837 = vpop.f32.mrf.mxu0
        %838 = vmatprep.mubr.f32.mxu0 0.0
        %839 = vmatmul.mubr.f32.gmra.mxu0 %v447
        %v840 = vpop.f32.mrf.mxu0
        %v841 = vadd.f32 %v552, %v840
        %v842 = vpop.f32.mrf.mxu0
        %843 = vmatprep.mubr.f32.mxu0 0.0
        %844 = vmatmul.mubr.f32.gmra.mxu0 %v448
        %v845 = vpop.f32.mrf.mxu0
        %v846 = vadd.f32 %v552, %v845
        %v847 = vpop.f32.mrf.mxu0
        %848 = vmatprep.mubr.f32.mxu0 0.0
        %849 = vmatmul.mubr.f32.gmra.mxu0 %v449
        %v850 = vpop.f32.mrf.mxu0
        %v851 = vadd.f32 %v552, %v850
        %v852 = vpop.f32.mrf.mxu0
        %853 = vmatprep.mubr.f32.mxu0 0.0
        %854 = vmatmul.mubr.f32.gmra.mxu0 %v450
        %v855 = vpop.f32.mrf.mxu0
        %v856 = vadd.f32 %v552, %v855
        %v857 = vpop.f32.mrf.mxu0
        %858 = vmatprep.mubr.f32.mxu0 0.0
        %859 = vmatmul.mubr.f32.gmra.mxu0 %v451
        %v860 = vpop.f32.mrf.mxu0
        %v861 = vadd.f32 %v552, %v860
        %v862 = vpop.f32.mrf.mxu0
        %863 = vmatprep.mubr.f32.mxu0 0.0
        %864 = vmatmul.mubr.f32.gmra.mxu0 %v452
        %v865 = vpop.f32.mrf.mxu0
        %v866 = vadd.f32 %v552, %v865
        %v867 = vpop.f32.mrf.mxu0
        %868 = vmatprep.mubr.f32.mxu0 0.0
        %869 = vmatmul.mubr.f32.gmra.mxu0 %v453
        %v870 = vpop.f32.mrf.mxu0
        %v871 = vadd.f32 %v552, %v870
        %v872 = vpop.f32.mrf.mxu0
        %873 = vmatprep.mubr.f32.mxu0 0.0
        %874 = vmatmul.mubr.f32.gmra.mxu0 %v454
        %v875 = vpop.f32.mrf.mxu0
        %v876 = vadd.f32 %v552, %v875
        %v877 = vpop.f32.mrf.mxu0
        %878 = vmatprep.mubr.f32.mxu0 0.0
        %879 = vmatmul.mubr.f32.gmra.mxu0 %v455
        %v880 = vpop.f32.mrf.mxu0
        %v881 = vadd.f32 %v552, %v880
        %v882 = vpop.f32.mrf.mxu0
        %883 = vmatprep.mubr.f32.mxu0 0.0
        %884 = vmatmul.mubr.f32.gmra.mxu0 %v456
        %v885 = vpop.f32.mrf.mxu0
        %v886 = vadd.f32 %v552, %v885
        %v887 = vpop.f32.mrf.mxu0
        %888 = vmatprep.mubr.f32.mxu0 0.0
        %889 = vmatmul.mubr.f32.gmra.mxu0 %v457
        %v890 = vpop.f32.mrf.mxu0
        %v891 = vadd.f32 %v552, %v890
        %v892 = vpop.f32.mrf.mxu0
        %893 = vmatprep.mubr.f32.mxu0 0.0
        %894 = vmatmul.mubr.f32.gmra.mxu0 %v458
        %v895 = vpop.f32.mrf.mxu0
        %v896 = vadd.f32 %v552, %v895
        %v897 = vpop.f32.mrf.mxu0
        %898 = vmatprep.mubr.f32.mxu0 0.0
        %899 = vmatmul.mubr.f32.gmra.mxu0 %v459
        %v900 = vpop.f32.mrf.mxu0
        %v901 = vadd.f32 %v552, %v900
        %v902 = vpop.f32.mrf.mxu0
        %903 = vmatprep.mubr.f32.mxu0 0.0
        %904 = vmatmul.mubr.f32.gmra.mxu0 %v460
        %v905 = vpop.f32.mrf.mxu0
        %v906 = vadd.f32 %v552, %v905
        %v907 = vpop.f32.mrf.mxu0
        %908 = vmatprep.mubr.f32.mxu0 0.0
        %909 = vmatmul.mubr.f32.gmra.mxu0 %v461
        %v910 = vpop.f32.mrf.mxu0
        %v911 = vadd.f32 %v552, %v910
        %v912 = vpop.f32.mrf.mxu0
        %913 = vmatprep.mubr.f32.mxu0 0.0
        %914 = vmatmul.mubr.f32.gmra.mxu0 %v462
        %v915 = vpop.f32.mrf.mxu0
        %v916 = vadd.f32 %v552, %v915
        %v917 = vpop.f32.mrf.mxu0
        %918 = vmatprep.mubr.f32.mxu0 0.0
        %919 = vmatmul.mubr.f32.gmra.mxu0 %v463
        %v920 = vpop.f32.mrf.mxu0
        %v921 = vadd.f32 %v552, %v920
        %v922 = vpop.f32.mrf.mxu0
        %923 = vmatprep.mubr.f32.mxu0 0.0
        %924 = vmatmul.mubr.f32.gmra.mxu0 %v464
        %v925 = vpop.f32.mrf.mxu0
        %v926 = vadd.f32 %v552, %v925
        %v927 = vpop.f32.mrf.mxu0
        %928 = vmatprep.mubr.f32.mxu0 0.0
        %929 = vmatmul.mubr.f32.gmra.mxu0 %v465
        %v930 = vpop.f32.mrf.mxu0
        %v931 = vadd.f32 %v552, %v930
        %v932 = vpop.f32.mrf.mxu0
        %933 = vmatprep.mubr.f32.mxu0 0.0
        %934 = vmatmul.mubr.f32.gmra.mxu0 %v466
        %v935 = vpop.f32.mrf.mxu0
        %v936 = vadd.f32 %v552, %v935
        %v937 = vpop.f32.mrf.mxu0
        %938 = vmatprep.mubr.f32.mxu0 0.0
        %939 = vmatmul.mubr.f32.gmra.mxu0 %v467
        %v940 = vpop.f32.mrf.mxu0
        %v941 = vadd.f32 %v552, %v940
        %v942 = vpop.f32.mrf.mxu0
        %943 = vmatprep.mubr.f32.mxu0 0.0
        %944 = vmatmul.mubr.f32.gmra.mxu0 %v468
        %v945 = vpop.f32.mrf.mxu0
        %v946 = vadd.f32 %v552, %v945
        %v947 = vpop.f32.mrf.mxu0
        %948 = vmatprep.mubr.f32.mxu0 0.0
        %949 = vmatmul.mubr.f32.gmra.mxu0 %v469
        %v950 = vpop.f32.mrf.mxu0
        %v951 = vadd.f32 %v552, %v950
        %v952 = vpop.f32.mrf.mxu0
        %953 = vmatprep.mubr.f32.mxu0 0.0
        %954 = vmatmul.mubr.f32.gmra.mxu0 %v470
        %v955 = vpop.f32.mrf.mxu0
        %v956 = vadd.f32 %v552, %v955
        %v957 = vpop.f32.mrf.mxu0
        %958 = vmatprep.mubr.f32.mxu0 0.0
        %959 = vmatmul.mubr.f32.gmra.mxu0 %v471
        %v960 = vpop.f32.mrf.mxu0
        %v961 = vadd.f32 %v552, %v960
        %v962 = vpop.f32.mrf.mxu0
        %963 = vmatprep.mubr.f32.mxu0 0.0
        %964 = vmatmul.mubr.f32.gmra.mxu0 %v472
        %v965 = vpop.f32.mrf.mxu0
        %v966 = vadd.f32 %v552, %v965
        %v967 = vpop.f32.mrf.mxu0
        %968 = vmatprep.mubr.f32.mxu0 0.0
        %969 = vmatmul.mubr.f32.gmra.mxu0 %v473
        %v970 = vpop.f32.mrf.mxu0
        %v971 = vadd.f32 %v552, %v970
        %v972 = vpop.f32.mrf.mxu0
        %973 = vmatprep.mubr.f32.mxu0 0.0
        %974 = vmatmul.mubr.f32.gmra.mxu0 %v474
        %v975 = vpop.f32.mrf.mxu0
        %v976 = vadd.f32 %v552, %v975
        %v977 = vpop.f32.mrf.mxu0
        %978 = vmatprep.mubr.f32.mxu0 0.0
        %979 = vmatmul.mubr.f32.gmra.mxu0 %v475
        %v980 = vpop.f32.mrf.mxu0
        %v981 = vadd.f32 %v552, %v980
        %v982 = vpop.f32.mrf.mxu0
        %983 = vmatprep.mubr.f32.mxu0 0.0
        %984 = vmatmul.mubr.f32.gmra.mxu0 %v476
        %v985 = vpop.f32.mrf.mxu0
        %v986 = vadd.f32 %v552, %v985
        %v987 = vpop.f32.mrf.mxu0
        %988 = vmatprep.mubr.f32.mxu0 0.0
        %989 = vmatmul.mubr.f32.gmra.mxu0 %v477
        %v990 = vpop.f32.mrf.mxu0
        %v991 = vadd.f32 %v552, %v990
        %v992 = vpop.f32.mrf.mxu0
        %993 = vmatprep.mubr.f32.mxu0 0.0
        %994 = vmatmul.mubr.f32.gmra.mxu0 %v478
        %v995 = vpop.f32.mrf.mxu0
        %v996 = vadd.f32 %v552, %v995
        %v997 = vpop.f32.mrf.mxu0
        %998 = vmatprep.mubr.f32.mxu0 0.0
        %999 = vmatmul.mubr.f32.gmra.mxu0 %v479
        %v1000 = vpop.f32.mrf.mxu0
        %v1001 = vadd.f32 %v552, %v1000
        %v1002 = vpop.f32.mrf.mxu0
        %1003 = vmatprep.mubr.f32.mxu0 0.0
        %1004 = vmatmul.mubr.f32.gmra.mxu0 %v480
        %v1005 = vpop.f32.mrf.mxu0
        %v1006 = vadd.f32 %v552, %v1005
        %v1007 = vpop.f32.mrf.mxu0
        %1008 = vmatprep.mubr.f32.mxu0 0.0
        %1009 = vmatmul.mubr.f32.gmra.mxu0 %v481
        %v1010 = vpop.f32.mrf.mxu0
        %v1011 = vadd.f32 %v552, %v1010
        %v1012 = vpop.f32.mrf.mxu0
        %1013 = vmatprep.mubr.f32.mxu0 0.0
        %1014 = vmatmul.mubr.f32.gmra.mxu0 %v482
        %v1015 = vpop.f32.mrf.mxu0
        %v1016 = vadd.f32 %v552, %v1015
        %v1017 = vpop.f32.mrf.mxu0
        %1018 = vmatprep.mubr.f32.mxu0 0.0
        %1019 = vmatmul.mubr.f32.gmra.mxu0 %v483
        %v1020 = vpop.f32.mrf.mxu0
        %v1021 = vadd.f32 %v552, %v1020
        %v1022 = vpop.f32.mrf.mxu0
        %1023 = vmatprep.mubr.f32.mxu0 0.0
        %1024 = vmatmul.mubr.f32.gmra.mxu0 %v484
        %v1025 = vpop.f32.mrf.mxu0
        %v1026 = vadd.f32 %v552, %v1025
        %v1027 = vpop.f32.mrf.mxu0
        %1028 = vmatprep.mubr.f32.mxu0 0.0
        %1029 = vmatmul.mubr.f32.gmra.mxu0 %v485
        %v1030 = vpop.f32.mrf.mxu0
        %v1031 = vadd.f32 %v552, %v1030
        %v1032 = vpop.f32.mrf.mxu0
        %1033 = vmatprep.mubr.f32.mxu0 0.0
        %1034 = vmatmul.mubr.f32.gmra.mxu0 %v486
        %v1035 = vpop.f32.mrf.mxu0
        %v1036 = vadd.f32 %v552, %v1035
        %v1037 = vpop.f32.mrf.mxu0
        %1038 = vmatprep.mubr.f32.mxu0 0.0
        %1039 = vmatmul.mubr.f32.gmra.mxu0 %v487
        %v1040 = vpop.f32.mrf.mxu0
        %v1041 = vadd.f32 %v552, %v1040
        %v1042 = vpop.f32.mrf.mxu0
        %1043 = vmatprep.mubr.f32.mxu0 0.0
        %1044 = vmatmul.mubr.f32.gmra.mxu0 %v488
        %v1045 = vpop.f32.mrf.mxu0
        %v1046 = vadd.f32 %v552, %v1045
        %v1047 = vpop.f32.mrf.mxu0
        %1048 = vmatprep.mubr.f32.mxu0 0.0
        %1049 = vmatmul.mubr.f32.gmra.mxu0 %v489
        %v1050 = vpop.f32.mrf.mxu0
        %v1051 = vadd.f32 %v552, %v1050
        %v1052 = vpop.f32.mrf.mxu0
        %1053 = vmatprep.mubr.f32.mxu0 0.0
        %1054 = vmatmul.mubr.f32.gmra.mxu0 %v490
        %v1055 = vpop.f32.mrf.mxu0
        %v1056 = vadd.f32 %v552, %v1055
        %v1057 = vpop.f32.mrf.mxu0
        %1058 = vmatprep.mubr.f32.mxu0 0.0
        %1059 = vmatmul.mubr.f32.gmra.mxu0 %v491
        %v1060 = vpop.f32.mrf.mxu0
        %v1061 = vadd.f32 %v552, %v1060
        %v1062 = vpop.f32.mrf.mxu0
        %1063 = vmatprep.mubr.f32.mxu0 0.0
        %1064 = vmatmul.mubr.f32.gmra.mxu0 %v492
        %v1065 = vpop.f32.mrf.mxu0
        %v1066 = vadd.f32 %v552, %v1065
        %v1067 = vpop.f32.mrf.mxu0
        %1068 = vmatprep.mubr.f32.mxu0 0.0
        %1069 = vmatmul.mubr.f32.gmra.mxu0 %v493
        %v1070 = vpop.f32.mrf.mxu0
        %v1071 = vadd.f32 %v552, %v1070
        %v1072 = vpop.f32.mrf.mxu0
        %1073 = vmatprep.mubr.f32.mxu0 0.0
        %1074 = vmatmul.mubr.f32.gmra.mxu0 %v494
        %v1075 = vpop.f32.mrf.mxu0
        %v1076 = vadd.f32 %v552, %v1075
        %v1077 = vpop.f32.mrf.mxu0
        %1078 = vmatprep.mubr.f32.mxu0 0.0
        %1079 = vmatmul.mubr.f32.gmra.mxu0 %v495
        %v1080 = vpop.f32.mrf.mxu0
        %v1081 = vadd.f32 %v552, %v1080
        %v1082 = vpop.f32.mrf.mxu0
        %1083 = vmatprep.mubr.f32.mxu0 0.0
        %1084 = vmatmul.mubr.f32.gmra.mxu0 %v496
        %v1085 = vpop.f32.mrf.mxu0
        %v1086 = vadd.f32 %v552, %v1085
        %v1087 = vpop.f32.mrf.mxu0
        %1088 = vmatprep.mubr.f32.mxu0 0.0
        %1089 = vmatmul.mubr.f32.gmra.mxu0 %v497
        %v1090 = vpop.f32.mrf.mxu0
        %v1091 = vadd.f32 %v552, %v1090
        %v1092 = vpop.f32.mrf.mxu0
        %1093 = vmatprep.mubr.f32.mxu0 0.0
        %1094 = vmatmul.mubr.f32.gmra.mxu0 %v498
        %v1095 = vpop.f32.mrf.mxu0
        %v1096 = vadd.f32 %v552, %v1095
        %v1097 = vpop.f32.mrf.mxu0
        %1098 = vmatprep.mubr.f32.mxu0 0.0
        %1099 = vmatmul.mubr.f32.gmra.mxu0 %v499
        %v1100 = vpop.f32.mrf.mxu0
        %v1101 = vadd.f32 %v552, %v1100
        %v1102 = vpop.f32.mrf.mxu0
        %1103 = vmatprep.mubr.f32.mxu0 0.0
        %1104 = vmatmul.mubr.f32.gmra.mxu0 %v500
        %v1105 = vpop.f32.mrf.mxu0
        %v1106 = vadd.f32 %v552, %v1105
        %v1107 = vpop.f32.mrf.mxu0
        %1108 = vmatprep.mubr.f32.mxu0 0.0
        %1109 = vmatmul.mubr.f32.gmra.mxu0 %v501
        %v1110 = vpop.f32.mrf.mxu0
        %v1111 = vadd.f32 %v552, %v1110
        %v1112 = vpop.f32.mrf.mxu0
        %1113 = vmatprep.mubr.f32.mxu0 0.0
        %1114 = vmatmul.mubr.f32.gmra.mxu0 %v502
        %v1115 = vpop.f32.mrf.mxu0
        %v1116 = vadd.f32 %v552, %v1115
        %v1117 = vpop.f32.mrf.mxu0
        %1118 = vmatprep.mubr.f32.mxu0 0.0
        %1119 = vmatmul.mubr.f32.gmra.mxu0 %v503
        %v1120 = vpop.f32.mrf.mxu0
        %v1121 = vadd.f32 %v552, %v1120
        %v1122 = vpop.f32.mrf.mxu0
        %1123 = vmatprep.mubr.f32.mxu0 0.0
        %1124 = vmatmul.mubr.f32.gmra.mxu0 %v504
        %v1125 = vpop.f32.mrf.mxu0
        %v1126 = vadd.f32 %v552, %v1125
        %v1127 = vpop.f32.mrf.mxu0
        %1128 = vmatprep.mubr.f32.mxu0 0.0
        %1129 = vmatmul.mubr.f32.gmra.mxu0 %v505
        %v1130 = vpop.f32.mrf.mxu0
        %v1131 = vadd.f32 %v552, %v1130
        %v1132 = vpop.f32.mrf.mxu0
        %1133 = vmatprep.mubr.f32.mxu0 0.0
        %1134 = vmatmul.mubr.f32.gmra.mxu0 %v506
        %v1135 = vpop.f32.mrf.mxu0
        %v1136 = vadd.f32 %v552, %v1135
        %v1137 = vpop.f32.mrf.mxu0
        %1138 = vmatprep.mubr.f32.mxu0 0.0
        %1139 = vmatmul.mubr.f32.gmra.mxu0 %v507
        %v1140 = vpop.f32.mrf.mxu0
        %v1141 = vadd.f32 %v552, %v1140
        %v1142 = vpop.f32.mrf.mxu0
        %1143 = vmatprep.mubr.f32.mxu0 0.0
        %1144 = vmatmul.mubr.f32.gmra.mxu0 %v508
        %v1145 = vpop.f32.mrf.mxu0
        %v1146 = vadd.f32 %v552, %v1145
        %v1147 = vpop.f32.mrf.mxu0
        %1148 = vmatprep.mubr.f32.mxu0 0.0
        %1149 = vmatmul.mubr.f32.gmra.mxu0 %v509
        %v1150 = vpop.f32.mrf.mxu0
        %v1151 = vadd.f32 %v552, %v1150
        %v1152 = vpop.f32.mrf.mxu0
        %1153 = vmatprep.mubr.f32.mxu0 0.0
        %1154 = vmatmul.mubr.f32.gmra.mxu0 %v510
        %v1155 = vpop.f32.mrf.mxu0
        %v1156 = vadd.f32 %v552, %v1155
        %v1157 = vpop.f32.mrf.mxu0
        %1158 = vmatprep.mubr.f32.mxu0 0.0
        %1159 = vmatmul.mubr.f32.gmra.mxu0 %v511
        %v1160 = vpop.f32.mrf.mxu0
        %v1161 = vadd.f32 %v552, %v1160
        %v1162 = vpop.f32.mrf.mxu0
        %1163 = vmatprep.mubr.f32.mxu0 0.0
        %1164 = vmatmul.mubr.f32.gmra.mxu0 %v512
        %v1165 = vpop.f32.mrf.mxu0
        %v1166 = vadd.f32 %v552, %v1165
        %v1167 = vpop.f32.mrf.mxu0
        %1168 = vmatprep.mubr.f32.mxu0 0.0
        %1169 = vmatmul.mubr.f32.gmra.mxu0 %v513
        %v1170 = vpop.f32.mrf.mxu0
        %v1171 = vadd.f32 %v552, %v1170
        %v1172 = vpop.f32.mrf.mxu0
        %1173 = vmatprep.mubr.f32.mxu0 0.0
        %1174 = vmatmul.mubr.f32.gmra.mxu0 %v514
        %v1175 = vpop.f32.mrf.mxu0
        %v1176 = vadd.f32 %v552, %v1175
        %v1177 = vpop.f32.mrf.mxu0
        %1178 = vmatprep.mubr.f32.mxu0 0.0
        %1179 = vmatmul.mubr.f32.gmra.mxu0 %v515
        %v1180 = vpop.f32.mrf.mxu0
        %v1181 = vadd.f32 %v552, %v1180
        %v1182 = vpop.f32.mrf.mxu0
        %1183 = vmatprep.mubr.f32.mxu0 0.0
        %1184 = vmatmul.mubr.f32.gmra.mxu0 %v516
        %v1185 = vpop.f32.mrf.mxu0
        %v1186 = vadd.f32 %v552, %v1185
        %v1187 = vpop.f32.mrf.mxu0
        %1188 = vmatprep.mubr.f32.mxu0 0.0
        %1189 = vmatmul.mubr.f32.gmra.mxu0 %v517
        %v1190 = vpop.f32.mrf.mxu0
        %v1191 = vadd.f32 %v552, %v1190
        %v1192 = vpop.f32.mrf.mxu0
        %1193 = vmatprep.mubr.f32.mxu0 0.0
        %1194 = vmatmul.mubr.f32.gmra.mxu0 %v518
        %v1195 = vpop.f32.mrf.mxu0
        %v1196 = vadd.f32 %v552, %v1195
        %v1197 = vpop.f32.mrf.mxu0
        %1198 = vmatprep.mubr.f32.mxu0 0.0
        %1199 = vmatmul.mubr.f32.gmra.mxu0 %v519
        %v1200 = vpop.f32.mrf.mxu0
        %v1201 = vadd.f32 %v552, %v1200
        %v1202 = vpop.f32.mrf.mxu0
        %1203 = vmatprep.mubr.f32.mxu0 0.0
        %1204 = vmatmul.mubr.f32.gmra.mxu0 %v520
        %v1205 = vpop.f32.mrf.mxu0
        %v1206 = vadd.f32 %v552, %v1205
        %v1207 = vpop.f32.mrf.mxu0
        %1208 = vmatprep.mubr.f32.mxu0 0.0
        %1209 = vmatmul.mubr.f32.gmra.mxu0 %v521
        %v1210 = vpop.f32.mrf.mxu0
        %v1211 = vadd.f32 %v552, %v1210
        %v1212 = vpop.f32.mrf.mxu0
        %1213 = vmatprep.mubr.f32.mxu0 0.0
        %1214 = vmatmul.mubr.f32.gmra.mxu0 %v522
        %v1215 = vpop.f32.mrf.mxu0
        %v1216 = vadd.f32 %v552, %v1215
        %v1217 = vpop.f32.mrf.mxu0
        %1218 = vmatprep.mubr.f32.mxu0 0.0
        %1219 = vmatmul.mubr.f32.gmra.mxu0 %v523
        %v1220 = vpop.f32.mrf.mxu0
        %v1221 = vadd.f32 %v552, %v1220
        %v1222 = vpop.f32.mrf.mxu0
        %1223 = vmatprep.mubr.f32.mxu0 0.0
        %1224 = vmatmul.mubr.f32.gmra.mxu0 %v524
        %v1225 = vpop.f32.mrf.mxu0
        %v1226 = vadd.f32 %v552, %v1225
        %v1227 = vpop.f32.mrf.mxu0
        %1228 = vmatprep.mubr.f32.mxu0 0.0
        %1229 = vmatmul.mubr.f32.gmra.mxu0 %v525
        %v1230 = vpop.f32.mrf.mxu0
        %v1231 = vadd.f32 %v552, %v1230
        %v1232 = vpop.f32.mrf.mxu0
        %1233 = vmatprep.mubr.f32.mxu0 0.0
        %1234 = vmatmul.mubr.f32.gmra.mxu0 %v526
        %v1235 = vpop.f32.mrf.mxu0
        %v1236 = vadd.f32 %v552, %v1235
        %v1237 = vpop.f32.mrf.mxu0
        %1238 = vmatprep.mubr.f32.mxu0 0.0
        %1239 = vmatmul.mubr.f32.gmra.mxu0 %v527
        %v1240 = vpop.f32.mrf.mxu0
        %v1241 = vadd.f32 %v552, %v1240
        %v1242 = vpop.f32.mrf.mxu0
        %1243 = vmatprep.mubr.f32.mxu0 0.0
        %1244 = vmatmul.mubr.f32.gmra.mxu0 %v528
        %v1245 = vpop.f32.mrf.mxu0
        %v1246 = vadd.f32 %v552, %v1245
        %v1247 = vpop.f32.mrf.mxu0
        %1248 = vmatprep.mubr.f32.mxu0 0.0
        %1249 = vmatmul.mubr.f32.gmra.mxu0 %v529
        %v1250 = vpop.f32.mrf.mxu0
        %v1251 = vadd.f32 %v552, %v1250
        %v1252 = vpop.f32.mrf.mxu0
        %1253 = vmatprep.mubr.f32.mxu0 0.0
        %1254 = vmatmul.mubr.f32.gmra.mxu0 %v530
        %v1255 = vpop.f32.mrf.mxu0
        %v1256 = vadd.f32 %v552, %v1255
        %v1257 = vpop.f32.mrf.mxu0
        %1258 = vdwg.mxu0
        %v1259 = vld [vmem:[%s351] sm:$0xff]
        %v1260 = vld [vmem:[#allocation8] sm:$0xff]
        %v1261 = vld [vmem:[#allocation8 + $0x8] sm:$0xff]
        %v1262 = vld [vmem:[#allocation8 + $0x10] sm:$0xff]
        %v1263 = vld [vmem:[#allocation8 + $0x18] sm:$0xff]
        %v1264 = vld [vmem:[#allocation8 + $0x20] sm:$0xff]
        %v1265 = vld [vmem:[#allocation8 + $0x28] sm:$0xff]
        %v1266 = vld [vmem:[#allocation8 + $0x30] sm:$0xff]
        %v1267 = vld [vmem:[#allocation8 + $0x38] sm:$0xff]
        %v1268 = vld [vmem:[%s5] sm:$0x1]
        %v1270 = vlaneseq
        %v1271 = vshrl.u32 %v1270, 7
        %v1272 = vsub.s32 0, %v1271
        %v1273 = vrot.slane %v1268, %v1272
        %vm1275 = vcmask 523264
        %v1277 = vsel %vm1275, %v1259, 0
        %1279 = vmatprep.subr.mxu0 0.0
        %1280 = vmatpush1.msra.mxu0 0.0
        %1281 = vmatprep.subr.mxu0 0.0
        %1282 = vmatpush1.msra.mxu0 0.0
        %1283 = vmatprep.subr.mxu0 0.0
        %1284 = vmatpush1.msra.mxu0 0.0
        %1285 = vmatprep.subr.mxu0 0.0
        %1286 = vmatpush1.msra.mxu0 0.0
        %1287 = vmatprep.subr.mxu0 0.0
        %1288 = vmatpush1.msra.mxu0 0.0
        %1289 = vmatprep.subr.mxu0 0.0
        %1290 = vmatpush1.msra.mxu0 0.0
        %1291 = vmatprep.subr.mxu0 0.0
        %1292 = vmatpush1.msra.mxu0 0.0
        %1293 = vmatprep.subr.mxu0 0.0
        %1294 = vmatpush1.msra.mxu0 0.0
        %1295 = vmatprep.subr.mxu0 0.0
        %1296 = vmatpush1.msra.mxu0 %v1267
        %1297 = vmatprep.subr.mxu0 0.0
        %1298 = vmatpush1.msra.mxu0 %v1266
        %1299 = vmatprep.subr.mxu0 0.0
        %1300 = vmatpush1.msra.mxu0 %v1265
        %1301 = vmatprep.subr.mxu0 0.0
        %1302 = vmatpush1.msra.mxu0 %v1264
        %1303 = vmatprep.subr.mxu0 0.0
        %1304 = vmatpush1.msra.mxu0 %v1263
        %1305 = vmatprep.subr.mxu0 0.0
        %1306 = vmatpush1.msra.mxu0 %v1262
        %1307 = vmatprep.subr.mxu0 0.0
        %1308 = vmatpush1.msra.mxu0 %v1261
        %1309 = vmatprep.subr.mxu0 0.0
        %1310 = vmatpush1.msra.mxu0 %v1260
        %1311 = vmatprep.subr.mxu0 0.0
        %1312 = vmatpush2.msra.mxu0 0.0
        %1313 = vmatprep.subr.mxu0 0.0
        %1314 = vmatpush2.msra.mxu0 0.0
        %1315 = vmatprep.subr.mxu0 0.0
        %1316 = vmatpush2.msra.mxu0 0.0
        %1317 = vmatprep.subr.mxu0 0.0
        %1318 = vmatpush2.msra.mxu0 0.0
        %1319 = vmatprep.subr.mxu0 0.0
        %1320 = vmatpush2.msra.mxu0 0.0
        %1321 = vmatprep.subr.mxu0 0.0
        %1322 = vmatpush2.msra.mxu0 0.0
        %1323 = vmatprep.subr.mxu0 0.0
        %1324 = vmatpush2.msra.mxu0 0.0
        %1325 = vmatprep.subr.mxu0 0.0
        %1326 = vmatpush2.msra.mxu0 0.0
        %1327 = vmatprep.subr.mxu0 0.0
        %1328 = vmatpush2.msra.mxu0 0.0
        %1329 = vmatprep.subr.mxu0 0.0
        %1330 = vmatpush2.msra.mxu0 0.0
        %1331 = vmatprep.subr.mxu0 0.0
        %1332 = vmatpush2.msra.mxu0 0.0
        %1333 = vmatprep.subr.mxu0 0.0
        %1334 = vmatpush2.msra.mxu0 0.0
        %1335 = vmatprep.subr.mxu0 0.0
        %1336 = vmatpush2.msra.mxu0 0.0
        %1337 = vmatprep.subr.mxu0 0.0
        %1338 = vmatpush2.msra.mxu0 0.0
        %1339 = vmatprep.subr.mxu0 0.0
        %1340 = vmatpush2.msra.mxu0 0.0
        %1341 = vmatprep.subr.mxu0 0.0
        %1342 = vmatpush2.msra.mxu0 0.0
        %1343 = vmatprep.mubr.f32.mxu0 0.0
        %1344 = vmatmul.mubr.f32.gmra.mxu0 %v1277
        %v1345 = vpop.f32.mrf.mxu0
        %v1346 = vadd.f32 %v1273, %v1345
        %v1347 = vpop.f32.mrf.mxu0
        %1348 = vdwg.mxu0
        %v1350 = vcombine.high %v1346, %v1346
        %v1352 = vunpack.c.l.s4 1966171168
        %v1353 = vunpack.c.0.s8 %v1352
        %v1354 = vlaneseq
        %v1355 = vshrl.u32 %v1354, 7
        %v1356 = vsub.s32 %v1353, %v1355
        %v1357 = vrot.slane %v1346, %v1356
        %v1359 = vunpack.c.l.s4 1966171168
        %v1360 = vunpack.c.0.s8 %v1359
        %v1361 = vlaneseq
        %v1362 = vshrl.u32 %v1361, 7
        %v1363 = vsub.s32 %v1360, %v1362
        %v1364 = vrot.slane %v1350, %v1363
        %v1365 = vcombine.high %v1357, %v1357
        %v1366 = vcombine.high %v1364, %v1364
        %v1368 = vunpack.c.l.s4 1966171168
        %v1369 = vunpack.c.0.s8 %v1368
        %v1370 = vlaneseq
        %v1371 = vshrl.u32 %v1370, 7
        %v1372 = vsub.s32 %v1369, %v1371
        %v1373 = vrot.slane %v1357, %v1372
        %v1375 = vunpack.c.l.s4 1966171168
        %v1376 = vunpack.c.0.s8 %v1375
        %v1377 = vlaneseq
        %v1378 = vshrl.u32 %v1377, 7
        %v1379 = vsub.s32 %v1376, %v1378
        %v1380 = vrot.slane %v1364, %v1379
        %v1382 = vunpack.c.l.s4 1966171168
        %v1383 = vunpack.c.0.s8 %v1382
        %v1384 = vlaneseq
        %v1385 = vshrl.u32 %v1384, 7
        %v1386 = vsub.s32 %v1383, %v1385
        %v1387 = vrot.slane %v1365, %v1386
        %v1389 = vunpack.c.l.s4 1966171168
        %v1390 = vunpack.c.0.s8 %v1389
        %v1391 = vlaneseq
        %v1392 = vshrl.u32 %v1391, 7
        %v1393 = vsub.s32 %v1390, %v1392
        %v1394 = vrot.slane %v1366, %v1393
        %v1395 = vcombine.high %v1373, %v1373
        %v1396 = vcombine.high %v1380, %v1380
        %v1397 = vcombine.high %v1387, %v1387
        %v1398 = vcombine.high %v1394, %v1394
        %v1399 = vlaneseq
        %v1400 = vshrl.u32 %v1399, 7
        %v1401 = vsub.s32 0, %v1400
        %v1402 = vrot.slane %v1373, %v1401
        %v1403 = vlaneseq
        %v1404 = vshrl.u32 %v1403, 7
        %v1405 = vsub.s32 0, %v1404
        %v1406 = vrot.slane %v1387, %v1405
        %v1407 = vlaneseq
        %v1408 = vshrl.u32 %v1407, 7
        %v1409 = vsub.s32 0, %v1408
        %v1410 = vrot.slane %v1395, %v1409
        %v1411 = vlaneseq
        %v1412 = vshrl.u32 %v1411, 7
        %v1413 = vsub.s32 0, %v1412
        %v1414 = vrot.slane %v1397, %v1413
        %v1415 = vlaneseq
        %v1416 = vshrl.u32 %v1415, 7
        %v1417 = vsub.s32 0, %v1416
        %v1418 = vrot.slane %v1380, %v1417
        %v1419 = vlaneseq
        %v1420 = vshrl.u32 %v1419, 7
        %v1421 = vsub.s32 0, %v1420
        %v1422 = vrot.slane %v1394, %v1421
        %v1423 = vlaneseq
        %v1424 = vshrl.u32 %v1423, 7
        %v1425 = vsub.s32 0, %v1424
        %v1426 = vrot.slane %v1396, %v1425
        %v1427 = vlaneseq
        %v1428 = vshrl.u32 %v1427, 7
        %v1429 = vsub.s32 0, %v1428
        %v1430 = vrot.slane %v1398, %v1429
        %v1439 = vadd.f32 %v621, %v1402
        %v1440 = vadd.f32 %v626, %v1402
        %v1441 = vadd.f32 %v631, %v1402
        %v1442 = vadd.f32 %v636, %v1402
        %v1443 = vadd.f32 %v641, %v1402
        %v1444 = vadd.f32 %v646, %v1402
        %v1445 = vadd.f32 %v651, %v1402
        %v1446 = vadd.f32 %v656, %v1402
        %v1447 = vadd.f32 %v661, %v1402
        %v1448 = vadd.f32 %v666, %v1402
        %v1449 = vadd.f32 %v671, %v1402
        %v1450 = vadd.f32 %v676, %v1402
        %v1451 = vadd.f32 %v681, %v1402
        %v1452 = vadd.f32 %v686, %v1402
        %v1453 = vadd.f32 %v691, %v1402
        %v1454 = vadd.f32 %v696, %v1402
        %v1455 = vadd.f32 %v701, %v1406
        %v1456 = vadd.f32 %v706, %v1406
        %v1457 = vadd.f32 %v711, %v1406
        %v1458 = vadd.f32 %v716, %v1406
        %v1459 = vadd.f32 %v721, %v1406
        %v1460 = vadd.f32 %v726, %v1406
        %v1461 = vadd.f32 %v731, %v1406
        %v1462 = vadd.f32 %v736, %v1406
        %v1463 = vadd.f32 %v741, %v1406
        %v1464 = vadd.f32 %v746, %v1406
        %v1465 = vadd.f32 %v751, %v1406
        %v1466 = vadd.f32 %v756, %v1406
        %v1467 = vadd.f32 %v761, %v1406
        %v1468 = vadd.f32 %v766, %v1406
        %v1469 = vadd.f32 %v771, %v1406
        %v1470 = vadd.f32 %v776, %v1406
        %v1471 = vadd.f32 %v781, %v1410
        %v1472 = vadd.f32 %v786, %v1410
        %v1473 = vadd.f32 %v791, %v1410
        %v1474 = vadd.f32 %v796, %v1410
        %v1475 = vadd.f32 %v801, %v1410
        %v1476 = vadd.f32 %v806, %v1410
        %v1477 = vadd.f32 %v811, %v1410
        %v1478 = vadd.f32 %v816, %v1410
        %v1479 = vadd.f32 %v821, %v1410
        %v1480 = vadd.f32 %v826, %v1410
        %v1481 = vadd.f32 %v831, %v1410
        %v1482 = vadd.f32 %v836, %v1410
        %v1483 = vadd.f32 %v841, %v1410
        %v1484 = vadd.f32 %v846, %v1410
        %v1485 = vadd.f32 %v851, %v1410
        %v1486 = vadd.f32 %v856, %v1410
        %v1487 = vadd.f32 %v861, %v1414
        %v1488 = vadd.f32 %v866, %v1414
        %v1489 = vadd.f32 %v871, %v1414
        %v1490 = vadd.f32 %v876, %v1414
        %v1491 = vadd.f32 %v881, %v1414
        %v1492 = vadd.f32 %v886, %v1414
        %v1493 = vadd.f32 %v891, %v1414
        %v1494 = vadd.f32 %v896, %v1414
        %v1495 = vadd.f32 %v901, %v1414
        %v1496 = vadd.f32 %v906, %v1414
        %v1497 = vadd.f32 %v911, %v1414
        %v1498 = vadd.f32 %v916, %v1414
        %v1499 = vadd.f32 %v921, %v1414
        %v1500 = vadd.f32 %v926, %v1414
        %v1501 = vadd.f32 %v931, %v1414
        %v1502 = vadd.f32 %v936, %v1414
        %v1503 = vadd.f32 %v941, %v1418
        %v1504 = vadd.f32 %v946, %v1418
        %v1505 = vadd.f32 %v951, %v1418
        %v1506 = vadd.f32 %v956, %v1418
        %v1507 = vadd.f32 %v961, %v1418
        %v1508 = vadd.f32 %v966, %v1418
        %v1509 = vadd.f32 %v971, %v1418
        %v1510 = vadd.f32 %v976, %v1418
        %v1511 = vadd.f32 %v981, %v1418
        %v1512 = vadd.f32 %v986, %v1418
        %v1513 = vadd.f32 %v991, %v1418
        %v1514 = vadd.f32 %v996, %v1418
        %v1515 = vadd.f32 %v1001, %v1418
        %v1516 = vadd.f32 %v1006, %v1418
        %v1517 = vadd.f32 %v1011, %v1418
        %v1518 = vadd.f32 %v1016, %v1418
        %v1519 = vadd.f32 %v1021, %v1422
        %v1520 = vadd.f32 %v1026, %v1422
        %v1521 = vadd.f32 %v1031, %v1422
        %v1522 = vadd.f32 %v1036, %v1422
        %v1523 = vadd.f32 %v1041, %v1422
        %v1524 = vadd.f32 %v1046, %v1422
        %v1525 = vadd.f32 %v1051, %v1422
        %v1526 = vadd.f32 %v1056, %v1422
        %v1527 = vadd.f32 %v1061, %v1422
        %v1528 = vadd.f32 %v1066, %v1422
        %v1529 = vadd.f32 %v1071, %v1422
        %v1530 = vadd.f32 %v1076, %v1422
        %v1531 = vadd.f32 %v1081, %v1422
        %v1532 = vadd.f32 %v1086, %v1422
        %v1533 = vadd.f32 %v1091, %v1422
        %v1534 = vadd.f32 %v1096, %v1422
        %v1535 = vadd.f32 %v1101, %v1426
        %v1536 = vadd.f32 %v1106, %v1426
        %v1537 = vadd.f32 %v1111, %v1426
        %v1538 = vadd.f32 %v1116, %v1426
        %v1539 = vadd.f32 %v1121, %v1426
        %v1540 = vadd.f32 %v1126, %v1426
        %v1541 = vadd.f32 %v1131, %v1426
        %v1542 = vadd.f32 %v1136, %v1426
        %v1543 = vadd.f32 %v1141, %v1426
        %v1544 = vadd.f32 %v1146, %v1426
        %v1545 = vadd.f32 %v1151, %v1426
        %v1546 = vadd.f32 %v1156, %v1426
        %v1547 = vadd.f32 %v1161, %v1426
        %v1548 = vadd.f32 %v1166, %v1426
        %v1549 = vadd.f32 %v1171, %v1426
        %v1550 = vadd.f32 %v1176, %v1426
        %v1551 = vadd.f32 %v1181, %v1430
        %v1552 = vadd.f32 %v1186, %v1430
        %v1553 = vadd.f32 %v1191, %v1430
        %v1554 = vadd.f32 %v1196, %v1430
        %v1555 = vadd.f32 %v1201, %v1430
        %v1556 = vadd.f32 %v1206, %v1430
        %v1557 = vadd.f32 %v1211, %v1430
        %v1558 = vadd.f32 %v1216, %v1430
        %v1559 = vadd.f32 %v1221, %v1430
        %v1560 = vadd.f32 %v1226, %v1430
        %v1561 = vadd.f32 %v1231, %v1430
        %v1562 = vadd.f32 %v1236, %v1430
        %v1563 = vadd.f32 %v1241, %v1430
        %v1564 = vadd.f32 %v1246, %v1430
        %v1565 = vadd.f32 %v1251, %v1430
        %v1566 = vadd.f32 %v1256, %v1430
        %v1567 = vmax.f32 %v1439, 0.0
        %v1568 = vmax.f32 %v1440, 0.0
        %v1569 = vmax.f32 %v1441, 0.0
        %v1570 = vmax.f32 %v1442, 0.0
        %v1571 = vmax.f32 %v1443, 0.0
        %v1572 = vmax.f32 %v1444, 0.0
        %v1573 = vmax.f32 %v1445, 0.0
        %v1574 = vmax.f32 %v1446, 0.0
        %v1575 = vmax.f32 %v1447, 0.0
        %v1576 = vmax.f32 %v1448, 0.0
        %v1577 = vmax.f32 %v1449, 0.0
        %v1578 = vmax.f32 %v1450, 0.0
        %v1579 = vmax.f32 %v1451, 0.0
        %v1580 = vmax.f32 %v1452, 0.0
        %v1581 = vmax.f32 %v1453, 0.0
        %v1582 = vmax.f32 %v1454, 0.0
        %v1583 = vmax.f32 %v1455, 0.0
        %v1584 = vmax.f32 %v1456, 0.0
        %v1585 = vmax.f32 %v1457, 0.0
        %v1586 = vmax.f32 %v1458, 0.0
        %v1587 = vmax.f32 %v1459, 0.0
        %v1588 = vmax.f32 %v1460, 0.0
        %v1589 = vmax.f32 %v1461, 0.0
        %v1590 = vmax.f32 %v1462, 0.0
        %v1591 = vmax.f32 %v1463, 0.0
        %v1592 = vmax.f32 %v1464, 0.0
        %v1593 = vmax.f32 %v1465, 0.0
        %v1594 = vmax.f32 %v1466, 0.0
        %v1595 = vmax.f32 %v1467, 0.0
        %v1596 = vmax.f32 %v1468, 0.0
        %v1597 = vmax.f32 %v1469, 0.0
        %v1598 = vmax.f32 %v1470, 0.0
        %v1599 = vmax.f32 %v1471, 0.0
        %v1600 = vmax.f32 %v1472, 0.0
        %v1601 = vmax.f32 %v1473, 0.0
        %v1602 = vmax.f32 %v1474, 0.0
        %v1603 = vmax.f32 %v1475, 0.0
        %v1604 = vmax.f32 %v1476, 0.0
        %v1605 = vmax.f32 %v1477, 0.0
        %v1606 = vmax.f32 %v1478, 0.0
        %v1607 = vmax.f32 %v1479, 0.0
        %v1608 = vmax.f32 %v1480, 0.0
        %v1609 = vmax.f32 %v1481, 0.0
        %v1610 = vmax.f32 %v1482, 0.0
        %v1611 = vmax.f32 %v1483, 0.0
        %v1612 = vmax.f32 %v1484, 0.0
        %v1613 = vmax.f32 %v1485, 0.0
        %v1614 = vmax.f32 %v1486, 0.0
        %v1615 = vmax.f32 %v1487, 0.0
        %v1616 = vmax.f32 %v1488, 0.0
        %v1617 = vmax.f32 %v1489, 0.0
        %v1618 = vmax.f32 %v1490, 0.0
        %v1619 = vmax.f32 %v1491, 0.0
        %v1620 = vmax.f32 %v1492, 0.0
        %v1621 = vmax.f32 %v1493, 0.0
        %v1622 = vmax.f32 %v1494, 0.0
        %v1623 = vmax.f32 %v1495, 0.0
        %v1624 = vmax.f32 %v1496, 0.0
        %v1625 = vmax.f32 %v1497, 0.0
        %v1626 = vmax.f32 %v1498, 0.0
        %v1627 = vmax.f32 %v1499, 0.0
        %v1628 = vmax.f32 %v1500, 0.0
        %v1629 = vmax.f32 %v1501, 0.0
        %v1630 = vmax.f32 %v1502, 0.0
        %v1631 = vmax.f32 %v1503, 0.0
        %v1632 = vmax.f32 %v1504, 0.0
        %v1633 = vmax.f32 %v1505, 0.0
        %v1634 = vmax.f32 %v1506, 0.0
        %v1635 = vmax.f32 %v1507, 0.0
        %v1636 = vmax.f32 %v1508, 0.0
        %v1637 = vmax.f32 %v1509, 0.0
        %v1638 = vmax.f32 %v1510, 0.0
        %v1639 = vmax.f32 %v1511, 0.0
        %v1640 = vmax.f32 %v1512, 0.0
        %v1641 = vmax.f32 %v1513, 0.0
        %v1642 = vmax.f32 %v1514, 0.0
        %v1643 = vmax.f32 %v1515, 0.0
        %v1644 = vmax.f32 %v1516, 0.0
        %v1645 = vmax.f32 %v1517, 0.0
        %v1646 = vmax.f32 %v1518, 0.0
        %v1647 = vmax.f32 %v1519, 0.0
        %v1648 = vmax.f32 %v1520, 0.0
        %v1649 = vmax.f32 %v1521, 0.0
        %v1650 = vmax.f32 %v1522, 0.0
        %v1651 = vmax.f32 %v1523, 0.0
        %v1652 = vmax.f32 %v1524, 0.0
        %v1653 = vmax.f32 %v1525, 0.0
        %v1654 = vmax.f32 %v1526, 0.0
        %v1655 = vmax.f32 %v1527, 0.0
        %v1656 = vmax.f32 %v1528, 0.0
        %v1657 = vmax.f32 %v1529, 0.0
        %v1658 = vmax.f32 %v1530, 0.0
        %v1659 = vmax.f32 %v1531, 0.0
        %v1660 = vmax.f32 %v1532, 0.0
        %v1661 = vmax.f32 %v1533, 0.0
        %v1662 = vmax.f32 %v1534, 0.0
        %v1663 = vmax.f32 %v1535, 0.0
        %v1664 = vmax.f32 %v1536, 0.0
        %v1665 = vmax.f32 %v1537, 0.0
        %v1666 = vmax.f32 %v1538, 0.0
        %v1667 = vmax.f32 %v1539, 0.0
        %v1668 = vmax.f32 %v1540, 0.0
        %v1669 = vmax.f32 %v1541, 0.0
        %v1670 = vmax.f32 %v1542, 0.0
        %v1671 = vmax.f32 %v1543, 0.0
        %v1672 = vmax.f32 %v1544, 0.0
        %v1673 = vmax.f32 %v1545, 0.0
        %v1674 = vmax.f32 %v1546, 0.0
        %v1675 = vmax.f32 %v1547, 0.0
        %v1676 = vmax.f32 %v1548, 0.0
        %v1677 = vmax.f32 %v1549, 0.0
        %v1678 = vmax.f32 %v1550, 0.0
        %v1679 = vmax.f32 %v1551, 0.0
        %v1680 = vmax.f32 %v1552, 0.0
        %v1681 = vmax.f32 %v1553, 0.0
        %v1682 = vmax.f32 %v1554, 0.0
        %v1683 = vmax.f32 %v1555, 0.0
        %v1684 = vmax.f32 %v1556, 0.0
        %v1685 = vmax.f32 %v1557, 0.0
        %v1686 = vmax.f32 %v1558, 0.0
        %v1687 = vmax.f32 %v1559, 0.0
        %v1688 = vmax.f32 %v1560, 0.0
        %v1689 = vmax.f32 %v1561, 0.0
        %v1690 = vmax.f32 %v1562, 0.0
        %v1691 = vmax.f32 %v1563, 0.0
        %v1692 = vmax.f32 %v1564, 0.0
        %v1693 = vmax.f32 %v1565, 0.0
        %v1694 = vmax.f32 %v1566, 0.0
        %v1695 = vld [vmem:[%s6] sm:$0x1]
        %v1697 = vlaneseq
        %v1698 = vshrl.u32 %v1697, 7
        %v1699 = vsub.s32 0, %v1698
        %v1700 = vrot.slane %v1695, %v1699
        %v1702 = vmul.f32 %v1567, %v1700
        %v1703 = vmul.f32 %v1568, %v1700
        %v1704 = vmul.f32 %v1569, %v1700
        %v1705 = vmul.f32 %v1570, %v1700
        %v1706 = vmul.f32 %v1571, %v1700
        %v1707 = vmul.f32 %v1572, %v1700
        %v1708 = vmul.f32 %v1573, %v1700
        %v1709 = vmul.f32 %v1574, %v1700
        %v1710 = vmul.f32 %v1575, %v1700
        %v1711 = vmul.f32 %v1576, %v1700
        %v1712 = vmul.f32 %v1577, %v1700
        %v1713 = vmul.f32 %v1578, %v1700
        %v1714 = vmul.f32 %v1579, %v1700
        %v1715 = vmul.f32 %v1580, %v1700
        %v1716 = vmul.f32 %v1581, %v1700
        %v1717 = vmul.f32 %v1582, %v1700
        %v1718 = vmul.f32 %v1583, %v1700
        %v1719 = vmul.f32 %v1584, %v1700
        %v1720 = vmul.f32 %v1585, %v1700
        %v1721 = vmul.f32 %v1586, %v1700
        %v1722 = vmul.f32 %v1587, %v1700
        %v1723 = vmul.f32 %v1588, %v1700
        %v1724 = vmul.f32 %v1589, %v1700
        %v1725 = vmul.f32 %v1590, %v1700
        %v1726 = vmul.f32 %v1591, %v1700
        %v1727 = vmul.f32 %v1592, %v1700
        %v1728 = vmul.f32 %v1593, %v1700
        %v1729 = vmul.f32 %v1594, %v1700
        %v1730 = vmul.f32 %v1595, %v1700
        %v1731 = vmul.f32 %v1596, %v1700
        %v1732 = vmul.f32 %v1597, %v1700
        %v1733 = vmul.f32 %v1598, %v1700
        %v1734 = vmul.f32 %v1599, %v1700
        %v1735 = vmul.f32 %v1600, %v1700
        %v1736 = vmul.f32 %v1601, %v1700
        %v1737 = vmul.f32 %v1602, %v1700
        %v1738 = vmul.f32 %v1603, %v1700
        %v1739 = vmul.f32 %v1604, %v1700
        %v1740 = vmul.f32 %v1605, %v1700
        %v1741 = vmul.f32 %v1606, %v1700
        %v1742 = vmul.f32 %v1607, %v1700
        %v1743 = vmul.f32 %v1608, %v1700
        %v1744 = vmul.f32 %v1609, %v1700
        %v1745 = vmul.f32 %v1610, %v1700
        %v1746 = vmul.f32 %v1611, %v1700
        %v1747 = vmul.f32 %v1612, %v1700
        %v1748 = vmul.f32 %v1613, %v1700
        %v1749 = vmul.f32 %v1614, %v1700
        %v1750 = vmul.f32 %v1615, %v1700
        %v1751 = vmul.f32 %v1616, %v1700
        %v1752 = vmul.f32 %v1617, %v1700
        %v1753 = vmul.f32 %v1618, %v1700
        %v1754 = vmul.f32 %v1619, %v1700
        %v1755 = vmul.f32 %v1620, %v1700
        %v1756 = vmul.f32 %v1621, %v1700
        %v1757 = vmul.f32 %v1622, %v1700
        %v1758 = vmul.f32 %v1623, %v1700
        %v1759 = vmul.f32 %v1624, %v1700
        %v1760 = vmul.f32 %v1625, %v1700
        %v1761 = vmul.f32 %v1626, %v1700
        %v1762 = vmul.f32 %v1627, %v1700
        %v1763 = vmul.f32 %v1628, %v1700
        %v1764 = vmul.f32 %v1629, %v1700
        %v1765 = vmul.f32 %v1630, %v1700
        %v1766 = vmul.f32 %v1631, %v1700
        %v1767 = vmul.f32 %v1632, %v1700
        %v1768 = vmul.f32 %v1633, %v1700
        %v1769 = vmul.f32 %v1634, %v1700
        %v1770 = vmul.f32 %v1635, %v1700
        %v1771 = vmul.f32 %v1636, %v1700
        %v1772 = vmul.f32 %v1637, %v1700
        %v1773 = vmul.f32 %v1638, %v1700
        %v1774 = vmul.f32 %v1639, %v1700
        %v1775 = vmul.f32 %v1640, %v1700
        %v1776 = vmul.f32 %v1641, %v1700
        %v1777 = vmul.f32 %v1642, %v1700
        %v1778 = vmul.f32 %v1643, %v1700
        %v1779 = vmul.f32 %v1644, %v1700
        %v1780 = vmul.f32 %v1645, %v1700
        %v1781 = vmul.f32 %v1646, %v1700
        %v1782 = vmul.f32 %v1647, %v1700
        %v1783 = vmul.f32 %v1648, %v1700
        %v1784 = vmul.f32 %v1649, %v1700
        %v1785 = vmul.f32 %v1650, %v1700
        %v1786 = vmul.f32 %v1651, %v1700
        %v1787 = vmul.f32 %v1652, %v1700
        %v1788 = vmul.f32 %v1653, %v1700
        %v1789 = vmul.f32 %v1654, %v1700
        %v1790 = vmul.f32 %v1655, %v1700
        %v1791 = vmul.f32 %v1656, %v1700
        %v1792 = vmul.f32 %v1657, %v1700
        %v1793 = vmul.f32 %v1658, %v1700
        %v1794 = vmul.f32 %v1659, %v1700
        %v1795 = vmul.f32 %v1660, %v1700
        %v1796 = vmul.f32 %v1661, %v1700
        %v1797 = vmul.f32 %v1662, %v1700
        %v1798 = vmul.f32 %v1663, %v1700
        %v1799 = vmul.f32 %v1664, %v1700
        %v1800 = vmul.f32 %v1665, %v1700
        %v1801 = vmul.f32 %v1666, %v1700
        %v1802 = vmul.f32 %v1667, %v1700
        %v1803 = vmul.f32 %v1668, %v1700
        %v1804 = vmul.f32 %v1669, %v1700
        %v1805 = vmul.f32 %v1670, %v1700
        %v1806 = vmul.f32 %v1671, %v1700
        %v1807 = vmul.f32 %v1672, %v1700
        %v1808 = vmul.f32 %v1673, %v1700
        %v1809 = vmul.f32 %v1674, %v1700
        %v1810 = vmul.f32 %v1675, %v1700
        %v1811 = vmul.f32 %v1676, %v1700
        %v1812 = vmul.f32 %v1677, %v1700
        %v1813 = vmul.f32 %v1678, %v1700
        %v1814 = vmul.f32 %v1679, %v1700
        %v1815 = vmul.f32 %v1680, %v1700
        %v1816 = vmul.f32 %v1681, %v1700
        %v1817 = vmul.f32 %v1682, %v1700
        %v1818 = vmul.f32 %v1683, %v1700
        %v1819 = vmul.f32 %v1684, %v1700
        %v1820 = vmul.f32 %v1685, %v1700
        %v1821 = vmul.f32 %v1686, %v1700
        %v1822 = vmul.f32 %v1687, %v1700
        %v1823 = vmul.f32 %v1688, %v1700
        %v1824 = vmul.f32 %v1689, %v1700
        %v1825 = vmul.f32 %v1690, %v1700
        %v1826 = vmul.f32 %v1691, %v1700
        %v1827 = vmul.f32 %v1692, %v1700
        %v1828 = vmul.f32 %v1693, %v1700
        %v1829 = vmul.f32 %v1694, %v1700
        %1830 = vadd.xlane.f32.xlu0 %v1702
        %v1831 = vpop.xlane.xlu0 %1830
        %1832 = vadd.xlane.f32.xlu0 %v1703
        %v1833 = vpop.xlane.xlu0 %1832
        %1834 = vadd.xlane.f32.xlu0 %v1704
        %v1835 = vpop.xlane.xlu0 %1834
        %1836 = vadd.xlane.f32.xlu0 %v1705
        %v1837 = vpop.xlane.xlu0 %1836
        %1838 = vadd.xlane.f32.xlu0 %v1706
        %v1839 = vpop.xlane.xlu0 %1838
        %1840 = vadd.xlane.f32.xlu0 %v1707
        %v1841 = vpop.xlane.xlu0 %1840
        %1842 = vadd.xlane.f32.xlu0 %v1708
        %v1843 = vpop.xlane.xlu0 %1842
        %1844 = vadd.xlane.f32.xlu0 %v1709
        %v1845 = vpop.xlane.xlu0 %1844
        %1846 = vadd.xlane.f32.xlu0 %v1710
        %v1847 = vpop.xlane.xlu0 %1846
        %1848 = vadd.xlane.f32.xlu0 %v1711
        %v1849 = vpop.xlane.xlu0 %1848
        %1850 = vadd.xlane.f32.xlu0 %v1712
        %v1851 = vpop.xlane.xlu0 %1850
        %1852 = vadd.xlane.f32.xlu0 %v1713
        %v1853 = vpop.xlane.xlu0 %1852
        %1854 = vadd.xlane.f32.xlu0 %v1714
        %v1855 = vpop.xlane.xlu0 %1854
        %1856 = vadd.xlane.f32.xlu0 %v1715
        %v1857 = vpop.xlane.xlu0 %1856
        %1858 = vadd.xlane.f32.xlu0 %v1716
        %v1859 = vpop.xlane.xlu0 %1858
        %1860 = vadd.xlane.f32.xlu0 %v1717
        %v1861 = vpop.xlane.xlu0 %1860
        %1862 = vadd.xlane.f32.xlu0 %v1718
        %v1863 = vpop.xlane.xlu0 %1862
        %1864 = vadd.xlane.f32.xlu0 %v1719
        %v1865 = vpop.xlane.xlu0 %1864
        %1866 = vadd.xlane.f32.xlu0 %v1720
        %v1867 = vpop.xlane.xlu0 %1866
        %1868 = vadd.xlane.f32.xlu0 %v1721
        %v1869 = vpop.xlane.xlu0 %1868
        %1870 = vadd.xlane.f32.xlu0 %v1722
        %v1871 = vpop.xlane.xlu0 %1870
        %1872 = vadd.xlane.f32.xlu0 %v1723
        %v1873 = vpop.xlane.xlu0 %1872
        %1874 = vadd.xlane.f32.xlu0 %v1724
        %v1875 = vpop.xlane.xlu0 %1874
        %1876 = vadd.xlane.f32.xlu0 %v1725
        %v1877 = vpop.xlane.xlu0 %1876
        %1878 = vadd.xlane.f32.xlu0 %v1726
        %v1879 = vpop.xlane.xlu0 %1878
        %1880 = vadd.xlane.f32.xlu0 %v1727
        %v1881 = vpop.xlane.xlu0 %1880
        %1882 = vadd.xlane.f32.xlu0 %v1728
        %v1883 = vpop.xlane.xlu0 %1882
        %1884 = vadd.xlane.f32.xlu0 %v1729
        %v1885 = vpop.xlane.xlu0 %1884
        %1886 = vadd.xlane.f32.xlu0 %v1730
        %v1887 = vpop.xlane.xlu0 %1886
        %1888 = vadd.xlane.f32.xlu0 %v1731
        %v1889 = vpop.xlane.xlu0 %1888
        %1890 = vadd.xlane.f32.xlu0 %v1732
        %v1891 = vpop.xlane.xlu0 %1890
        %1892 = vadd.xlane.f32.xlu0 %v1733
        %v1893 = vpop.xlane.xlu0 %1892
        %1894 = vadd.xlane.f32.xlu0 %v1734
        %v1895 = vpop.xlane.xlu0 %1894
        %1896 = vadd.xlane.f32.xlu0 %v1735
        %v1897 = vpop.xlane.xlu0 %1896
        %1898 = vadd.xlane.f32.xlu0 %v1736
        %v1899 = vpop.xlane.xlu0 %1898
        %1900 = vadd.xlane.f32.xlu0 %v1737
        %v1901 = vpop.xlane.xlu0 %1900
        %1902 = vadd.xlane.f32.xlu0 %v1738
        %v1903 = vpop.xlane.xlu0 %1902
        %1904 = vadd.xlane.f32.xlu0 %v1739
        %v1905 = vpop.xlane.xlu0 %1904
        %1906 = vadd.xlane.f32.xlu0 %v1740
        %v1907 = vpop.xlane.xlu0 %1906
        %1908 = vadd.xlane.f32.xlu0 %v1741
        %v1909 = vpop.xlane.xlu0 %1908
        %1910 = vadd.xlane.f32.xlu0 %v1742
        %v1911 = vpop.xlane.xlu0 %1910
        %1912 = vadd.xlane.f32.xlu0 %v1743
        %v1913 = vpop.xlane.xlu0 %1912
        %1914 = vadd.xlane.f32.xlu0 %v1744
        %v1915 = vpop.xlane.xlu0 %1914
        %1916 = vadd.xlane.f32.xlu0 %v1745
        %v1917 = vpop.xlane.xlu0 %1916
        %1918 = vadd.xlane.f32.xlu0 %v1746
        %v1919 = vpop.xlane.xlu0 %1918
        %1920 = vadd.xlane.f32.xlu0 %v1747
        %v1921 = vpop.xlane.xlu0 %1920
        %1922 = vadd.xlane.f32.xlu0 %v1748
        %v1923 = vpop.xlane.xlu0 %1922
        %1924 = vadd.xlane.f32.xlu0 %v1749
        %v1925 = vpop.xlane.xlu0 %1924
        %1926 = vadd.xlane.f32.xlu0 %v1750
        %v1927 = vpop.xlane.xlu0 %1926
        %1928 = vadd.xlane.f32.xlu0 %v1751
        %v1929 = vpop.xlane.xlu0 %1928
        %1930 = vadd.xlane.f32.xlu0 %v1752
        %v1931 = vpop.xlane.xlu0 %1930
        %1932 = vadd.xlane.f32.xlu0 %v1753
        %v1933 = vpop.xlane.xlu0 %1932
        %1934 = vadd.xlane.f32.xlu0 %v1754
        %v1935 = vpop.xlane.xlu0 %1934
        %1936 = vadd.xlane.f32.xlu0 %v1755
        %v1937 = vpop.xlane.xlu0 %1936
        %1938 = vadd.xlane.f32.xlu0 %v1756
        %v1939 = vpop.xlane.xlu0 %1938
        %1940 = vadd.xlane.f32.xlu0 %v1757
        %v1941 = vpop.xlane.xlu0 %1940
        %1942 = vadd.xlane.f32.xlu0 %v1758
        %v1943 = vpop.xlane.xlu0 %1942
        %1944 = vadd.xlane.f32.xlu0 %v1759
        %v1945 = vpop.xlane.xlu0 %1944
        %1946 = vadd.xlane.f32.xlu0 %v1760
        %v1947 = vpop.xlane.xlu0 %1946
        %1948 = vadd.xlane.f32.xlu0 %v1761
        %v1949 = vpop.xlane.xlu0 %1948
        %1950 = vadd.xlane.f32.xlu0 %v1762
        %v1951 = vpop.xlane.xlu0 %1950
        %1952 = vadd.xlane.f32.xlu0 %v1763
        %v1953 = vpop.xlane.xlu0 %1952
        %1954 = vadd.xlane.f32.xlu0 %v1764
        %v1955 = vpop.xlane.xlu0 %1954
        %1956 = vadd.xlane.f32.xlu0 %v1765
        %v1957 = vpop.xlane.xlu0 %1956
        %1958 = vadd.xlane.f32.xlu0 %v1766
        %v1959 = vpop.xlane.xlu0 %1958
        %1960 = vadd.xlane.f32.xlu0 %v1767
        %v1961 = vpop.xlane.xlu0 %1960
        %1962 = vadd.xlane.f32.xlu0 %v1768
        %v1963 = vpop.xlane.xlu0 %1962
        %1964 = vadd.xlane.f32.xlu0 %v1769
        %v1965 = vpop.xlane.xlu0 %1964
        %1966 = vadd.xlane.f32.xlu0 %v1770
        %v1967 = vpop.xlane.xlu0 %1966
        %1968 = vadd.xlane.f32.xlu0 %v1771
        %v1969 = vpop.xlane.xlu0 %1968
        %1970 = vadd.xlane.f32.xlu0 %v1772
        %v1971 = vpop.xlane.xlu0 %1970
        %1972 = vadd.xlane.f32.xlu0 %v1773
        %v1973 = vpop.xlane.xlu0 %1972
        %1974 = vadd.xlane.f32.xlu0 %v1774
        %v1975 = vpop.xlane.xlu0 %1974
        %1976 = vadd.xlane.f32.xlu0 %v1775
        %v1977 = vpop.xlane.xlu0 %1976
        %1978 = vadd.xlane.f32.xlu0 %v1776
        %v1979 = vpop.xlane.xlu0 %1978
        %1980 = vadd.xlane.f32.xlu0 %v1777
        %v1981 = vpop.xlane.xlu0 %1980
        %1982 = vadd.xlane.f32.xlu0 %v1778
        %v1983 = vpop.xlane.xlu0 %1982
        %1984 = vadd.xlane.f32.xlu0 %v1779
        %v1985 = vpop.xlane.xlu0 %1984
        %1986 = vadd.xlane.f32.xlu0 %v1780
        %v1987 = vpop.xlane.xlu0 %1986
        %1988 = vadd.xlane.f32.xlu0 %v1781
        %v1989 = vpop.xlane.xlu0 %1988
        %1990 = vadd.xlane.f32.xlu0 %v1782
        %v1991 = vpop.xlane.xlu0 %1990
        %1992 = vadd.xlane.f32.xlu0 %v1783
        %v1993 = vpop.xlane.xlu0 %1992
        %1994 = vadd.xlane.f32.xlu0 %v1784
        %v1995 = vpop.xlane.xlu0 %1994
        %1996 = vadd.xlane.f32.xlu0 %v1785
        %v1997 = vpop.xlane.xlu0 %1996
        %1998 = vadd.xlane.f32.xlu0 %v1786
        %v1999 = vpop.xlane.xlu0 %1998
        %2000 = vadd.xlane.f32.xlu0 %v1787
        %v2001 = vpop.xlane.xlu0 %2000
        %2002 = vadd.xlane.f32.xlu0 %v1788
        %v2003 = vpop.xlane.xlu0 %2002
        %2004 = vadd.xlane.f32.xlu0 %v1789
        %v2005 = vpop.xlane.xlu0 %2004
        %2006 = vadd.xlane.f32.xlu0 %v1790
        %v2007 = vpop.xlane.xlu0 %2006
        %2008 = vadd.xlane.f32.xlu0 %v1791
        %v2009 = vpop.xlane.xlu0 %2008
        %2010 = vadd.xlane.f32.xlu0 %v1792
        %v2011 = vpop.xlane.xlu0 %2010
        %2012 = vadd.xlane.f32.xlu0 %v1793
        %v2013 = vpop.xlane.xlu0 %2012
        %2014 = vadd.xlane.f32.xlu0 %v1794
        %v2015 = vpop.xlane.xlu0 %2014
        %2016 = vadd.xlane.f32.xlu0 %v1795
        %v2017 = vpop.xlane.xlu0 %2016
        %2018 = vadd.xlane.f32.xlu0 %v1796
        %v2019 = vpop.xlane.xlu0 %2018
        %2020 = vadd.xlane.f32.xlu0 %v1797
        %v2021 = vpop.xlane.xlu0 %2020
        %2022 = vadd.xlane.f32.xlu0 %v1798
        %v2023 = vpop.xlane.xlu0 %2022
        %2024 = vadd.xlane.f32.xlu0 %v1799
        %v2025 = vpop.xlane.xlu0 %2024
        %2026 = vadd.xlane.f32.xlu0 %v1800
        %v2027 = vpop.xlane.xlu0 %2026
        %2028 = vadd.xlane.f32.xlu0 %v1801
        %v2029 = vpop.xlane.xlu0 %2028
        %2030 = vadd.xlane.f32.xlu0 %v1802
        %v2031 = vpop.xlane.xlu0 %2030
        %2032 = vadd.xlane.f32.xlu0 %v1803
        %v2033 = vpop.xlane.xlu0 %2032
        %2034 = vadd.xlane.f32.xlu0 %v1804
        %v2035 = vpop.xlane.xlu0 %2034
        %2036 = vadd.xlane.f32.xlu0 %v1805
        %v2037 = vpop.xlane.xlu0 %2036
        %2038 = vadd.xlane.f32.xlu0 %v1806
        %v2039 = vpop.xlane.xlu0 %2038
        %2040 = vadd.xlane.f32.xlu0 %v1807
        %v2041 = vpop.xlane.xlu0 %2040
        %2042 = vadd.xlane.f32.xlu0 %v1808
        %v2043 = vpop.xlane.xlu0 %2042
        %2044 = vadd.xlane.f32.xlu0 %v1809
        %v2045 = vpop.xlane.xlu0 %2044
        %2046 = vadd.xlane.f32.xlu0 %v1810
        %v2047 = vpop.xlane.xlu0 %2046
        %2048 = vadd.xlane.f32.xlu0 %v1811
        %v2049 = vpop.xlane.xlu0 %2048
        %2050 = vadd.xlane.f32.xlu0 %v1812
        %v2051 = vpop.xlane.xlu0 %2050
        %2052 = vadd.xlane.f32.xlu0 %v1813
        %v2053 = vpop.xlane.xlu0 %2052
        %2054 = vadd.xlane.f32.xlu0 %v1814
        %v2055 = vpop.xlane.xlu0 %2054
        %2056 = vadd.xlane.f32.xlu0 %v1815
        %v2057 = vpop.xlane.xlu0 %2056
        %2058 = vadd.xlane.f32.xlu0 %v1816
        %v2059 = vpop.xlane.xlu0 %2058
        %2060 = vadd.xlane.f32.xlu0 %v1817
        %v2061 = vpop.xlane.xlu0 %2060
        %2062 = vadd.xlane.f32.xlu0 %v1818
        %v2063 = vpop.xlane.xlu0 %2062
        %2064 = vadd.xlane.f32.xlu0 %v1819
        %v2065 = vpop.xlane.xlu0 %2064
        %2066 = vadd.xlane.f32.xlu0 %v1820
        %v2067 = vpop.xlane.xlu0 %2066
        %2068 = vadd.xlane.f32.xlu0 %v1821
        %v2069 = vpop.xlane.xlu0 %2068
        %2070 = vadd.xlane.f32.xlu0 %v1822
        %v2071 = vpop.xlane.xlu0 %2070
        %2072 = vadd.xlane.f32.xlu0 %v1823
        %v2073 = vpop.xlane.xlu0 %2072
        %2074 = vadd.xlane.f32.xlu0 %v1824
        %v2075 = vpop.xlane.xlu0 %2074
        %2076 = vadd.xlane.f32.xlu0 %v1825
        %v2077 = vpop.xlane.xlu0 %2076
        %2078 = vadd.xlane.f32.xlu0 %v1826
        %v2079 = vpop.xlane.xlu0 %2078
        %2080 = vadd.xlane.f32.xlu0 %v1827
        %v2081 = vpop.xlane.xlu0 %2080
        %2082 = vadd.xlane.f32.xlu0 %v1828
        %v2083 = vpop.xlane.xlu0 %2082
        %2084 = vadd.xlane.f32.xlu0 %v1829
        %v2085 = vpop.xlane.xlu0 %2084
        %v2214 = vlaneseq
        %v2215 = vand.u32 %v2214, 127
        %v2216 = vlaneseq
        %v2217 = vshrl.u32 %v2216, 7
        %v2218 = vsub.s32 %v2215, %v2217
        %v2219 = vrot.slane %v1831, %v2218
        %v2220 = vadd.s32 %v2215, 4294967288
        %v2221 = vlaneseq
        %v2222 = vshrl.u32 %v2221, 7
        %v2223 = vsub.s32 %v2220, %v2222
        %v2224 = vrot.slane %v1833, %v2223
        %vm2225 = vcmask 130112
        %v2226 = vsel %vm2225, %v2224, %v2219
        %v2227 = vadd.s32 %v2215, 4294967280
        %v2228 = vlaneseq
        %v2229 = vshrl.u32 %v2228, 7
        %v2230 = vsub.s32 %v2227, %v2229
        %v2231 = vrot.slane %v1835, %v2230
        %vm2232 = vcmask 195712
        %v2233 = vsel %vm2232, %v2231, %v2226
        %v2234 = vadd.s32 %v2215, 4294967272
        %v2235 = vlaneseq
        %v2236 = vshrl.u32 %v2235, 7
        %v2237 = vsub.s32 %v2234, %v2236
        %v2238 = vrot.slane %v1837, %v2237
        %vm2239 = vcmask 261312
        %v2240 = vsel %vm2239, %v2238, %v2233
        %v2241 = vadd.s32 %v2215, 4294967264
        %v2242 = vlaneseq
        %v2243 = vshrl.u32 %v2242, 7
        %v2244 = vsub.s32 %v2241, %v2243
        %v2245 = vrot.slane %v1839, %v2244
        %vm2246 = vcmask 326912
        %v2247 = vsel %vm2246, %v2245, %v2240
        %v2248 = vadd.s32 %v2215, 4294967256
        %v2249 = vlaneseq
        %v2250 = vshrl.u32 %v2249, 7
        %v2251 = vsub.s32 %v2248, %v2250
        %v2252 = vrot.slane %v1841, %v2251
        %vm2253 = vcmask 392512
        %v2254 = vsel %vm2253, %v2252, %v2247
        %v2255 = vadd.s32 %v2215, 4294967248
        %v2256 = vlaneseq
        %v2257 = vshrl.u32 %v2256, 7
        %v2258 = vsub.s32 %v2255, %v2257
        %v2259 = vrot.slane %v1843, %v2258
        %vm2260 = vcmask 458112
        %v2261 = vsel %vm2260, %v2259, %v2254
        %v2262 = vadd.s32 %v2215, 4294967240
        %v2263 = vlaneseq
        %v2264 = vshrl.u32 %v2263, 7
        %v2265 = vsub.s32 %v2262, %v2264
        %v2266 = vrot.slane %v1845, %v2265
        %vm2267 = vcmask 523712
        %v2268 = vsel %vm2267, %v2266, %v2261
        %v2269 = vadd.s32 %v2215, 4294967232
        %v2270 = vlaneseq
        %v2271 = vshrl.u32 %v2270, 7
        %v2272 = vsub.s32 %v2269, %v2271
        %v2273 = vrot.slane %v1847, %v2272
        %vm2274 = vcmask 589312
        %v2275 = vsel %vm2274, %v2273, %v2268
        %v2276 = vadd.s32 %v2215, 4294967224
        %v2277 = vlaneseq
        %v2278 = vshrl.u32 %v2277, 7
        %v2279 = vsub.s32 %v2276, %v2278
        %v2280 = vrot.slane %v1849, %v2279
        %vm2281 = vcmask 654912
        %v2282 = vsel %vm2281, %v2280, %v2275
        %v2283 = vadd.s32 %v2215, 4294967216
        %v2284 = vlaneseq
        %v2285 = vshrl.u32 %v2284, 7
        %v2286 = vsub.s32 %v2283, %v2285
        %v2287 = vrot.slane %v1851, %v2286
        %vm2288 = vcmask 720512
        %v2289 = vsel %vm2288, %v2287, %v2282
        %v2290 = vadd.s32 %v2215, 4294967208
        %v2291 = vlaneseq
        %v2292 = vshrl.u32 %v2291, 7
        %v2293 = vsub.s32 %v2290, %v2292
        %v2294 = vrot.slane %v1853, %v2293
        %vm2295 = vcmask 786112
        %v2296 = vsel %vm2295, %v2294, %v2289
        %v2297 = vadd.s32 %v2215, 4294967200
        %v2298 = vlaneseq
        %v2299 = vshrl.u32 %v2298, 7
        %v2300 = vsub.s32 %v2297, %v2299
        %v2301 = vrot.slane %v1855, %v2300
        %vm2302 = vcmask 851712
        %v2303 = vsel %vm2302, %v2301, %v2296
        %v2304 = vadd.s32 %v2215, 4294967192
        %v2305 = vlaneseq
        %v2306 = vshrl.u32 %v2305, 7
        %v2307 = vsub.s32 %v2304, %v2306
        %v2308 = vrot.slane %v1857, %v2307
        %vm2309 = vcmask 917312
        %v2310 = vsel %vm2309, %v2308, %v2303
        %v2311 = vadd.s32 %v2215, 4294967184
        %v2312 = vlaneseq
        %v2313 = vshrl.u32 %v2312, 7
        %v2314 = vsub.s32 %v2311, %v2313
        %v2315 = vrot.slane %v1859, %v2314
        %vm2316 = vcmask 982912
        %v2317 = vsel %vm2316, %v2315, %v2310
        %v2318 = vadd.s32 %v2215, 4294967176
        %v2319 = vlaneseq
        %v2320 = vshrl.u32 %v2319, 7
        %v2321 = vsub.s32 %v2318, %v2320
        %v2322 = vrot.slane %v1861, %v2321
        %vm2323 = vcmask 1048512
        %v2324 = vsel %vm2323, %v2322, %v2317
        %v2325 = vlaneseq
        %v2326 = vshrl.u32 %v2325, 7
        %v2327 = vsub.s32 %v2215, %v2326
        %v2328 = vrot.slane %v1863, %v2327
        %v2329 = vlaneseq
        %v2330 = vshrl.u32 %v2329, 7
        %v2331 = vsub.s32 %v2220, %v2330
        %v2332 = vrot.slane %v1865, %v2331
        %v2333 = vsel %vm2225, %v2332, %v2328
        %v2334 = vlaneseq
        %v2335 = vshrl.u32 %v2334, 7
        %v2336 = vsub.s32 %v2227, %v2335
        %v2337 = vrot.slane %v1867, %v2336
        %v2338 = vsel %vm2232, %v2337, %v2333
        %v2339 = vlaneseq
        %v2340 = vshrl.u32 %v2339, 7
        %v2341 = vsub.s32 %v2234, %v2340
        %v2342 = vrot.slane %v1869, %v2341
        %v2343 = vsel %vm2239, %v2342, %v2338
        %v2344 = vlaneseq
        %v2345 = vshrl.u32 %v2344, 7
        %v2346 = vsub.s32 %v2241, %v2345
        %v2347 = vrot.slane %v1871, %v2346
        %v2348 = vsel %vm2246, %v2347, %v2343
        %v2349 = vlaneseq
        %v2350 = vshrl.u32 %v2349, 7
        %v2351 = vsub.s32 %v2248, %v2350
        %v2352 = vrot.slane %v1873, %v2351
        %v2353 = vsel %vm2253, %v2352, %v2348
        %v2354 = vlaneseq
        %v2355 = vshrl.u32 %v2354, 7
        %v2356 = vsub.s32 %v2255, %v2355
        %v2357 = vrot.slane %v1875, %v2356
        %v2358 = vsel %vm2260, %v2357, %v2353
        %v2359 = vlaneseq
        %v2360 = vshrl.u32 %v2359, 7
        %v2361 = vsub.s32 %v2262, %v2360
        %v2362 = vrot.slane %v1877, %v2361
        %v2363 = vsel %vm2267, %v2362, %v2358
        %v2364 = vlaneseq
        %v2365 = vshrl.u32 %v2364, 7
        %v2366 = vsub.s32 %v2269, %v2365
        %v2367 = vrot.slane %v1879, %v2366
        %v2368 = vsel %vm2274, %v2367, %v2363
        %v2369 = vlaneseq
        %v2370 = vshrl.u32 %v2369, 7
        %v2371 = vsub.s32 %v2276, %v2370
        %v2372 = vrot.slane %v1881, %v2371
        %v2373 = vsel %vm2281, %v2372, %v2368
        %v2374 = vlaneseq
        %v2375 = vshrl.u32 %v2374, 7
        %v2376 = vsub.s32 %v2283, %v2375
        %v2377 = vrot.slane %v1883, %v2376
        %v2378 = vsel %vm2288, %v2377, %v2373
        %v2379 = vlaneseq
        %v2380 = vshrl.u32 %v2379, 7
        %v2381 = vsub.s32 %v2290, %v2380
        %v2382 = vrot.slane %v1885, %v2381
        %v2383 = vsel %vm2295, %v2382, %v2378
        %v2384 = vlaneseq
        %v2385 = vshrl.u32 %v2384, 7
        %v2386 = vsub.s32 %v2297, %v2385
        %v2387 = vrot.slane %v1887, %v2386
        %v2388 = vsel %vm2302, %v2387, %v2383
        %v2389 = vlaneseq
        %v2390 = vshrl.u32 %v2389, 7
        %v2391 = vsub.s32 %v2304, %v2390
        %v2392 = vrot.slane %v1889, %v2391
        %v2393 = vsel %vm2309, %v2392, %v2388
        %v2394 = vlaneseq
        %v2395 = vshrl.u32 %v2394, 7
        %v2396 = vsub.s32 %v2311, %v2395
        %v2397 = vrot.slane %v1891, %v2396
        %v2398 = vsel %vm2316, %v2397, %v2393
        %v2399 = vlaneseq
        %v2400 = vshrl.u32 %v2399, 7
        %v2401 = vsub.s32 %v2318, %v2400
        %v2402 = vrot.slane %v1893, %v2401
        %v2403 = vsel %vm2323, %v2402, %v2398
        %v2404 = vlaneseq
        %v2405 = vshrl.u32 %v2404, 7
        %v2406 = vsub.s32 %v2215, %v2405
        %v2407 = vrot.slane %v1895, %v2406
        %v2408 = vlaneseq
        %v2409 = vshrl.u32 %v2408, 7
        %v2410 = vsub.s32 %v2220, %v2409
        %v2411 = vrot.slane %v1897, %v2410
        %v2412 = vsel %vm2225, %v2411, %v2407
        %v2413 = vlaneseq
        %v2414 = vshrl.u32 %v2413, 7
        %v2415 = vsub.s32 %v2227, %v2414
        %v2416 = vrot.slane %v1899, %v2415
        %v2417 = vsel %vm2232, %v2416, %v2412
        %v2418 = vlaneseq
        %v2419 = vshrl.u32 %v2418, 7
        %v2420 = vsub.s32 %v2234, %v2419
        %v2421 = vrot.slane %v1901, %v2420
        %v2422 = vsel %vm2239, %v2421, %v2417
        %v2423 = vlaneseq
        %v2424 = vshrl.u32 %v2423, 7
        %v2425 = vsub.s32 %v2241, %v2424
        %v2426 = vrot.slane %v1903, %v2425
        %v2427 = vsel %vm2246, %v2426, %v2422
        %v2428 = vlaneseq
        %v2429 = vshrl.u32 %v2428, 7
        %v2430 = vsub.s32 %v2248, %v2429
        %v2431 = vrot.slane %v1905, %v2430
        %v2432 = vsel %vm2253, %v2431, %v2427
        %v2433 = vlaneseq
        %v2434 = vshrl.u32 %v2433, 7
        %v2435 = vsub.s32 %v2255, %v2434
        %v2436 = vrot.slane %v1907, %v2435
        %v2437 = vsel %vm2260, %v2436, %v2432
        %v2438 = vlaneseq
        %v2439 = vshrl.u32 %v2438, 7
        %v2440 = vsub.s32 %v2262, %v2439
        %v2441 = vrot.slane %v1909, %v2440
        %v2442 = vsel %vm2267, %v2441, %v2437
        %v2443 = vlaneseq
        %v2444 = vshrl.u32 %v2443, 7
        %v2445 = vsub.s32 %v2269, %v2444
        %v2446 = vrot.slane %v1911, %v2445
        %v2447 = vsel %vm2274, %v2446, %v2442
        %v2448 = vlaneseq
        %v2449 = vshrl.u32 %v2448, 7
        %v2450 = vsub.s32 %v2276, %v2449
        %v2451 = vrot.slane %v1913, %v2450
        %v2452 = vsel %vm2281, %v2451, %v2447
        %v2453 = vlaneseq
        %v2454 = vshrl.u32 %v2453, 7
        %v2455 = vsub.s32 %v2283, %v2454
        %v2456 = vrot.slane %v1915, %v2455
        %v2457 = vsel %vm2288, %v2456, %v2452
        %v2458 = vlaneseq
        %v2459 = vshrl.u32 %v2458, 7
        %v2460 = vsub.s32 %v2290, %v2459
        %v2461 = vrot.slane %v1917, %v2460
        %v2462 = vsel %vm2295, %v2461, %v2457
        %v2463 = vlaneseq
        %v2464 = vshrl.u32 %v2463, 7
        %v2465 = vsub.s32 %v2297, %v2464
        %v2466 = vrot.slane %v1919, %v2465
        %v2467 = vsel %vm2302, %v2466, %v2462
        %v2468 = vlaneseq
        %v2469 = vshrl.u32 %v2468, 7
        %v2470 = vsub.s32 %v2304, %v2469
        %v2471 = vrot.slane %v1921, %v2470
        %v2472 = vsel %vm2309, %v2471, %v2467
        %v2473 = vlaneseq
        %v2474 = vshrl.u32 %v2473, 7
        %v2475 = vsub.s32 %v2311, %v2474
        %v2476 = vrot.slane %v1923, %v2475
        %v2477 = vsel %vm2316, %v2476, %v2472
        %v2478 = vlaneseq
        %v2479 = vshrl.u32 %v2478, 7
        %v2480 = vsub.s32 %v2318, %v2479
        %v2481 = vrot.slane %v1925, %v2480
        %v2482 = vsel %vm2323, %v2481, %v2477
        %v2483 = vlaneseq
        %v2484 = vshrl.u32 %v2483, 7
        %v2485 = vsub.s32 %v2215, %v2484
        %v2486 = vrot.slane %v1927, %v2485
        %v2487 = vlaneseq
        %v2488 = vshrl.u32 %v2487, 7
        %v2489 = vsub.s32 %v2220, %v2488
        %v2490 = vrot.slane %v1929, %v2489
        %v2491 = vsel %vm2225, %v2490, %v2486
        %v2492 = vlaneseq
        %v2493 = vshrl.u32 %v2492, 7
        %v2494 = vsub.s32 %v2227, %v2493
        %v2495 = vrot.slane %v1931, %v2494
        %v2496 = vsel %vm2232, %v2495, %v2491
        %v2497 = vlaneseq
        %v2498 = vshrl.u32 %v2497, 7
        %v2499 = vsub.s32 %v2234, %v2498
        %v2500 = vrot.slane %v1933, %v2499
        %v2501 = vsel %vm2239, %v2500, %v2496
        %v2502 = vlaneseq
        %v2503 = vshrl.u32 %v2502, 7
        %v2504 = vsub.s32 %v2241, %v2503
        %v2505 = vrot.slane %v1935, %v2504
        %v2506 = vsel %vm2246, %v2505, %v2501
        %v2507 = vlaneseq
        %v2508 = vshrl.u32 %v2507, 7
        %v2509 = vsub.s32 %v2248, %v2508
        %v2510 = vrot.slane %v1937, %v2509
        %v2511 = vsel %vm2253, %v2510, %v2506
        %v2512 = vlaneseq
        %v2513 = vshrl.u32 %v2512, 7
        %v2514 = vsub.s32 %v2255, %v2513
        %v2515 = vrot.slane %v1939, %v2514
        %v2516 = vsel %vm2260, %v2515, %v2511
        %v2517 = vlaneseq
        %v2518 = vshrl.u32 %v2517, 7
        %v2519 = vsub.s32 %v2262, %v2518
        %v2520 = vrot.slane %v1941, %v2519
        %v2521 = vsel %vm2267, %v2520, %v2516
        %v2522 = vlaneseq
        %v2523 = vshrl.u32 %v2522, 7
        %v2524 = vsub.s32 %v2269, %v2523
        %v2525 = vrot.slane %v1943, %v2524
        %v2526 = vsel %vm2274, %v2525, %v2521
        %v2527 = vlaneseq
        %v2528 = vshrl.u32 %v2527, 7
        %v2529 = vsub.s32 %v2276, %v2528
        %v2530 = vrot.slane %v1945, %v2529
        %v2531 = vsel %vm2281, %v2530, %v2526
        %v2532 = vlaneseq
        %v2533 = vshrl.u32 %v2532, 7
        %v2534 = vsub.s32 %v2283, %v2533
        %v2535 = vrot.slane %v1947, %v2534
        %v2536 = vsel %vm2288, %v2535, %v2531
        %v2537 = vlaneseq
        %v2538 = vshrl.u32 %v2537, 7
        %v2539 = vsub.s32 %v2290, %v2538
        %v2540 = vrot.slane %v1949, %v2539
        %v2541 = vsel %vm2295, %v2540, %v2536
        %v2542 = vlaneseq
        %v2543 = vshrl.u32 %v2542, 7
        %v2544 = vsub.s32 %v2297, %v2543
        %v2545 = vrot.slane %v1951, %v2544
        %v2546 = vsel %vm2302, %v2545, %v2541
        %v2547 = vlaneseq
        %v2548 = vshrl.u32 %v2547, 7
        %v2549 = vsub.s32 %v2304, %v2548
        %v2550 = vrot.slane %v1953, %v2549
        %v2551 = vsel %vm2309, %v2550, %v2546
        %v2552 = vlaneseq
        %v2553 = vshrl.u32 %v2552, 7
        %v2554 = vsub.s32 %v2311, %v2553
        %v2555 = vrot.slane %v1955, %v2554
        %v2556 = vsel %vm2316, %v2555, %v2551
        %v2557 = vlaneseq
        %v2558 = vshrl.u32 %v2557, 7
        %v2559 = vsub.s32 %v2318, %v2558
        %v2560 = vrot.slane %v1957, %v2559
        %v2561 = vsel %vm2323, %v2560, %v2556
        %v2562 = vlaneseq
        %v2563 = vshrl.u32 %v2562, 7
        %v2564 = vsub.s32 %v2215, %v2563
        %v2565 = vrot.slane %v1959, %v2564
        %v2566 = vlaneseq
        %v2567 = vshrl.u32 %v2566, 7
        %v2568 = vsub.s32 %v2220, %v2567
        %v2569 = vrot.slane %v1961, %v2568
        %v2570 = vsel %vm2225, %v2569, %v2565
        %v2571 = vlaneseq
        %v2572 = vshrl.u32 %v2571, 7
        %v2573 = vsub.s32 %v2227, %v2572
        %v2574 = vrot.slane %v1963, %v2573
        %v2575 = vsel %vm2232, %v2574, %v2570
        %v2576 = vlaneseq
        %v2577 = vshrl.u32 %v2576, 7
        %v2578 = vsub.s32 %v2234, %v2577
        %v2579 = vrot.slane %v1965, %v2578
        %v2580 = vsel %vm2239, %v2579, %v2575
        %v2581 = vlaneseq
        %v2582 = vshrl.u32 %v2581, 7
        %v2583 = vsub.s32 %v2241, %v2582
        %v2584 = vrot.slane %v1967, %v2583
        %v2585 = vsel %vm2246, %v2584, %v2580
        %v2586 = vlaneseq
        %v2587 = vshrl.u32 %v2586, 7
        %v2588 = vsub.s32 %v2248, %v2587
        %v2589 = vrot.slane %v1969, %v2588
        %v2590 = vsel %vm2253, %v2589, %v2585
        %v2591 = vlaneseq
        %v2592 = vshrl.u32 %v2591, 7
        %v2593 = vsub.s32 %v2255, %v2592
        %v2594 = vrot.slane %v1971, %v2593
        %v2595 = vsel %vm2260, %v2594, %v2590
        %v2596 = vlaneseq
        %v2597 = vshrl.u32 %v2596, 7
        %v2598 = vsub.s32 %v2262, %v2597
        %v2599 = vrot.slane %v1973, %v2598
        %v2600 = vsel %vm2267, %v2599, %v2595
        %v2601 = vlaneseq
        %v2602 = vshrl.u32 %v2601, 7
        %v2603 = vsub.s32 %v2269, %v2602
        %v2604 = vrot.slane %v1975, %v2603
        %v2605 = vsel %vm2274, %v2604, %v2600
        %v2606 = vlaneseq
        %v2607 = vshrl.u32 %v2606, 7
        %v2608 = vsub.s32 %v2276, %v2607
        %v2609 = vrot.slane %v1977, %v2608
        %v2610 = vsel %vm2281, %v2609, %v2605
        %v2611 = vlaneseq
        %v2612 = vshrl.u32 %v2611, 7
        %v2613 = vsub.s32 %v2283, %v2612
        %v2614 = vrot.slane %v1979, %v2613
        %v2615 = vsel %vm2288, %v2614, %v2610
        %v2616 = vlaneseq
        %v2617 = vshrl.u32 %v2616, 7
        %v2618 = vsub.s32 %v2290, %v2617
        %v2619 = vrot.slane %v1981, %v2618
        %v2620 = vsel %vm2295, %v2619, %v2615
        %v2621 = vlaneseq
        %v2622 = vshrl.u32 %v2621, 7
        %v2623 = vsub.s32 %v2297, %v2622
        %v2624 = vrot.slane %v1983, %v2623
        %v2625 = vsel %vm2302, %v2624, %v2620
        %v2626 = vlaneseq
        %v2627 = vshrl.u32 %v2626, 7
        %v2628 = vsub.s32 %v2304, %v2627
        %v2629 = vrot.slane %v1985, %v2628
        %v2630 = vsel %vm2309, %v2629, %v2625
        %v2631 = vlaneseq
        %v2632 = vshrl.u32 %v2631, 7
        %v2633 = vsub.s32 %v2311, %v2632
        %v2634 = vrot.slane %v1987, %v2633
        %v2635 = vsel %vm2316, %v2634, %v2630
        %v2636 = vlaneseq
        %v2637 = vshrl.u32 %v2636, 7
        %v2638 = vsub.s32 %v2318, %v2637
        %v2639 = vrot.slane %v1989, %v2638
        %v2640 = vsel %vm2323, %v2639, %v2635
        %v2641 = vlaneseq
        %v2642 = vshrl.u32 %v2641, 7
        %v2643 = vsub.s32 %v2215, %v2642
        %v2644 = vrot.slane %v1991, %v2643
        %v2645 = vlaneseq
        %v2646 = vshrl.u32 %v2645, 7
        %v2647 = vsub.s32 %v2220, %v2646
        %v2648 = vrot.slane %v1993, %v2647
        %v2649 = vsel %vm2225, %v2648, %v2644
        %v2650 = vlaneseq
        %v2651 = vshrl.u32 %v2650, 7
        %v2652 = vsub.s32 %v2227, %v2651
        %v2653 = vrot.slane %v1995, %v2652
        %v2654 = vsel %vm2232, %v2653, %v2649
        %v2655 = vlaneseq
        %v2656 = vshrl.u32 %v2655, 7
        %v2657 = vsub.s32 %v2234, %v2656
        %v2658 = vrot.slane %v1997, %v2657
        %v2659 = vsel %vm2239, %v2658, %v2654
        %v2660 = vlaneseq
        %v2661 = vshrl.u32 %v2660, 7
        %v2662 = vsub.s32 %v2241, %v2661
        %v2663 = vrot.slane %v1999, %v2662
        %v2664 = vsel %vm2246, %v2663, %v2659
        %v2665 = vlaneseq
        %v2666 = vshrl.u32 %v2665, 7
        %v2667 = vsub.s32 %v2248, %v2666
        %v2668 = vrot.slane %v2001, %v2667
        %v2669 = vsel %vm2253, %v2668, %v2664
        %v2670 = vlaneseq
        %v2671 = vshrl.u32 %v2670, 7
        %v2672 = vsub.s32 %v2255, %v2671
        %v2673 = vrot.slane %v2003, %v2672
        %v2674 = vsel %vm2260, %v2673, %v2669
        %v2675 = vlaneseq
        %v2676 = vshrl.u32 %v2675, 7
        %v2677 = vsub.s32 %v2262, %v2676
        %v2678 = vrot.slane %v2005, %v2677
        %v2679 = vsel %vm2267, %v2678, %v2674
        %v2680 = vlaneseq
        %v2681 = vshrl.u32 %v2680, 7
        %v2682 = vsub.s32 %v2269, %v2681
        %v2683 = vrot.slane %v2007, %v2682
        %v2684 = vsel %vm2274, %v2683, %v2679
        %v2685 = vlaneseq
        %v2686 = vshrl.u32 %v2685, 7
        %v2687 = vsub.s32 %v2276, %v2686
        %v2688 = vrot.slane %v2009, %v2687
        %v2689 = vsel %vm2281, %v2688, %v2684
        %v2690 = vlaneseq
        %v2691 = vshrl.u32 %v2690, 7
        %v2692 = vsub.s32 %v2283, %v2691
        %v2693 = vrot.slane %v2011, %v2692
        %v2694 = vsel %vm2288, %v2693, %v2689
        %v2695 = vlaneseq
        %v2696 = vshrl.u32 %v2695, 7
        %v2697 = vsub.s32 %v2290, %v2696
        %v2698 = vrot.slane %v2013, %v2697
        %v2699 = vsel %vm2295, %v2698, %v2694
        %v2700 = vlaneseq
        %v2701 = vshrl.u32 %v2700, 7
        %v2702 = vsub.s32 %v2297, %v2701
        %v2703 = vrot.slane %v2015, %v2702
        %v2704 = vsel %vm2302, %v2703, %v2699
        %v2705 = vlaneseq
        %v2706 = vshrl.u32 %v2705, 7
        %v2707 = vsub.s32 %v2304, %v2706
        %v2708 = vrot.slane %v2017, %v2707
        %v2709 = vsel %vm2309, %v2708, %v2704
        %v2710 = vlaneseq
        %v2711 = vshrl.u32 %v2710, 7
        %v2712 = vsub.s32 %v2311, %v2711
        %v2713 = vrot.slane %v2019, %v2712
        %v2714 = vsel %vm2316, %v2713, %v2709
        %v2715 = vlaneseq
        %v2716 = vshrl.u32 %v2715, 7
        %v2717 = vsub.s32 %v2318, %v2716
        %v2718 = vrot.slane %v2021, %v2717
        %v2719 = vsel %vm2323, %v2718, %v2714
        %v2720 = vlaneseq
        %v2721 = vshrl.u32 %v2720, 7
        %v2722 = vsub.s32 %v2215, %v2721
        %v2723 = vrot.slane %v2023, %v2722
        %v2724 = vlaneseq
        %v2725 = vshrl.u32 %v2724, 7
        %v2726 = vsub.s32 %v2220, %v2725
        %v2727 = vrot.slane %v2025, %v2726
        %v2728 = vsel %vm2225, %v2727, %v2723
        %v2729 = vlaneseq
        %v2730 = vshrl.u32 %v2729, 7
        %v2731 = vsub.s32 %v2227, %v2730
        %v2732 = vrot.slane %v2027, %v2731
        %v2733 = vsel %vm2232, %v2732, %v2728
        %v2734 = vlaneseq
        %v2735 = vshrl.u32 %v2734, 7
        %v2736 = vsub.s32 %v2234, %v2735
        %v2737 = vrot.slane %v2029, %v2736
        %v2738 = vsel %vm2239, %v2737, %v2733
        %v2739 = vlaneseq
        %v2740 = vshrl.u32 %v2739, 7
        %v2741 = vsub.s32 %v2241, %v2740
        %v2742 = vrot.slane %v2031, %v2741
        %v2743 = vsel %vm2246, %v2742, %v2738
        %v2744 = vlaneseq
        %v2745 = vshrl.u32 %v2744, 7
        %v2746 = vsub.s32 %v2248, %v2745
        %v2747 = vrot.slane %v2033, %v2746
        %v2748 = vsel %vm2253, %v2747, %v2743
        %v2749 = vlaneseq
        %v2750 = vshrl.u32 %v2749, 7
        %v2751 = vsub.s32 %v2255, %v2750
        %v2752 = vrot.slane %v2035, %v2751
        %v2753 = vsel %vm2260, %v2752, %v2748
        %v2754 = vlaneseq
        %v2755 = vshrl.u32 %v2754, 7
        %v2756 = vsub.s32 %v2262, %v2755
        %v2757 = vrot.slane %v2037, %v2756
        %v2758 = vsel %vm2267, %v2757, %v2753
        %v2759 = vlaneseq
        %v2760 = vshrl.u32 %v2759, 7
        %v2761 = vsub.s32 %v2269, %v2760
        %v2762 = vrot.slane %v2039, %v2761
        %v2763 = vsel %vm2274, %v2762, %v2758
        %v2764 = vlaneseq
        %v2765 = vshrl.u32 %v2764, 7
        %v2766 = vsub.s32 %v2276, %v2765
        %v2767 = vrot.slane %v2041, %v2766
        %v2768 = vsel %vm2281, %v2767, %v2763
        %v2769 = vlaneseq
        %v2770 = vshrl.u32 %v2769, 7
        %v2771 = vsub.s32 %v2283, %v2770
        %v2772 = vrot.slane %v2043, %v2771
        %v2773 = vsel %vm2288, %v2772, %v2768
        %v2774 = vlaneseq
        %v2775 = vshrl.u32 %v2774, 7
        %v2776 = vsub.s32 %v2290, %v2775
        %v2777 = vrot.slane %v2045, %v2776
        %v2778 = vsel %vm2295, %v2777, %v2773
        %v2779 = vlaneseq
        %v2780 = vshrl.u32 %v2779, 7
        %v2781 = vsub.s32 %v2297, %v2780
        %v2782 = vrot.slane %v2047, %v2781
        %v2783 = vsel %vm2302, %v2782, %v2778
        %v2784 = vlaneseq
        %v2785 = vshrl.u32 %v2784, 7
        %v2786 = vsub.s32 %v2304, %v2785
        %v2787 = vrot.slane %v2049, %v2786
        %v2788 = vsel %vm2309, %v2787, %v2783
        %v2789 = vlaneseq
        %v2790 = vshrl.u32 %v2789, 7
        %v2791 = vsub.s32 %v2311, %v2790
        %v2792 = vrot.slane %v2051, %v2791
        %v2793 = vsel %vm2316, %v2792, %v2788
        %v2794 = vlaneseq
        %v2795 = vshrl.u32 %v2794, 7
        %v2796 = vsub.s32 %v2318, %v2795
        %v2797 = vrot.slane %v2053, %v2796
        %v2798 = vsel %vm2323, %v2797, %v2793
        %v2799 = vlaneseq
        %v2800 = vshrl.u32 %v2799, 7
        %v2801 = vsub.s32 %v2215, %v2800
        %v2802 = vrot.slane %v2055, %v2801
        %v2803 = vlaneseq
        %v2804 = vshrl.u32 %v2803, 7
        %v2805 = vsub.s32 %v2220, %v2804
        %v2806 = vrot.slane %v2057, %v2805
        %v2807 = vsel %vm2225, %v2806, %v2802
        %v2808 = vlaneseq
        %v2809 = vshrl.u32 %v2808, 7
        %v2810 = vsub.s32 %v2227, %v2809
        %v2811 = vrot.slane %v2059, %v2810
        %v2812 = vsel %vm2232, %v2811, %v2807
        %v2813 = vlaneseq
        %v2814 = vshrl.u32 %v2813, 7
        %v2815 = vsub.s32 %v2234, %v2814
        %v2816 = vrot.slane %v2061, %v2815
        %v2817 = vsel %vm2239, %v2816, %v2812
        %v2818 = vlaneseq
        %v2819 = vshrl.u32 %v2818, 7
        %v2820 = vsub.s32 %v2241, %v2819
        %v2821 = vrot.slane %v2063, %v2820
        %v2822 = vsel %vm2246, %v2821, %v2817
        %v2823 = vlaneseq
        %v2824 = vshrl.u32 %v2823, 7
        %v2825 = vsub.s32 %v2248, %v2824
        %v2826 = vrot.slane %v2065, %v2825
        %v2827 = vsel %vm2253, %v2826, %v2822
        %v2828 = vlaneseq
        %v2829 = vshrl.u32 %v2828, 7
        %v2830 = vsub.s32 %v2255, %v2829
        %v2831 = vrot.slane %v2067, %v2830
        %v2832 = vsel %vm2260, %v2831, %v2827
        %v2833 = vlaneseq
        %v2834 = vshrl.u32 %v2833, 7
        %v2835 = vsub.s32 %v2262, %v2834
        %v2836 = vrot.slane %v2069, %v2835
        %v2837 = vsel %vm2267, %v2836, %v2832
        %v2838 = vlaneseq
        %v2839 = vshrl.u32 %v2838, 7
        %v2840 = vsub.s32 %v2269, %v2839
        %v2841 = vrot.slane %v2071, %v2840
        %v2842 = vsel %vm2274, %v2841, %v2837
        %v2843 = vlaneseq
        %v2844 = vshrl.u32 %v2843, 7
        %v2845 = vsub.s32 %v2276, %v2844
        %v2846 = vrot.slane %v2073, %v2845
        %v2847 = vsel %vm2281, %v2846, %v2842
        %v2848 = vlaneseq
        %v2849 = vshrl.u32 %v2848, 7
        %v2850 = vsub.s32 %v2283, %v2849
        %v2851 = vrot.slane %v2075, %v2850
        %v2852 = vsel %vm2288, %v2851, %v2847
        %v2853 = vlaneseq
        %v2854 = vshrl.u32 %v2853, 7
        %v2855 = vsub.s32 %v2290, %v2854
        %v2856 = vrot.slane %v2077, %v2855
        %v2857 = vsel %vm2295, %v2856, %v2852
        %v2858 = vlaneseq
        %v2859 = vshrl.u32 %v2858, 7
        %v2860 = vsub.s32 %v2297, %v2859
        %v2861 = vrot.slane %v2079, %v2860
        %v2862 = vsel %vm2302, %v2861, %v2857
        %v2863 = vlaneseq
        %v2864 = vshrl.u32 %v2863, 7
        %v2865 = vsub.s32 %v2304, %v2864
        %v2866 = vrot.slane %v2081, %v2865
        %v2867 = vsel %vm2309, %v2866, %v2862
        %v2868 = vlaneseq
        %v2869 = vshrl.u32 %v2868, 7
        %v2870 = vsub.s32 %v2311, %v2869
        %v2871 = vrot.slane %v2083, %v2870
        %v2872 = vsel %vm2316, %v2871, %v2867
        %v2873 = vlaneseq
        %v2874 = vshrl.u32 %v2873, 7
        %v2875 = vsub.s32 %v2318, %v2874
        %v2876 = vrot.slane %v2085, %v2875
        %v2877 = vsel %vm2323, %v2876, %v2872
        %vm2878 = vcmask 1041409
        %v2879 = vsel %vm2878, %v2403, %v2324
        %vm2880 = vcmask 1042434
        %v2881 = vsel %vm2880, %v2482, %v2879
        %vm2882 = vcmask 1043459
        %v2883 = vsel %vm2882, %v2561, %v2881
        %vm2884 = vcmask 1044484
        %v2885 = vsel %vm2884, %v2640, %v2883
        %vm2886 = vcmask 1045509
        %v2887 = vsel %vm2886, %v2719, %v2885
        %vm2888 = vcmask 1046534
        %v2889 = vsel %vm2888, %v2798, %v2887
        %vm2890 = vcmask 1047559
        %v2891 = vsel %vm2890, %v2877, %v2889
        %2893 = vmax.xlane.f32.xlu0 %v2891
        %v2894 = vpop.xlane.xlu0 %2893
        %v2896 = vlaneseq
        %v2897 = vshrl.u32 %v2896, 7
        %v2898 = vsub.s32 0, %v2897
        %v2899 = vrot.slane %v2894, %v2898
        %v2900 = vlaneseq
        %v2901 = vshrl.u32 %v2900, 7
        %v2902 = vsub.s32 1, %v2901
        %v2903 = vrot.slane %v2894, %v2902
        %v2904 = vlaneseq
        %v2905 = vshrl.u32 %v2904, 7
        %v2906 = vsub.s32 2, %v2905
        %v2907 = vrot.slane %v2894, %v2906
        %v2908 = vlaneseq
        %v2909 = vshrl.u32 %v2908, 7
        %v2910 = vsub.s32 3, %v2909
        %v2911 = vrot.slane %v2894, %v2910
        %v2912 = vlaneseq
        %v2913 = vshrl.u32 %v2912, 7
        %v2914 = vsub.s32 4, %v2913
        %v2915 = vrot.slane %v2894, %v2914
        %v2916 = vlaneseq
        %v2917 = vshrl.u32 %v2916, 7
        %v2918 = vsub.s32 5, %v2917
        %v2919 = vrot.slane %v2894, %v2918
        %v2920 = vlaneseq
        %v2921 = vshrl.u32 %v2920, 7
        %v2922 = vsub.s32 6, %v2921
        %v2923 = vrot.slane %v2894, %v2922
        %v2924 = vlaneseq
        %v2925 = vshrl.u32 %v2924, 7
        %v2926 = vsub.s32 7, %v2925
        %v2927 = vrot.slane %v2894, %v2926
        %v2936 = vsub.f32 %v1831, %v2899
        %v2937 = vsub.f32 %v1833, %v2899
        %v2938 = vsub.f32 %v1835, %v2899
        %v2939 = vsub.f32 %v1837, %v2899
        %v2940 = vsub.f32 %v1839, %v2899
        %v2941 = vsub.f32 %v1841, %v2899
        %v2942 = vsub.f32 %v1843, %v2899
        %v2943 = vsub.f32 %v1845, %v2899
        %v2944 = vsub.f32 %v1847, %v2899
        %v2945 = vsub.f32 %v1849, %v2899
        %v2946 = vsub.f32 %v1851, %v2899
        %v2947 = vsub.f32 %v1853, %v2899
        %v2948 = vsub.f32 %v1855, %v2899
        %v2949 = vsub.f32 %v1857, %v2899
        %v2950 = vsub.f32 %v1859, %v2899
        %v2951 = vsub.f32 %v1861, %v2899
        %v2952 = vsub.f32 %v1863, %v2903
        %v2953 = vsub.f32 %v1865, %v2903
        %v2954 = vsub.f32 %v1867, %v2903
        %v2955 = vsub.f32 %v1869, %v2903
        %v2956 = vsub.f32 %v1871, %v2903
        %v2957 = vsub.f32 %v1873, %v2903
        %v2958 = vsub.f32 %v1875, %v2903
        %v2959 = vsub.f32 %v1877, %v2903
        %v2960 = vsub.f32 %v1879, %v2903
        %v2961 = vsub.f32 %v1881, %v2903
        %v2962 = vsub.f32 %v1883, %v2903
        %v2963 = vsub.f32 %v1885, %v2903
        %v2964 = vsub.f32 %v1887, %v2903
        %v2965 = vsub.f32 %v1889, %v2903
        %v2966 = vsub.f32 %v1891, %v2903
        %v2967 = vsub.f32 %v1893, %v2903
        %v2968 = vsub.f32 %v1895, %v2907
        %v2969 = vsub.f32 %v1897, %v2907
        %v2970 = vsub.f32 %v1899, %v2907
        %v2971 = vsub.f32 %v1901, %v2907
        %v2972 = vsub.f32 %v1903, %v2907
        %v2973 = vsub.f32 %v1905, %v2907
        %v2974 = vsub.f32 %v1907, %v2907
        %v2975 = vsub.f32 %v1909, %v2907
        %v2976 = vsub.f32 %v1911, %v2907
        %v2977 = vsub.f32 %v1913, %v2907
        %v2978 = vsub.f32 %v1915, %v2907
        %v2979 = vsub.f32 %v1917, %v2907
        %v2980 = vsub.f32 %v1919, %v2907
        %v2981 = vsub.f32 %v1921, %v2907
        %v2982 = vsub.f32 %v1923, %v2907
        %v2983 = vsub.f32 %v1925, %v2907
        %v2984 = vsub.f32 %v1927, %v2911
        %v2985 = vsub.f32 %v1929, %v2911
        %v2986 = vsub.f32 %v1931, %v2911
        %v2987 = vsub.f32 %v1933, %v2911
        %v2988 = vsub.f32 %v1935, %v2911
        %v2989 = vsub.f32 %v1937, %v2911
        %v2990 = vsub.f32 %v1939, %v2911
        %v2991 = vsub.f32 %v1941, %v2911
        %v2992 = vsub.f32 %v1943, %v2911
        %v2993 = vsub.f32 %v1945, %v2911
        %v2994 = vsub.f32 %v1947, %v2911
        %v2995 = vsub.f32 %v1949, %v2911
        %v2996 = vsub.f32 %v1951, %v2911
        %v2997 = vsub.f32 %v1953, %v2911
        %v2998 = vsub.f32 %v1955, %v2911
        %v2999 = vsub.f32 %v1957, %v2911
        %v3000 = vsub.f32 %v1959, %v2915
        %v3001 = vsub.f32 %v1961, %v2915
        %v3002 = vsub.f32 %v1963, %v2915
        %v3003 = vsub.f32 %v1965, %v2915
        %v3004 = vsub.f32 %v1967, %v2915
        %v3005 = vsub.f32 %v1969, %v2915
        %v3006 = vsub.f32 %v1971, %v2915
        %v3007 = vsub.f32 %v1973, %v2915
        %v3008 = vsub.f32 %v1975, %v2915
        %v3009 = vsub.f32 %v1977, %v2915
        %v3010 = vsub.f32 %v1979, %v2915
        %v3011 = vsub.f32 %v1981, %v2915
        %v3012 = vsub.f32 %v1983, %v2915
        %v3013 = vsub.f32 %v1985, %v2915
        %v3014 = vsub.f32 %v1987, %v2915
        %v3015 = vsub.f32 %v1989, %v2915
        %v3016 = vsub.f32 %v1991, %v2919
        %v3017 = vsub.f32 %v1993, %v2919
        %v3018 = vsub.f32 %v1995, %v2919
        %v3019 = vsub.f32 %v1997, %v2919
        %v3020 = vsub.f32 %v1999, %v2919
        %v3021 = vsub.f32 %v2001, %v2919
        %v3022 = vsub.f32 %v2003, %v2919
        %v3023 = vsub.f32 %v2005, %v2919
        %v3024 = vsub.f32 %v2007, %v2919
        %v3025 = vsub.f32 %v2009, %v2919
        %v3026 = vsub.f32 %v2011, %v2919
        %v3027 = vsub.f32 %v2013, %v2919
        %v3028 = vsub.f32 %v2015, %v2919
        %v3029 = vsub.f32 %v2017, %v2919
        %v3030 = vsub.f32 %v2019, %v2919
        %v3031 = vsub.f32 %v2021, %v2919
        %v3032 = vsub.f32 %v2023, %v2923
        %v3033 = vsub.f32 %v2025, %v2923
        %v3034 = vsub.f32 %v2027, %v2923
        %v3035 = vsub.f32 %v2029, %v2923
        %v3036 = vsub.f32 %v2031, %v2923
        %v3037 = vsub.f32 %v2033, %v2923
        %v3038 = vsub.f32 %v2035, %v2923
        %v3039 = vsub.f32 %v2037, %v2923
        %v3040 = vsub.f32 %v2039, %v2923
        %v3041 = vsub.f32 %v2041, %v2923
        %v3042 = vsub.f32 %v2043, %v2923
        %v3043 = vsub.f32 %v2045, %v2923
        %v3044 = vsub.f32 %v2047, %v2923
        %v3045 = vsub.f32 %v2049, %v2923
        %v3046 = vsub.f32 %v2051, %v2923
        %v3047 = vsub.f32 %v2053, %v2923
        %v3048 = vsub.f32 %v2055, %v2927
        %v3049 = vsub.f32 %v2057, %v2927
        %v3050 = vsub.f32 %v2059, %v2927
        %v3051 = vsub.f32 %v2061, %v2927
        %v3052 = vsub.f32 %v2063, %v2927
        %v3053 = vsub.f32 %v2065, %v2927
        %v3054 = vsub.f32 %v2067, %v2927
        %v3055 = vsub.f32 %v2069, %v2927
        %v3056 = vsub.f32 %v2071, %v2927
        %v3057 = vsub.f32 %v2073, %v2927
        %v3058 = vsub.f32 %v2075, %v2927
        %v3059 = vsub.f32 %v2077, %v2927
        %v3060 = vsub.f32 %v2079, %v2927
        %v3061 = vsub.f32 %v2081, %v2927
        %v3062 = vsub.f32 %v2083, %v2927
        %v3063 = vsub.f32 %v2085, %v2927
        %v3064 = vmul.f32 %v2936, 1.442695
        %v3065 = vpow.pop %v3064
        %v3066 = vmul.f32 %v2937, 1.442695
        %v3067 = vpow.pop %v3066
        %v3068 = vmul.f32 %v2938, 1.442695
        %v3069 = vpow.pop %v3068
        %v3070 = vmul.f32 %v2939, 1.442695
        %v3071 = vpow.pop %v3070
        %v3072 = vmul.f32 %v2940, 1.442695
        %v3073 = vpow.pop %v3072
        %v3074 = vmul.f32 %v2941, 1.442695
        %v3075 = vpow.pop %v3074
        %v3076 = vmul.f32 %v2942, 1.442695
        %v3077 = vpow.pop %v3076
        %v3078 = vmul.f32 %v2943, 1.442695
        %v3079 = vpow.pop %v3078
        %v3080 = vmul.f32 %v2944, 1.442695
        %v3081 = vpow.pop %v3080
        %v3082 = vmul.f32 %v2945, 1.442695
        %v3083 = vpow.pop %v3082
        %v3084 = vmul.f32 %v2946, 1.442695
        %v3085 = vpow.pop %v3084
        %v3086 = vmul.f32 %v2947, 1.442695
        %v3087 = vpow.pop %v3086
        %v3088 = vmul.f32 %v2948, 1.442695
        %v3089 = vpow.pop %v3088
        %v3090 = vmul.f32 %v2949, 1.442695
        %v3091 = vpow.pop %v3090
        %v3092 = vmul.f32 %v2950, 1.442695
        %v3093 = vpow.pop %v3092
        %v3094 = vmul.f32 %v2951, 1.442695
        %v3095 = vpow.pop %v3094
        %v3096 = vmul.f32 %v2952, 1.442695
        %v3097 = vpow.pop %v3096
        %v3098 = vmul.f32 %v2953, 1.442695
        %v3099 = vpow.pop %v3098
        %v3100 = vmul.f32 %v2954, 1.442695
        %v3101 = vpow.pop %v3100
        %v3102 = vmul.f32 %v2955, 1.442695
        %v3103 = vpow.pop %v3102
        %v3104 = vmul.f32 %v2956, 1.442695
        %v3105 = vpow.pop %v3104
        %v3106 = vmul.f32 %v2957, 1.442695
        %v3107 = vpow.pop %v3106
        %v3108 = vmul.f32 %v2958, 1.442695
        %v3109 = vpow.pop %v3108
        %v3110 = vmul.f32 %v2959, 1.442695
        %v3111 = vpow.pop %v3110
        %v3112 = vmul.f32 %v2960, 1.442695
        %v3113 = vpow.pop %v3112
        %v3114 = vmul.f32 %v2961, 1.442695
        %v3115 = vpow.pop %v3114
        %v3116 = vmul.f32 %v2962, 1.442695
        %v3117 = vpow.pop %v3116
        %v3118 = vmul.f32 %v2963, 1.442695
        %v3119 = vpow.pop %v3118
        %v3120 = vmul.f32 %v2964, 1.442695
        %v3121 = vpow.pop %v3120
        %v3122 = vmul.f32 %v2965, 1.442695
        %v3123 = vpow.pop %v3122
        %v3124 = vmul.f32 %v2966, 1.442695
        %v3125 = vpow.pop %v3124
        %v3126 = vmul.f32 %v2967, 1.442695
        %v3127 = vpow.pop %v3126
        %v3128 = vmul.f32 %v2968, 1.442695
        %v3129 = vpow.pop %v3128
        %v3130 = vmul.f32 %v2969, 1.442695
        %v3131 = vpow.pop %v3130
        %v3132 = vmul.f32 %v2970, 1.442695
        %v3133 = vpow.pop %v3132
        %v3134 = vmul.f32 %v2971, 1.442695
        %v3135 = vpow.pop %v3134
        %v3136 = vmul.f32 %v2972, 1.442695
        %v3137 = vpow.pop %v3136
        %v3138 = vmul.f32 %v2973, 1.442695
        %v3139 = vpow.pop %v3138
        %v3140 = vmul.f32 %v2974, 1.442695
        %v3141 = vpow.pop %v3140
        %v3142 = vmul.f32 %v2975, 1.442695
        %v3143 = vpow.pop %v3142
        %v3144 = vmul.f32 %v2976, 1.442695
        %v3145 = vpow.pop %v3144
        %v3146 = vmul.f32 %v2977, 1.442695
        %v3147 = vpow.pop %v3146
        %v3148 = vmul.f32 %v2978, 1.442695
        %v3149 = vpow.pop %v3148
        %v3150 = vmul.f32 %v2979, 1.442695
        %v3151 = vpow.pop %v3150
        %v3152 = vmul.f32 %v2980, 1.442695
        %v3153 = vpow.pop %v3152
        %v3154 = vmul.f32 %v2981, 1.442695
        %v3155 = vpow.pop %v3154
        %v3156 = vmul.f32 %v2982, 1.442695
        %v3157 = vpow.pop %v3156
        %v3158 = vmul.f32 %v2983, 1.442695
        %v3159 = vpow.pop %v3158
        %v3160 = vmul.f32 %v2984, 1.442695
        %v3161 = vpow.pop %v3160
        %v3162 = vmul.f32 %v2985, 1.442695
        %v3163 = vpow.pop %v3162
        %v3164 = vmul.f32 %v2986, 1.442695
        %v3165 = vpow.pop %v3164
        %v3166 = vmul.f32 %v2987, 1.442695
        %v3167 = vpow.pop %v3166
        %v3168 = vmul.f32 %v2988, 1.442695
        %v3169 = vpow.pop %v3168
        %v3170 = vmul.f32 %v2989, 1.442695
        %v3171 = vpow.pop %v3170
        %v3172 = vmul.f32 %v2990, 1.442695
        %v3173 = vpow.pop %v3172
        %v3174 = vmul.f32 %v2991, 1.442695
        %v3175 = vpow.pop %v3174
        %v3176 = vmul.f32 %v2992, 1.442695
        %v3177 = vpow.pop %v3176
        %v3178 = vmul.f32 %v2993, 1.442695
        %v3179 = vpow.pop %v3178
        %v3180 = vmul.f32 %v2994, 1.442695
        %v3181 = vpow.pop %v3180
        %v3182 = vmul.f32 %v2995, 1.442695
        %v3183 = vpow.pop %v3182
        %v3184 = vmul.f32 %v2996, 1.442695
        %v3185 = vpow.pop %v3184
        %v3186 = vmul.f32 %v2997, 1.442695
        %v3187 = vpow.pop %v3186
        %v3188 = vmul.f32 %v2998, 1.442695
        %v3189 = vpow.pop %v3188
        %v3190 = vmul.f32 %v2999, 1.442695
        %v3191 = vpow.pop %v3190
        %v3192 = vmul.f32 %v3000, 1.442695
        %v3193 = vpow.pop %v3192
        %v3194 = vmul.f32 %v3001, 1.442695
        %v3195 = vpow.pop %v3194
        %v3196 = vmul.f32 %v3002, 1.442695
        %v3197 = vpow.pop %v3196
        %v3198 = vmul.f32 %v3003, 1.442695
        %v3199 = vpow.pop %v3198
        %v3200 = vmul.f32 %v3004, 1.442695
        %v3201 = vpow.pop %v3200
        %v3202 = vmul.f32 %v3005, 1.442695
        %v3203 = vpow.pop %v3202
        %v3204 = vmul.f32 %v3006, 1.442695
        %v3205 = vpow.pop %v3204
        %v3206 = vmul.f32 %v3007, 1.442695
        %v3207 = vpow.pop %v3206
        %v3208 = vmul.f32 %v3008, 1.442695
        %v3209 = vpow.pop %v3208
        %v3210 = vmul.f32 %v3009, 1.442695
        %v3211 = vpow.pop %v3210
        %v3212 = vmul.f32 %v3010, 1.442695
        %v3213 = vpow.pop %v3212
        %v3214 = vmul.f32 %v3011, 1.442695
        %v3215 = vpow.pop %v3214
        %v3216 = vmul.f32 %v3012, 1.442695
        %v3217 = vpow.pop %v3216
        %v3218 = vmul.f32 %v3013, 1.442695
        %v3219 = vpow.pop %v3218
        %v3220 = vmul.f32 %v3014, 1.442695
        %v3221 = vpow.pop %v3220
        %v3222 = vmul.f32 %v3015, 1.442695
        %v3223 = vpow.pop %v3222
        %v3224 = vmul.f32 %v3016, 1.442695
        %v3225 = vpow.pop %v3224
        %v3226 = vmul.f32 %v3017, 1.442695
        %v3227 = vpow.pop %v3226
        %v3228 = vmul.f32 %v3018, 1.442695
        %v3229 = vpow.pop %v3228
        %v3230 = vmul.f32 %v3019, 1.442695
        %v3231 = vpow.pop %v3230
        %v3232 = vmul.f32 %v3020, 1.442695
        %v3233 = vpow.pop %v3232
        %v3234 = vmul.f32 %v3021, 1.442695
        %v3235 = vpow.pop %v3234
        %v3236 = vmul.f32 %v3022, 1.442695
        %v3237 = vpow.pop %v3236
        %v3238 = vmul.f32 %v3023, 1.442695
        %v3239 = vpow.pop %v3238
        %v3240 = vmul.f32 %v3024, 1.442695
        %v3241 = vpow.pop %v3240
        %v3242 = vmul.f32 %v3025, 1.442695
        %v3243 = vpow.pop %v3242
        %v3244 = vmul.f32 %v3026, 1.442695
        %v3245 = vpow.pop %v3244
        %v3246 = vmul.f32 %v3027, 1.442695
        %v3247 = vpow.pop %v3246
        %v3248 = vmul.f32 %v3028, 1.442695
        %v3249 = vpow.pop %v3248
        %v3250 = vmul.f32 %v3029, 1.442695
        %v3251 = vpow.pop %v3250
        %v3252 = vmul.f32 %v3030, 1.442695
        %v3253 = vpow.pop %v3252
        %v3254 = vmul.f32 %v3031, 1.442695
        %v3255 = vpow.pop %v3254
        %v3256 = vmul.f32 %v3032, 1.442695
        %v3257 = vpow.pop %v3256
        %v3258 = vmul.f32 %v3033, 1.442695
        %v3259 = vpow.pop %v3258
        %v3260 = vmul.f32 %v3034, 1.442695
        %v3261 = vpow.pop %v3260
        %v3262 = vmul.f32 %v3035, 1.442695
        %v3263 = vpow.pop %v3262
        %v3264 = vmul.f32 %v3036, 1.442695
        %v3265 = vpow.pop %v3264
        %v3266 = vmul.f32 %v3037, 1.442695
        %v3267 = vpow.pop %v3266
        %v3268 = vmul.f32 %v3038, 1.442695
        %v3269 = vpow.pop %v3268
        %v3270 = vmul.f32 %v3039, 1.442695
        %v3271 = vpow.pop %v3270
        %v3272 = vmul.f32 %v3040, 1.442695
        %v3273 = vpow.pop %v3272
        %v3274 = vmul.f32 %v3041, 1.442695
        %v3275 = vpow.pop %v3274
        %v3276 = vmul.f32 %v3042, 1.442695
        %v3277 = vpow.pop %v3276
        %v3278 = vmul.f32 %v3043, 1.442695
        %v3279 = vpow.pop %v3278
        %v3280 = vmul.f32 %v3044, 1.442695
        %v3281 = vpow.pop %v3280
        %v3282 = vmul.f32 %v3045, 1.442695
        %v3283 = vpow.pop %v3282
        %v3284 = vmul.f32 %v3046, 1.442695
        %v3285 = vpow.pop %v3284
        %v3286 = vmul.f32 %v3047, 1.442695
        %v3287 = vpow.pop %v3286
        %v3288 = vmul.f32 %v3048, 1.442695
        %v3289 = vpow.pop %v3288
        %v3290 = vmul.f32 %v3049, 1.442695
        %v3291 = vpow.pop %v3290
        %v3292 = vmul.f32 %v3050, 1.442695
        %v3293 = vpow.pop %v3292
        %v3294 = vmul.f32 %v3051, 1.442695
        %v3295 = vpow.pop %v3294
        %v3296 = vmul.f32 %v3052, 1.442695
        %v3297 = vpow.pop %v3296
        %v3298 = vmul.f32 %v3053, 1.442695
        %v3299 = vpow.pop %v3298
        %v3300 = vmul.f32 %v3054, 1.442695
        %v3301 = vpow.pop %v3300
        %v3302 = vmul.f32 %v3055, 1.442695
        %v3303 = vpow.pop %v3302
        %v3304 = vmul.f32 %v3056, 1.442695
        %v3305 = vpow.pop %v3304
        %v3306 = vmul.f32 %v3057, 1.442695
        %v3307 = vpow.pop %v3306
        %v3308 = vmul.f32 %v3058, 1.442695
        %v3309 = vpow.pop %v3308
        %v3310 = vmul.f32 %v3059, 1.442695
        %v3311 = vpow.pop %v3310
        %v3312 = vmul.f32 %v3060, 1.442695
        %v3313 = vpow.pop %v3312
        %v3314 = vmul.f32 %v3061, 1.442695
        %v3315 = vpow.pop %v3314
        %v3316 = vmul.f32 %v3062, 1.442695
        %v3317 = vpow.pop %v3316
        %v3318 = vmul.f32 %v3063, 1.442695
        %v3319 = vpow.pop %v3318
        %3448 = vset.pattern.permute.xlu0 0
        %3449 = vperm.xlu0 %3448, %v3065
        %v3450 = vpop.permute.xlu0 %3449
        %3451 = vset.pattern.permute.xlu0 0
        %3452 = vperm.xlu0 %3451, %v3067
        %v3453 = vpop.permute.xlu0 %3452
        %3454 = vset.pattern.permute.xlu0 0
        %3455 = vperm.xlu0 %3454, %v3069
        %v3456 = vpop.permute.xlu0 %3455
        %3457 = vset.pattern.permute.xlu0 0
        %3458 = vperm.xlu0 %3457, %v3071
        %v3459 = vpop.permute.xlu0 %3458
        %3460 = vset.pattern.permute.xlu0 0
        %3461 = vperm.xlu0 %3460, %v3073
        %v3462 = vpop.permute.xlu0 %3461
        %3463 = vset.pattern.permute.xlu0 0
        %3464 = vperm.xlu0 %3463, %v3075
        %v3465 = vpop.permute.xlu0 %3464
        %3466 = vset.pattern.permute.xlu0 0
        %3467 = vperm.xlu0 %3466, %v3077
        %v3468 = vpop.permute.xlu0 %3467
        %3469 = vset.pattern.permute.xlu0 0
        %3470 = vperm.xlu0 %3469, %v3079
        %v3471 = vpop.permute.xlu0 %3470
        %3472 = vset.pattern.permute.xlu0 0
        %3473 = vperm.xlu0 %3472, %v3081
        %v3474 = vpop.permute.xlu0 %3473
        %3475 = vset.pattern.permute.xlu0 0
        %3476 = vperm.xlu0 %3475, %v3083
        %v3477 = vpop.permute.xlu0 %3476
        %3478 = vset.pattern.permute.xlu0 0
        %3479 = vperm.xlu0 %3478, %v3085
        %v3480 = vpop.permute.xlu0 %3479
        %3481 = vset.pattern.permute.xlu0 0
        %3482 = vperm.xlu0 %3481, %v3087
        %v3483 = vpop.permute.xlu0 %3482
        %3484 = vset.pattern.permute.xlu0 0
        %3485 = vperm.xlu0 %3484, %v3089
        %v3486 = vpop.permute.xlu0 %3485
        %3487 = vset.pattern.permute.xlu0 0
        %3488 = vperm.xlu0 %3487, %v3091
        %v3489 = vpop.permute.xlu0 %3488
        %3490 = vset.pattern.permute.xlu0 0
        %3491 = vperm.xlu0 %3490, %v3093
        %v3492 = vpop.permute.xlu0 %3491
        %3493 = vset.pattern.permute.xlu0 0
        %3494 = vperm.xlu0 %3493, %v3095
        %v3495 = vpop.permute.xlu0 %3494
        %3496 = vset.pattern.permute.xlu0 0
        %3497 = vperm.xlu0 %3496, %v3097
        %v3498 = vpop.permute.xlu0 %3497
        %3499 = vset.pattern.permute.xlu0 0
        %3500 = vperm.xlu0 %3499, %v3099
        %v3501 = vpop.permute.xlu0 %3500
        %3502 = vset.pattern.permute.xlu0 0
        %3503 = vperm.xlu0 %3502, %v3101
        %v3504 = vpop.permute.xlu0 %3503
        %3505 = vset.pattern.permute.xlu0 0
        %3506 = vperm.xlu0 %3505, %v3103
        %v3507 = vpop.permute.xlu0 %3506
        %3508 = vset.pattern.permute.xlu0 0
        %3509 = vperm.xlu0 %3508, %v3105
        %v3510 = vpop.permute.xlu0 %3509
        %3511 = vset.pattern.permute.xlu0 0
        %3512 = vperm.xlu0 %3511, %v3107
        %v3513 = vpop.permute.xlu0 %3512
        %3514 = vset.pattern.permute.xlu0 0
        %3515 = vperm.xlu0 %3514, %v3109
        %v3516 = vpop.permute.xlu0 %3515
        %3517 = vset.pattern.permute.xlu0 0
        %3518 = vperm.xlu0 %3517, %v3111
        %v3519 = vpop.permute.xlu0 %3518
        %3520 = vset.pattern.permute.xlu0 0
        %3521 = vperm.xlu0 %3520, %v3113
        %v3522 = vpop.permute.xlu0 %3521
        %3523 = vset.pattern.permute.xlu0 0
        %3524 = vperm.xlu0 %3523, %v3115
        %v3525 = vpop.permute.xlu0 %3524
        %3526 = vset.pattern.permute.xlu0 0
        %3527 = vperm.xlu0 %3526, %v3117
        %v3528 = vpop.permute.xlu0 %3527
        %3529 = vset.pattern.permute.xlu0 0
        %3530 = vperm.xlu0 %3529, %v3119
        %v3531 = vpop.permute.xlu0 %3530
        %3532 = vset.pattern.permute.xlu0 0
        %3533 = vperm.xlu0 %3532, %v3121
        %v3534 = vpop.permute.xlu0 %3533
        %3535 = vset.pattern.permute.xlu0 0
        %3536 = vperm.xlu0 %3535, %v3123
        %v3537 = vpop.permute.xlu0 %3536
        %3538 = vset.pattern.permute.xlu0 0
        %3539 = vperm.xlu0 %3538, %v3125
        %v3540 = vpop.permute.xlu0 %3539
        %3541 = vset.pattern.permute.xlu0 0
        %3542 = vperm.xlu0 %3541, %v3127
        %v3543 = vpop.permute.xlu0 %3542
        %3544 = vset.pattern.permute.xlu0 0
        %3545 = vperm.xlu0 %3544, %v3129
        %v3546 = vpop.permute.xlu0 %3545
        %3547 = vset.pattern.permute.xlu0 0
        %3548 = vperm.xlu0 %3547, %v3131
        %v3549 = vpop.permute.xlu0 %3548
        %3550 = vset.pattern.permute.xlu0 0
        %3551 = vperm.xlu0 %3550, %v3133
        %v3552 = vpop.permute.xlu0 %3551
        %3553 = vset.pattern.permute.xlu0 0
        %3554 = vperm.xlu0 %3553, %v3135
        %v3555 = vpop.permute.xlu0 %3554
        %3556 = vset.pattern.permute.xlu0 0
        %3557 = vperm.xlu0 %3556, %v3137
        %v3558 = vpop.permute.xlu0 %3557
        %3559 = vset.pattern.permute.xlu0 0
        %3560 = vperm.xlu0 %3559, %v3139
        %v3561 = vpop.permute.xlu0 %3560
        %3562 = vset.pattern.permute.xlu0 0
        %3563 = vperm.xlu0 %3562, %v3141
        %v3564 = vpop.permute.xlu0 %3563
        %3565 = vset.pattern.permute.xlu0 0
        %3566 = vperm.xlu0 %3565, %v3143
        %v3567 = vpop.permute.xlu0 %3566
        %3568 = vset.pattern.permute.xlu0 0
        %3569 = vperm.xlu0 %3568, %v3145
        %v3570 = vpop.permute.xlu0 %3569
        %3571 = vset.pattern.permute.xlu0 0
        %3572 = vperm.xlu0 %3571, %v3147
        %v3573 = vpop.permute.xlu0 %3572
        %3574 = vset.pattern.permute.xlu0 0
        %3575 = vperm.xlu0 %3574, %v3149
        %v3576 = vpop.permute.xlu0 %3575
        %3577 = vset.pattern.permute.xlu0 0
        %3578 = vperm.xlu0 %3577, %v3151
        %v3579 = vpop.permute.xlu0 %3578
        %3580 = vset.pattern.permute.xlu0 0
        %3581 = vperm.xlu0 %3580, %v3153
        %v3582 = vpop.permute.xlu0 %3581
        %3583 = vset.pattern.permute.xlu0 0
        %3584 = vperm.xlu0 %3583, %v3155
        %v3585 = vpop.permute.xlu0 %3584
        %3586 = vset.pattern.permute.xlu0 0
        %3587 = vperm.xlu0 %3586, %v3157
        %v3588 = vpop.permute.xlu0 %3587
        %3589 = vset.pattern.permute.xlu0 0
        %3590 = vperm.xlu0 %3589, %v3159
        %v3591 = vpop.permute.xlu0 %3590
        %3592 = vset.pattern.permute.xlu0 0
        %3593 = vperm.xlu0 %3592, %v3161
        %v3594 = vpop.permute.xlu0 %3593
        %3595 = vset.pattern.permute.xlu0 0
        %3596 = vperm.xlu0 %3595, %v3163
        %v3597 = vpop.permute.xlu0 %3596
        %3598 = vset.pattern.permute.xlu0 0
        %3599 = vperm.xlu0 %3598, %v3165
        %v3600 = vpop.permute.xlu0 %3599
        %3601 = vset.pattern.permute.xlu0 0
        %3602 = vperm.xlu0 %3601, %v3167
        %v3603 = vpop.permute.xlu0 %3602
        %3604 = vset.pattern.permute.xlu0 0
        %3605 = vperm.xlu0 %3604, %v3169
        %v3606 = vpop.permute.xlu0 %3605
        %3607 = vset.pattern.permute.xlu0 0
        %3608 = vperm.xlu0 %3607, %v3171
        %v3609 = vpop.permute.xlu0 %3608
        %3610 = vset.pattern.permute.xlu0 0
        %3611 = vperm.xlu0 %3610, %v3173
        %v3612 = vpop.permute.xlu0 %3611
        %3613 = vset.pattern.permute.xlu0 0
        %3614 = vperm.xlu0 %3613, %v3175
        %v3615 = vpop.permute.xlu0 %3614
        %3616 = vset.pattern.permute.xlu0 0
        %3617 = vperm.xlu0 %3616, %v3177
        %v3618 = vpop.permute.xlu0 %3617
        %3619 = vset.pattern.permute.xlu0 0
        %3620 = vperm.xlu0 %3619, %v3179
        %v3621 = vpop.permute.xlu0 %3620
        %3622 = vset.pattern.permute.xlu0 0
        %3623 = vperm.xlu0 %3622, %v3181
        %v3624 = vpop.permute.xlu0 %3623
        %3625 = vset.pattern.permute.xlu0 0
        %3626 = vperm.xlu0 %3625, %v3183
        %v3627 = vpop.permute.xlu0 %3626
        %3628 = vset.pattern.permute.xlu0 0
        %3629 = vperm.xlu0 %3628, %v3185
        %v3630 = vpop.permute.xlu0 %3629
        %3631 = vset.pattern.permute.xlu0 0
        %3632 = vperm.xlu0 %3631, %v3187
        %v3633 = vpop.permute.xlu0 %3632
        %3634 = vset.pattern.permute.xlu0 0
        %3635 = vperm.xlu0 %3634, %v3189
        %v3636 = vpop.permute.xlu0 %3635
        %3637 = vset.pattern.permute.xlu0 0
        %3638 = vperm.xlu0 %3637, %v3191
        %v3639 = vpop.permute.xlu0 %3638
        %3640 = vset.pattern.permute.xlu0 0
        %3641 = vperm.xlu0 %3640, %v3193
        %v3642 = vpop.permute.xlu0 %3641
        %3643 = vset.pattern.permute.xlu0 0
        %3644 = vperm.xlu0 %3643, %v3195
        %v3645 = vpop.permute.xlu0 %3644
        %3646 = vset.pattern.permute.xlu0 0
        %3647 = vperm.xlu0 %3646, %v3197
        %v3648 = vpop.permute.xlu0 %3647
        %3649 = vset.pattern.permute.xlu0 0
        %3650 = vperm.xlu0 %3649, %v3199
        %v3651 = vpop.permute.xlu0 %3650
        %3652 = vset.pattern.permute.xlu0 0
        %3653 = vperm.xlu0 %3652, %v3201
        %v3654 = vpop.permute.xlu0 %3653
        %3655 = vset.pattern.permute.xlu0 0
        %3656 = vperm.xlu0 %3655, %v3203
        %v3657 = vpop.permute.xlu0 %3656
        %3658 = vset.pattern.permute.xlu0 0
        %3659 = vperm.xlu0 %3658, %v3205
        %v3660 = vpop.permute.xlu0 %3659
        %3661 = vset.pattern.permute.xlu0 0
        %3662 = vperm.xlu0 %3661, %v3207
        %v3663 = vpop.permute.xlu0 %3662
        %3664 = vset.pattern.permute.xlu0 0
        %3665 = vperm.xlu0 %3664, %v3209
        %v3666 = vpop.permute.xlu0 %3665
        %3667 = vset.pattern.permute.xlu0 0
        %3668 = vperm.xlu0 %3667, %v3211
        %v3669 = vpop.permute.xlu0 %3668
        %3670 = vset.pattern.permute.xlu0 0
        %3671 = vperm.xlu0 %3670, %v3213
        %v3672 = vpop.permute.xlu0 %3671
        %3673 = vset.pattern.permute.xlu0 0
        %3674 = vperm.xlu0 %3673, %v3215
        %v3675 = vpop.permute.xlu0 %3674
        %3676 = vset.pattern.permute.xlu0 0
        %3677 = vperm.xlu0 %3676, %v3217
        %v3678 = vpop.permute.xlu0 %3677
        %3679 = vset.pattern.permute.xlu0 0
        %3680 = vperm.xlu0 %3679, %v3219
        %v3681 = vpop.permute.xlu0 %3680
        %3682 = vset.pattern.permute.xlu0 0
        %3683 = vperm.xlu0 %3682, %v3221
        %v3684 = vpop.permute.xlu0 %3683
        %3685 = vset.pattern.permute.xlu0 0
        %3686 = vperm.xlu0 %3685, %v3223
        %v3687 = vpop.permute.xlu0 %3686
        %3688 = vset.pattern.permute.xlu0 0
        %3689 = vperm.xlu0 %3688, %v3225
        %v3690 = vpop.permute.xlu0 %3689
        %3691 = vset.pattern.permute.xlu0 0
        %3692 = vperm.xlu0 %3691, %v3227
        %v3693 = vpop.permute.xlu0 %3692
        %3694 = vset.pattern.permute.xlu0 0
        %3695 = vperm.xlu0 %3694, %v3229
        %v3696 = vpop.permute.xlu0 %3695
        %3697 = vset.pattern.permute.xlu0 0
        %3698 = vperm.xlu0 %3697, %v3231
        %v3699 = vpop.permute.xlu0 %3698
        %3700 = vset.pattern.permute.xlu0 0
        %3701 = vperm.xlu0 %3700, %v3233
        %v3702 = vpop.permute.xlu0 %3701
        %3703 = vset.pattern.permute.xlu0 0
        %3704 = vperm.xlu0 %3703, %v3235
        %v3705 = vpop.permute.xlu0 %3704
        %3706 = vset.pattern.permute.xlu0 0
        %3707 = vperm.xlu0 %3706, %v3237
        %v3708 = vpop.permute.xlu0 %3707
        %3709 = vset.pattern.permute.xlu0 0
        %3710 = vperm.xlu0 %3709, %v3239
        %v3711 = vpop.permute.xlu0 %3710
        %3712 = vset.pattern.permute.xlu0 0
        %3713 = vperm.xlu0 %3712, %v3241
        %v3714 = vpop.permute.xlu0 %3713
        %3715 = vset.pattern.permute.xlu0 0
        %3716 = vperm.xlu0 %3715, %v3243
        %v3717 = vpop.permute.xlu0 %3716
        %3718 = vset.pattern.permute.xlu0 0
        %3719 = vperm.xlu0 %3718, %v3245
        %v3720 = vpop.permute.xlu0 %3719
        %3721 = vset.pattern.permute.xlu0 0
        %3722 = vperm.xlu0 %3721, %v3247
        %v3723 = vpop.permute.xlu0 %3722
        %3724 = vset.pattern.permute.xlu0 0
        %3725 = vperm.xlu0 %3724, %v3249
        %v3726 = vpop.permute.xlu0 %3725
        %3727 = vset.pattern.permute.xlu0 0
        %3728 = vperm.xlu0 %3727, %v3251
        %v3729 = vpop.permute.xlu0 %3728
        %3730 = vset.pattern.permute.xlu0 0
        %3731 = vperm.xlu0 %3730, %v3253
        %v3732 = vpop.permute.xlu0 %3731
        %3733 = vset.pattern.permute.xlu0 0
        %3734 = vperm.xlu0 %3733, %v3255
        %v3735 = vpop.permute.xlu0 %3734
        %3736 = vset.pattern.permute.xlu0 0
        %3737 = vperm.xlu0 %3736, %v3257
        %v3738 = vpop.permute.xlu0 %3737
        %3739 = vset.pattern.permute.xlu0 0
        %3740 = vperm.xlu0 %3739, %v3259
        %v3741 = vpop.permute.xlu0 %3740
        %3742 = vset.pattern.permute.xlu0 0
        %3743 = vperm.xlu0 %3742, %v3261
        %v3744 = vpop.permute.xlu0 %3743
        %3745 = vset.pattern.permute.xlu0 0
        %3746 = vperm.xlu0 %3745, %v3263
        %v3747 = vpop.permute.xlu0 %3746
        %3748 = vset.pattern.permute.xlu0 0
        %3749 = vperm.xlu0 %3748, %v3265
        %v3750 = vpop.permute.xlu0 %3749
        %3751 = vset.pattern.permute.xlu0 0
        %3752 = vperm.xlu0 %3751, %v3267
        %v3753 = vpop.permute.xlu0 %3752
        %3754 = vset.pattern.permute.xlu0 0
        %3755 = vperm.xlu0 %3754, %v3269
        %v3756 = vpop.permute.xlu0 %3755
        %3757 = vset.pattern.permute.xlu0 0
        %3758 = vperm.xlu0 %3757, %v3271
        %v3759 = vpop.permute.xlu0 %3758
        %3760 = vset.pattern.permute.xlu0 0
        %3761 = vperm.xlu0 %3760, %v3273
        %v3762 = vpop.permute.xlu0 %3761
        %3763 = vset.pattern.permute.xlu0 0
        %3764 = vperm.xlu0 %3763, %v3275
        %v3765 = vpop.permute.xlu0 %3764
        %3766 = vset.pattern.permute.xlu0 0
        %3767 = vperm.xlu0 %3766, %v3277
        %v3768 = vpop.permute.xlu0 %3767
        %3769 = vset.pattern.permute.xlu0 0
        %3770 = vperm.xlu0 %3769, %v3279
        %v3771 = vpop.permute.xlu0 %3770
        %3772 = vset.pattern.permute.xlu0 0
        %3773 = vperm.xlu0 %3772, %v3281
        %v3774 = vpop.permute.xlu0 %3773
        %3775 = vset.pattern.permute.xlu0 0
        %3776 = vperm.xlu0 %3775, %v3283
        %v3777 = vpop.permute.xlu0 %3776
        %3778 = vset.pattern.permute.xlu0 0
        %3779 = vperm.xlu0 %3778, %v3285
        %v3780 = vpop.permute.xlu0 %3779
        %3781 = vset.pattern.permute.xlu0 0
        %3782 = vperm.xlu0 %3781, %v3287
        %v3783 = vpop.permute.xlu0 %3782
        %3784 = vset.pattern.permute.xlu0 0
        %3785 = vperm.xlu0 %3784, %v3289
        %v3786 = vpop.permute.xlu0 %3785
        %3787 = vset.pattern.permute.xlu0 0
        %3788 = vperm.xlu0 %3787, %v3291
        %v3789 = vpop.permute.xlu0 %3788
        %3790 = vset.pattern.permute.xlu0 0
        %3791 = vperm.xlu0 %3790, %v3293
        %v3792 = vpop.permute.xlu0 %3791
        %3793 = vset.pattern.permute.xlu0 0
        %3794 = vperm.xlu0 %3793, %v3295
        %v3795 = vpop.permute.xlu0 %3794
        %3796 = vset.pattern.permute.xlu0 0
        %3797 = vperm.xlu0 %3796, %v3297
        %v3798 = vpop.permute.xlu0 %3797
        %3799 = vset.pattern.permute.xlu0 0
        %3800 = vperm.xlu0 %3799, %v3299
        %v3801 = vpop.permute.xlu0 %3800
        %3802 = vset.pattern.permute.xlu0 0
        %3803 = vperm.xlu0 %3802, %v3301
        %v3804 = vpop.permute.xlu0 %3803
        %3805 = vset.pattern.permute.xlu0 0
        %3806 = vperm.xlu0 %3805, %v3303
        %v3807 = vpop.permute.xlu0 %3806
        %3808 = vset.pattern.permute.xlu0 0
        %3809 = vperm.xlu0 %3808, %v3305
        %v3810 = vpop.permute.xlu0 %3809
        %3811 = vset.pattern.permute.xlu0 0
        %3812 = vperm.xlu0 %3811, %v3307
        %v3813 = vpop.permute.xlu0 %3812
        %3814 = vset.pattern.permute.xlu0 0
        %3815 = vperm.xlu0 %3814, %v3309
        %v3816 = vpop.permute.xlu0 %3815
        %3817 = vset.pattern.permute.xlu0 0
        %3818 = vperm.xlu0 %3817, %v3311
        %v3819 = vpop.permute.xlu0 %3818
        %3820 = vset.pattern.permute.xlu0 0
        %3821 = vperm.xlu0 %3820, %v3313
        %v3822 = vpop.permute.xlu0 %3821
        %3823 = vset.pattern.permute.xlu0 0
        %3824 = vperm.xlu0 %3823, %v3315
        %v3825 = vpop.permute.xlu0 %3824
        %3826 = vset.pattern.permute.xlu0 0
        %3827 = vperm.xlu0 %3826, %v3317
        %v3828 = vpop.permute.xlu0 %3827
        %3829 = vset.pattern.permute.xlu0 0
        %3830 = vperm.xlu0 %3829, %v3319
        %v3831 = vpop.permute.xlu0 %3830
        %v3832 = vlaneseq
        %v3833 = vshrl.u32 %v3832, 7
        %v3834 = vsub.s32 %v2215, %v3833
        %v3835 = vrot.slane %v3450, %v3834
        %v3836 = vlaneseq
        %v3837 = vshrl.u32 %v3836, 7
        %v3838 = vsub.s32 %v2220, %v3837
        %v3839 = vrot.slane %v3453, %v3838
        %v3840 = vsel %vm2225, %v3839, %v3835
        %v3841 = vlaneseq
        %v3842 = vshrl.u32 %v3841, 7
        %v3843 = vsub.s32 %v2227, %v3842
        %v3844 = vrot.slane %v3456, %v3843
        %v3845 = vsel %vm2232, %v3844, %v3840
        %v3846 = vlaneseq
        %v3847 = vshrl.u32 %v3846, 7
        %v3848 = vsub.s32 %v2234, %v3847
        %v3849 = vrot.slane %v3459, %v3848
        %v3850 = vsel %vm2239, %v3849, %v3845
        %v3851 = vlaneseq
        %v3852 = vshrl.u32 %v3851, 7
        %v3853 = vsub.s32 %v2241, %v3852
        %v3854 = vrot.slane %v3462, %v3853
        %v3855 = vsel %vm2246, %v3854, %v3850
        %v3856 = vlaneseq
        %v3857 = vshrl.u32 %v3856, 7
        %v3858 = vsub.s32 %v2248, %v3857
        %v3859 = vrot.slane %v3465, %v3858
        %v3860 = vsel %vm2253, %v3859, %v3855
        %v3861 = vlaneseq
        %v3862 = vshrl.u32 %v3861, 7
        %v3863 = vsub.s32 %v2255, %v3862
        %v3864 = vrot.slane %v3468, %v3863
        %v3865 = vsel %vm2260, %v3864, %v3860
        %v3866 = vlaneseq
        %v3867 = vshrl.u32 %v3866, 7
        %v3868 = vsub.s32 %v2262, %v3867
        %v3869 = vrot.slane %v3471, %v3868
        %v3870 = vsel %vm2267, %v3869, %v3865
        %v3871 = vlaneseq
        %v3872 = vshrl.u32 %v3871, 7
        %v3873 = vsub.s32 %v2269, %v3872
        %v3874 = vrot.slane %v3474, %v3873
        %v3875 = vsel %vm2274, %v3874, %v3870
        %v3876 = vlaneseq
        %v3877 = vshrl.u32 %v3876, 7
        %v3878 = vsub.s32 %v2276, %v3877
        %v3879 = vrot.slane %v3477, %v3878
        %v3880 = vsel %vm2281, %v3879, %v3875
        %v3881 = vlaneseq
        %v3882 = vshrl.u32 %v3881, 7
        %v3883 = vsub.s32 %v2283, %v3882
        %v3884 = vrot.slane %v3480, %v3883
        %v3885 = vsel %vm2288, %v3884, %v3880
        %v3886 = vlaneseq
        %v3887 = vshrl.u32 %v3886, 7
        %v3888 = vsub.s32 %v2290, %v3887
        %v3889 = vrot.slane %v3483, %v3888
        %v3890 = vsel %vm2295, %v3889, %v3885
        %v3891 = vlaneseq
        %v3892 = vshrl.u32 %v3891, 7
        %v3893 = vsub.s32 %v2297, %v3892
        %v3894 = vrot.slane %v3486, %v3893
        %v3895 = vsel %vm2302, %v3894, %v3890
        %v3896 = vlaneseq
        %v3897 = vshrl.u32 %v3896, 7
        %v3898 = vsub.s32 %v2304, %v3897
        %v3899 = vrot.slane %v3489, %v3898
        %v3900 = vsel %vm2309, %v3899, %v3895
        %v3901 = vlaneseq
        %v3902 = vshrl.u32 %v3901, 7
        %v3903 = vsub.s32 %v2311, %v3902
        %v3904 = vrot.slane %v3492, %v3903
        %v3905 = vsel %vm2316, %v3904, %v3900
        %v3906 = vlaneseq
        %v3907 = vshrl.u32 %v3906, 7
        %v3908 = vsub.s32 %v2318, %v3907
        %v3909 = vrot.slane %v3495, %v3908
        %v3910 = vsel %vm2323, %v3909, %v3905
        %v3911 = vlaneseq
        %v3912 = vshrl.u32 %v3911, 7
        %v3913 = vsub.s32 %v2215, %v3912
        %v3914 = vrot.slane %v3498, %v3913
        %v3915 = vlaneseq
        %v3916 = vshrl.u32 %v3915, 7
        %v3917 = vsub.s32 %v2220, %v3916
        %v3918 = vrot.slane %v3501, %v3917
        %v3919 = vsel %vm2225, %v3918, %v3914
        %v3920 = vlaneseq
        %v3921 = vshrl.u32 %v3920, 7
        %v3922 = vsub.s32 %v2227, %v3921
        %v3923 = vrot.slane %v3504, %v3922
        %v3924 = vsel %vm2232, %v3923, %v3919
        %v3925 = vlaneseq
        %v3926 = vshrl.u32 %v3925, 7
        %v3927 = vsub.s32 %v2234, %v3926
        %v3928 = vrot.slane %v3507, %v3927
        %v3929 = vsel %vm2239, %v3928, %v3924
        %v3930 = vlaneseq
        %v3931 = vshrl.u32 %v3930, 7
        %v3932 = vsub.s32 %v2241, %v3931
        %v3933 = vrot.slane %v3510, %v3932
        %v3934 = vsel %vm2246, %v3933, %v3929
        %v3935 = vlaneseq
        %v3936 = vshrl.u32 %v3935, 7
        %v3937 = vsub.s32 %v2248, %v3936
        %v3938 = vrot.slane %v3513, %v3937
        %v3939 = vsel %vm2253, %v3938, %v3934
        %v3940 = vlaneseq
        %v3941 = vshrl.u32 %v3940, 7
        %v3942 = vsub.s32 %v2255, %v3941
        %v3943 = vrot.slane %v3516, %v3942
        %v3944 = vsel %vm2260, %v3943, %v3939
        %v3945 = vlaneseq
        %v3946 = vshrl.u32 %v3945, 7
        %v3947 = vsub.s32 %v2262, %v3946
        %v3948 = vrot.slane %v3519, %v3947
        %v3949 = vsel %vm2267, %v3948, %v3944
        %v3950 = vlaneseq
        %v3951 = vshrl.u32 %v3950, 7
        %v3952 = vsub.s32 %v2269, %v3951
        %v3953 = vrot.slane %v3522, %v3952
        %v3954 = vsel %vm2274, %v3953, %v3949
        %v3955 = vlaneseq
        %v3956 = vshrl.u32 %v3955, 7
        %v3957 = vsub.s32 %v2276, %v3956
        %v3958 = vrot.slane %v3525, %v3957
        %v3959 = vsel %vm2281, %v3958, %v3954
        %v3960 = vlaneseq
        %v3961 = vshrl.u32 %v3960, 7
        %v3962 = vsub.s32 %v2283, %v3961
        %v3963 = vrot.slane %v3528, %v3962
        %v3964 = vsel %vm2288, %v3963, %v3959
        %v3965 = vlaneseq
        %v3966 = vshrl.u32 %v3965, 7
        %v3967 = vsub.s32 %v2290, %v3966
        %v3968 = vrot.slane %v3531, %v3967
        %v3969 = vsel %vm2295, %v3968, %v3964
        %v3970 = vlaneseq
        %v3971 = vshrl.u32 %v3970, 7
        %v3972 = vsub.s32 %v2297, %v3971
        %v3973 = vrot.slane %v3534, %v3972
        %v3974 = vsel %vm2302, %v3973, %v3969
        %v3975 = vlaneseq
        %v3976 = vshrl.u32 %v3975, 7
        %v3977 = vsub.s32 %v2304, %v3976
        %v3978 = vrot.slane %v3537, %v3977
        %v3979 = vsel %vm2309, %v3978, %v3974
        %v3980 = vlaneseq
        %v3981 = vshrl.u32 %v3980, 7
        %v3982 = vsub.s32 %v2311, %v3981
        %v3983 = vrot.slane %v3540, %v3982
        %v3984 = vsel %vm2316, %v3983, %v3979
        %v3985 = vlaneseq
        %v3986 = vshrl.u32 %v3985, 7
        %v3987 = vsub.s32 %v2318, %v3986
        %v3988 = vrot.slane %v3543, %v3987
        %v3989 = vsel %vm2323, %v3988, %v3984
        %v3990 = vlaneseq
        %v3991 = vshrl.u32 %v3990, 7
        %v3992 = vsub.s32 %v2215, %v3991
        %v3993 = vrot.slane %v3546, %v3992
        %v3994 = vlaneseq
        %v3995 = vshrl.u32 %v3994, 7
        %v3996 = vsub.s32 %v2220, %v3995
        %v3997 = vrot.slane %v3549, %v3996
        %v3998 = vsel %vm2225, %v3997, %v3993
        %v3999 = vlaneseq
        %v4000 = vshrl.u32 %v3999, 7
        %v4001 = vsub.s32 %v2227, %v4000
        %v4002 = vrot.slane %v3552, %v4001
        %v4003 = vsel %vm2232, %v4002, %v3998
        %v4004 = vlaneseq
        %v4005 = vshrl.u32 %v4004, 7
        %v4006 = vsub.s32 %v2234, %v4005
        %v4007 = vrot.slane %v3555, %v4006
        %v4008 = vsel %vm2239, %v4007, %v4003
        %v4009 = vlaneseq
        %v4010 = vshrl.u32 %v4009, 7
        %v4011 = vsub.s32 %v2241, %v4010
        %v4012 = vrot.slane %v3558, %v4011
        %v4013 = vsel %vm2246, %v4012, %v4008
        %v4014 = vlaneseq
        %v4015 = vshrl.u32 %v4014, 7
        %v4016 = vsub.s32 %v2248, %v4015
        %v4017 = vrot.slane %v3561, %v4016
        %v4018 = vsel %vm2253, %v4017, %v4013
        %v4019 = vlaneseq
        %v4020 = vshrl.u32 %v4019, 7
        %v4021 = vsub.s32 %v2255, %v4020
        %v4022 = vrot.slane %v3564, %v4021
        %v4023 = vsel %vm2260, %v4022, %v4018
        %v4024 = vlaneseq
        %v4025 = vshrl.u32 %v4024, 7
        %v4026 = vsub.s32 %v2262, %v4025
        %v4027 = vrot.slane %v3567, %v4026
        %v4028 = vsel %vm2267, %v4027, %v4023
        %v4029 = vlaneseq
        %v4030 = vshrl.u32 %v4029, 7
        %v4031 = vsub.s32 %v2269, %v4030
        %v4032 = vrot.slane %v3570, %v4031
        %v4033 = vsel %vm2274, %v4032, %v4028
        %v4034 = vlaneseq
        %v4035 = vshrl.u32 %v4034, 7
        %v4036 = vsub.s32 %v2276, %v4035
        %v4037 = vrot.slane %v3573, %v4036
        %v4038 = vsel %vm2281, %v4037, %v4033
        %v4039 = vlaneseq
        %v4040 = vshrl.u32 %v4039, 7
        %v4041 = vsub.s32 %v2283, %v4040
        %v4042 = vrot.slane %v3576, %v4041
        %v4043 = vsel %vm2288, %v4042, %v4038
        %v4044 = vlaneseq
        %v4045 = vshrl.u32 %v4044, 7
        %v4046 = vsub.s32 %v2290, %v4045
        %v4047 = vrot.slane %v3579, %v4046
        %v4048 = vsel %vm2295, %v4047, %v4043
        %v4049 = vlaneseq
        %v4050 = vshrl.u32 %v4049, 7
        %v4051 = vsub.s32 %v2297, %v4050
        %v4052 = vrot.slane %v3582, %v4051
        %v4053 = vsel %vm2302, %v4052, %v4048
        %v4054 = vlaneseq
        %v4055 = vshrl.u32 %v4054, 7
        %v4056 = vsub.s32 %v2304, %v4055
        %v4057 = vrot.slane %v3585, %v4056
        %v4058 = vsel %vm2309, %v4057, %v4053
        %v4059 = vlaneseq
        %v4060 = vshrl.u32 %v4059, 7
        %v4061 = vsub.s32 %v2311, %v4060
        %v4062 = vrot.slane %v3588, %v4061
        %v4063 = vsel %vm2316, %v4062, %v4058
        %v4064 = vlaneseq
        %v4065 = vshrl.u32 %v4064, 7
        %v4066 = vsub.s32 %v2318, %v4065
        %v4067 = vrot.slane %v3591, %v4066
        %v4068 = vsel %vm2323, %v4067, %v4063
        %v4069 = vlaneseq
        %v4070 = vshrl.u32 %v4069, 7
        %v4071 = vsub.s32 %v2215, %v4070
        %v4072 = vrot.slane %v3594, %v4071
        %v4073 = vlaneseq
        %v4074 = vshrl.u32 %v4073, 7
        %v4075 = vsub.s32 %v2220, %v4074
        %v4076 = vrot.slane %v3597, %v4075
        %v4077 = vsel %vm2225, %v4076, %v4072
        %v4078 = vlaneseq
        %v4079 = vshrl.u32 %v4078, 7
        %v4080 = vsub.s32 %v2227, %v4079
        %v4081 = vrot.slane %v3600, %v4080
        %v4082 = vsel %vm2232, %v4081, %v4077
        %v4083 = vlaneseq
        %v4084 = vshrl.u32 %v4083, 7
        %v4085 = vsub.s32 %v2234, %v4084
        %v4086 = vrot.slane %v3603, %v4085
        %v4087 = vsel %vm2239, %v4086, %v4082
        %v4088 = vlaneseq
        %v4089 = vshrl.u32 %v4088, 7
        %v4090 = vsub.s32 %v2241, %v4089
        %v4091 = vrot.slane %v3606, %v4090
        %v4092 = vsel %vm2246, %v4091, %v4087
        %v4093 = vlaneseq
        %v4094 = vshrl.u32 %v4093, 7
        %v4095 = vsub.s32 %v2248, %v4094
        %v4096 = vrot.slane %v3609, %v4095
        %v4097 = vsel %vm2253, %v4096, %v4092
        %v4098 = vlaneseq
        %v4099 = vshrl.u32 %v4098, 7
        %v4100 = vsub.s32 %v2255, %v4099
        %v4101 = vrot.slane %v3612, %v4100
        %v4102 = vsel %vm2260, %v4101, %v4097
        %v4103 = vlaneseq
        %v4104 = vshrl.u32 %v4103, 7
        %v4105 = vsub.s32 %v2262, %v4104
        %v4106 = vrot.slane %v3615, %v4105
        %v4107 = vsel %vm2267, %v4106, %v4102
        %v4108 = vlaneseq
        %v4109 = vshrl.u32 %v4108, 7
        %v4110 = vsub.s32 %v2269, %v4109
        %v4111 = vrot.slane %v3618, %v4110
        %v4112 = vsel %vm2274, %v4111, %v4107
        %v4113 = vlaneseq
        %v4114 = vshrl.u32 %v4113, 7
        %v4115 = vsub.s32 %v2276, %v4114
        %v4116 = vrot.slane %v3621, %v4115
        %v4117 = vsel %vm2281, %v4116, %v4112
        %v4118 = vlaneseq
        %v4119 = vshrl.u32 %v4118, 7
        %v4120 = vsub.s32 %v2283, %v4119
        %v4121 = vrot.slane %v3624, %v4120
        %v4122 = vsel %vm2288, %v4121, %v4117
        %v4123 = vlaneseq
        %v4124 = vshrl.u32 %v4123, 7
        %v4125 = vsub.s32 %v2290, %v4124
        %v4126 = vrot.slane %v3627, %v4125
        %v4127 = vsel %vm2295, %v4126, %v4122
        %v4128 = vlaneseq
        %v4129 = vshrl.u32 %v4128, 7
        %v4130 = vsub.s32 %v2297, %v4129
        %v4131 = vrot.slane %v3630, %v4130
        %v4132 = vsel %vm2302, %v4131, %v4127
        %v4133 = vlaneseq
        %v4134 = vshrl.u32 %v4133, 7
        %v4135 = vsub.s32 %v2304, %v4134
        %v4136 = vrot.slane %v3633, %v4135
        %v4137 = vsel %vm2309, %v4136, %v4132
        %v4138 = vlaneseq
        %v4139 = vshrl.u32 %v4138, 7
        %v4140 = vsub.s32 %v2311, %v4139
        %v4141 = vrot.slane %v3636, %v4140
        %v4142 = vsel %vm2316, %v4141, %v4137
        %v4143 = vlaneseq
        %v4144 = vshrl.u32 %v4143, 7
        %v4145 = vsub.s32 %v2318, %v4144
        %v4146 = vrot.slane %v3639, %v4145
        %v4147 = vsel %vm2323, %v4146, %v4142
        %v4148 = vlaneseq
        %v4149 = vshrl.u32 %v4148, 7
        %v4150 = vsub.s32 %v2215, %v4149
        %v4151 = vrot.slane %v3642, %v4150
        %v4152 = vlaneseq
        %v4153 = vshrl.u32 %v4152, 7
        %v4154 = vsub.s32 %v2220, %v4153
        %v4155 = vrot.slane %v3645, %v4154
        %v4156 = vsel %vm2225, %v4155, %v4151
        %v4157 = vlaneseq
        %v4158 = vshrl.u32 %v4157, 7
        %v4159 = vsub.s32 %v2227, %v4158
        %v4160 = vrot.slane %v3648, %v4159
        %v4161 = vsel %vm2232, %v4160, %v4156
        %v4162 = vlaneseq
        %v4163 = vshrl.u32 %v4162, 7
        %v4164 = vsub.s32 %v2234, %v4163
        %v4165 = vrot.slane %v3651, %v4164
        %v4166 = vsel %vm2239, %v4165, %v4161
        %v4167 = vlaneseq
        %v4168 = vshrl.u32 %v4167, 7
        %v4169 = vsub.s32 %v2241, %v4168
        %v4170 = vrot.slane %v3654, %v4169
        %v4171 = vsel %vm2246, %v4170, %v4166
        %v4172 = vlaneseq
        %v4173 = vshrl.u32 %v4172, 7
        %v4174 = vsub.s32 %v2248, %v4173
        %v4175 = vrot.slane %v3657, %v4174
        %v4176 = vsel %vm2253, %v4175, %v4171
        %v4177 = vlaneseq
        %v4178 = vshrl.u32 %v4177, 7
        %v4179 = vsub.s32 %v2255, %v4178
        %v4180 = vrot.slane %v3660, %v4179
        %v4181 = vsel %vm2260, %v4180, %v4176
        %v4182 = vlaneseq
        %v4183 = vshrl.u32 %v4182, 7
        %v4184 = vsub.s32 %v2262, %v4183
        %v4185 = vrot.slane %v3663, %v4184
        %v4186 = vsel %vm2267, %v4185, %v4181
        %v4187 = vlaneseq
        %v4188 = vshrl.u32 %v4187, 7
        %v4189 = vsub.s32 %v2269, %v4188
        %v4190 = vrot.slane %v3666, %v4189
        %v4191 = vsel %vm2274, %v4190, %v4186
        %v4192 = vlaneseq
        %v4193 = vshrl.u32 %v4192, 7
        %v4194 = vsub.s32 %v2276, %v4193
        %v4195 = vrot.slane %v3669, %v4194
        %v4196 = vsel %vm2281, %v4195, %v4191
        %v4197 = vlaneseq
        %v4198 = vshrl.u32 %v4197, 7
        %v4199 = vsub.s32 %v2283, %v4198
        %v4200 = vrot.slane %v3672, %v4199
        %v4201 = vsel %vm2288, %v4200, %v4196
        %v4202 = vlaneseq
        %v4203 = vshrl.u32 %v4202, 7
        %v4204 = vsub.s32 %v2290, %v4203
        %v4205 = vrot.slane %v3675, %v4204
        %v4206 = vsel %vm2295, %v4205, %v4201
        %v4207 = vlaneseq
        %v4208 = vshrl.u32 %v4207, 7
        %v4209 = vsub.s32 %v2297, %v4208
        %v4210 = vrot.slane %v3678, %v4209
        %v4211 = vsel %vm2302, %v4210, %v4206
        %v4212 = vlaneseq
        %v4213 = vshrl.u32 %v4212, 7
        %v4214 = vsub.s32 %v2304, %v4213
        %v4215 = vrot.slane %v3681, %v4214
        %v4216 = vsel %vm2309, %v4215, %v4211
        %v4217 = vlaneseq
        %v4218 = vshrl.u32 %v4217, 7
        %v4219 = vsub.s32 %v2311, %v4218
        %v4220 = vrot.slane %v3684, %v4219
        %v4221 = vsel %vm2316, %v4220, %v4216
        %v4222 = vlaneseq
        %v4223 = vshrl.u32 %v4222, 7
        %v4224 = vsub.s32 %v2318, %v4223
        %v4225 = vrot.slane %v3687, %v4224
        %v4226 = vsel %vm2323, %v4225, %v4221
        %v4227 = vlaneseq
        %v4228 = vshrl.u32 %v4227, 7
        %v4229 = vsub.s32 %v2215, %v4228
        %v4230 = vrot.slane %v3690, %v4229
        %v4231 = vlaneseq
        %v4232 = vshrl.u32 %v4231, 7
        %v4233 = vsub.s32 %v2220, %v4232
        %v4234 = vrot.slane %v3693, %v4233
        %v4235 = vsel %vm2225, %v4234, %v4230
        %v4236 = vlaneseq
        %v4237 = vshrl.u32 %v4236, 7
        %v4238 = vsub.s32 %v2227, %v4237
        %v4239 = vrot.slane %v3696, %v4238
        %v4240 = vsel %vm2232, %v4239, %v4235
        %v4241 = vlaneseq
        %v4242 = vshrl.u32 %v4241, 7
        %v4243 = vsub.s32 %v2234, %v4242
        %v4244 = vrot.slane %v3699, %v4243
        %v4245 = vsel %vm2239, %v4244, %v4240
        %v4246 = vlaneseq
        %v4247 = vshrl.u32 %v4246, 7
        %v4248 = vsub.s32 %v2241, %v4247
        %v4249 = vrot.slane %v3702, %v4248
        %v4250 = vsel %vm2246, %v4249, %v4245
        %v4251 = vlaneseq
        %v4252 = vshrl.u32 %v4251, 7
        %v4253 = vsub.s32 %v2248, %v4252
        %v4254 = vrot.slane %v3705, %v4253
        %v4255 = vsel %vm2253, %v4254, %v4250
        %v4256 = vlaneseq
        %v4257 = vshrl.u32 %v4256, 7
        %v4258 = vsub.s32 %v2255, %v4257
        %v4259 = vrot.slane %v3708, %v4258
        %v4260 = vsel %vm2260, %v4259, %v4255
        %v4261 = vlaneseq
        %v4262 = vshrl.u32 %v4261, 7
        %v4263 = vsub.s32 %v2262, %v4262
        %v4264 = vrot.slane %v3711, %v4263
        %v4265 = vsel %vm2267, %v4264, %v4260
        %v4266 = vlaneseq
        %v4267 = vshrl.u32 %v4266, 7
        %v4268 = vsub.s32 %v2269, %v4267
        %v4269 = vrot.slane %v3714, %v4268
        %v4270 = vsel %vm2274, %v4269, %v4265
        %v4271 = vlaneseq
        %v4272 = vshrl.u32 %v4271, 7
        %v4273 = vsub.s32 %v2276, %v4272
        %v4274 = vrot.slane %v3717, %v4273
        %v4275 = vsel %vm2281, %v4274, %v4270
        %v4276 = vlaneseq
        %v4277 = vshrl.u32 %v4276, 7
        %v4278 = vsub.s32 %v2283, %v4277
        %v4279 = vrot.slane %v3720, %v4278
        %v4280 = vsel %vm2288, %v4279, %v4275
        %v4281 = vlaneseq
        %v4282 = vshrl.u32 %v4281, 7
        %v4283 = vsub.s32 %v2290, %v4282
        %v4284 = vrot.slane %v3723, %v4283
        %v4285 = vsel %vm2295, %v4284, %v4280
        %v4286 = vlaneseq
        %v4287 = vshrl.u32 %v4286, 7
        %v4288 = vsub.s32 %v2297, %v4287
        %v4289 = vrot.slane %v3726, %v4288
        %v4290 = vsel %vm2302, %v4289, %v4285
        %v4291 = vlaneseq
        %v4292 = vshrl.u32 %v4291, 7
        %v4293 = vsub.s32 %v2304, %v4292
        %v4294 = vrot.slane %v3729, %v4293
        %v4295 = vsel %vm2309, %v4294, %v4290
        %v4296 = vlaneseq
        %v4297 = vshrl.u32 %v4296, 7
        %v4298 = vsub.s32 %v2311, %v4297
        %v4299 = vrot.slane %v3732, %v4298
        %v4300 = vsel %vm2316, %v4299, %v4295
        %v4301 = vlaneseq
        %v4302 = vshrl.u32 %v4301, 7
        %v4303 = vsub.s32 %v2318, %v4302
        %v4304 = vrot.slane %v3735, %v4303
        %v4305 = vsel %vm2323, %v4304, %v4300
        %v4306 = vlaneseq
        %v4307 = vshrl.u32 %v4306, 7
        %v4308 = vsub.s32 %v2215, %v4307
        %v4309 = vrot.slane %v3738, %v4308
        %v4310 = vlaneseq
        %v4311 = vshrl.u32 %v4310, 7
        %v4312 = vsub.s32 %v2220, %v4311
        %v4313 = vrot.slane %v3741, %v4312
        %v4314 = vsel %vm2225, %v4313, %v4309
        %v4315 = vlaneseq
        %v4316 = vshrl.u32 %v4315, 7
        %v4317 = vsub.s32 %v2227, %v4316
        %v4318 = vrot.slane %v3744, %v4317
        %v4319 = vsel %vm2232, %v4318, %v4314
        %v4320 = vlaneseq
        %v4321 = vshrl.u32 %v4320, 7
        %v4322 = vsub.s32 %v2234, %v4321
        %v4323 = vrot.slane %v3747, %v4322
        %v4324 = vsel %vm2239, %v4323, %v4319
        %v4325 = vlaneseq
        %v4326 = vshrl.u32 %v4325, 7
        %v4327 = vsub.s32 %v2241, %v4326
        %v4328 = vrot.slane %v3750, %v4327
        %v4329 = vsel %vm2246, %v4328, %v4324
        %v4330 = vlaneseq
        %v4331 = vshrl.u32 %v4330, 7
        %v4332 = vsub.s32 %v2248, %v4331
        %v4333 = vrot.slane %v3753, %v4332
        %v4334 = vsel %vm2253, %v4333, %v4329
        %v4335 = vlaneseq
        %v4336 = vshrl.u32 %v4335, 7
        %v4337 = vsub.s32 %v2255, %v4336
        %v4338 = vrot.slane %v3756, %v4337
        %v4339 = vsel %vm2260, %v4338, %v4334
        %v4340 = vlaneseq
        %v4341 = vshrl.u32 %v4340, 7
        %v4342 = vsub.s32 %v2262, %v4341
        %v4343 = vrot.slane %v3759, %v4342
        %v4344 = vsel %vm2267, %v4343, %v4339
        %v4345 = vlaneseq
        %v4346 = vshrl.u32 %v4345, 7
        %v4347 = vsub.s32 %v2269, %v4346
        %v4348 = vrot.slane %v3762, %v4347
        %v4349 = vsel %vm2274, %v4348, %v4344
        %v4350 = vlaneseq
        %v4351 = vshrl.u32 %v4350, 7
        %v4352 = vsub.s32 %v2276, %v4351
        %v4353 = vrot.slane %v3765, %v4352
        %v4354 = vsel %vm2281, %v4353, %v4349
        %v4355 = vlaneseq
        %v4356 = vshrl.u32 %v4355, 7
        %v4357 = vsub.s32 %v2283, %v4356
        %v4358 = vrot.slane %v3768, %v4357
        %v4359 = vsel %vm2288, %v4358, %v4354
        %v4360 = vlaneseq
        %v4361 = vshrl.u32 %v4360, 7
        %v4362 = vsub.s32 %v2290, %v4361
        %v4363 = vrot.slane %v3771, %v4362
        %v4364 = vsel %vm2295, %v4363, %v4359
        %v4365 = vlaneseq
        %v4366 = vshrl.u32 %v4365, 7
        %v4367 = vsub.s32 %v2297, %v4366
        %v4368 = vrot.slane %v3774, %v4367
        %v4369 = vsel %vm2302, %v4368, %v4364
        %v4370 = vlaneseq
        %v4371 = vshrl.u32 %v4370, 7
        %v4372 = vsub.s32 %v2304, %v4371
        %v4373 = vrot.slane %v3777, %v4372
        %v4374 = vsel %vm2309, %v4373, %v4369
        %v4375 = vlaneseq
        %v4376 = vshrl.u32 %v4375, 7
        %v4377 = vsub.s32 %v2311, %v4376
        %v4378 = vrot.slane %v3780, %v4377
        %v4379 = vsel %vm2316, %v4378, %v4374
        %v4380 = vlaneseq
        %v4381 = vshrl.u32 %v4380, 7
        %v4382 = vsub.s32 %v2318, %v4381
        %v4383 = vrot.slane %v3783, %v4382
        %v4384 = vsel %vm2323, %v4383, %v4379
        %v4385 = vlaneseq
        %v4386 = vshrl.u32 %v4385, 7
        %v4387 = vsub.s32 %v2215, %v4386
        %v4388 = vrot.slane %v3786, %v4387
        %v4389 = vlaneseq
        %v4390 = vshrl.u32 %v4389, 7
        %v4391 = vsub.s32 %v2220, %v4390
        %v4392 = vrot.slane %v3789, %v4391
        %v4393 = vsel %vm2225, %v4392, %v4388
        %v4394 = vlaneseq
        %v4395 = vshrl.u32 %v4394, 7
        %v4396 = vsub.s32 %v2227, %v4395
        %v4397 = vrot.slane %v3792, %v4396
        %v4398 = vsel %vm2232, %v4397, %v4393
        %v4399 = vlaneseq
        %v4400 = vshrl.u32 %v4399, 7
        %v4401 = vsub.s32 %v2234, %v4400
        %v4402 = vrot.slane %v3795, %v4401
        %v4403 = vsel %vm2239, %v4402, %v4398
        %v4404 = vlaneseq
        %v4405 = vshrl.u32 %v4404, 7
        %v4406 = vsub.s32 %v2241, %v4405
        %v4407 = vrot.slane %v3798, %v4406
        %v4408 = vsel %vm2246, %v4407, %v4403
        %v4409 = vlaneseq
        %v4410 = vshrl.u32 %v4409, 7
        %v4411 = vsub.s32 %v2248, %v4410
        %v4412 = vrot.slane %v3801, %v4411
        %v4413 = vsel %vm2253, %v4412, %v4408
        %v4414 = vlaneseq
        %v4415 = vshrl.u32 %v4414, 7
        %v4416 = vsub.s32 %v2255, %v4415
        %v4417 = vrot.slane %v3804, %v4416
        %v4418 = vsel %vm2260, %v4417, %v4413
        %v4419 = vlaneseq
        %v4420 = vshrl.u32 %v4419, 7
        %v4421 = vsub.s32 %v2262, %v4420
        %v4422 = vrot.slane %v3807, %v4421
        %v4423 = vsel %vm2267, %v4422, %v4418
        %v4424 = vlaneseq
        %v4425 = vshrl.u32 %v4424, 7
        %v4426 = vsub.s32 %v2269, %v4425
        %v4427 = vrot.slane %v3810, %v4426
        %v4428 = vsel %vm2274, %v4427, %v4423
        %v4429 = vlaneseq
        %v4430 = vshrl.u32 %v4429, 7
        %v4431 = vsub.s32 %v2276, %v4430
        %v4432 = vrot.slane %v3813, %v4431
        %v4433 = vsel %vm2281, %v4432, %v4428
        %v4434 = vlaneseq
        %v4435 = vshrl.u32 %v4434, 7
        %v4436 = vsub.s32 %v2283, %v4435
        %v4437 = vrot.slane %v3816, %v4436
        %v4438 = vsel %vm2288, %v4437, %v4433
        %v4439 = vlaneseq
        %v4440 = vshrl.u32 %v4439, 7
        %v4441 = vsub.s32 %v2290, %v4440
        %v4442 = vrot.slane %v3819, %v4441
        %v4443 = vsel %vm2295, %v4442, %v4438
        %v4444 = vlaneseq
        %v4445 = vshrl.u32 %v4444, 7
        %v4446 = vsub.s32 %v2297, %v4445
        %v4447 = vrot.slane %v3822, %v4446
        %v4448 = vsel %vm2302, %v4447, %v4443
        %v4449 = vlaneseq
        %v4450 = vshrl.u32 %v4449, 7
        %v4451 = vsub.s32 %v2304, %v4450
        %v4452 = vrot.slane %v3825, %v4451
        %v4453 = vsel %vm2309, %v4452, %v4448
        %v4454 = vlaneseq
        %v4455 = vshrl.u32 %v4454, 7
        %v4456 = vsub.s32 %v2311, %v4455
        %v4457 = vrot.slane %v3828, %v4456
        %v4458 = vsel %vm2316, %v4457, %v4453
        %v4459 = vlaneseq
        %v4460 = vshrl.u32 %v4459, 7
        %v4461 = vsub.s32 %v2318, %v4460
        %v4462 = vrot.slane %v3831, %v4461
        %v4463 = vsel %vm2323, %v4462, %v4458
        %v4464 = vsel %vm2878, %v3989, %v3910
        %v4465 = vsel %vm2880, %v4068, %v4464
        %v4466 = vsel %vm2882, %v4147, %v4465
        %v4467 = vsel %vm2884, %v4226, %v4466
        %v4468 = vsel %vm2886, %v4305, %v4467
        %v4469 = vsel %vm2888, %v4384, %v4468
        %v4470 = vsel %vm2890, %v4463, %v4469
        %4472 = vadd.xlane.f32.xlu0 %v4470
        %v4473 = vpop.xlane.xlu0 %4472
        %v4474 = vrcp.pop %v4473
        %v4476 = vlaneseq
        %v4477 = vshrl.u32 %v4476, 7
        %v4478 = vsub.s32 0, %v4477
        %v4479 = vrot.slane %v4474, %v4478
        %v4480 = vlaneseq
        %v4481 = vshrl.u32 %v4480, 7
        %v4482 = vsub.s32 1, %v4481
        %v4483 = vrot.slane %v4474, %v4482
        %v4484 = vlaneseq
        %v4485 = vshrl.u32 %v4484, 7
        %v4486 = vsub.s32 2, %v4485
        %v4487 = vrot.slane %v4474, %v4486
        %v4488 = vlaneseq
        %v4489 = vshrl.u32 %v4488, 7
        %v4490 = vsub.s32 3, %v4489
        %v4491 = vrot.slane %v4474, %v4490
        %v4492 = vlaneseq
        %v4493 = vshrl.u32 %v4492, 7
        %v4494 = vsub.s32 4, %v4493
        %v4495 = vrot.slane %v4474, %v4494
        %v4496 = vlaneseq
        %v4497 = vshrl.u32 %v4496, 7
        %v4498 = vsub.s32 5, %v4497
        %v4499 = vrot.slane %v4474, %v4498
        %v4500 = vlaneseq
        %v4501 = vshrl.u32 %v4500, 7
        %v4502 = vsub.s32 6, %v4501
        %v4503 = vrot.slane %v4474, %v4502
        %v4504 = vlaneseq
        %v4505 = vshrl.u32 %v4504, 7
        %v4506 = vsub.s32 7, %v4505
        %v4507 = vrot.slane %v4474, %v4506
        %v4516 = vmul.f32 %v3065, %v4479
        %v4517 = vmul.f32 %v3067, %v4479
        %v4518 = vmul.f32 %v3069, %v4479
        %v4519 = vmul.f32 %v3071, %v4479
        %v4520 = vmul.f32 %v3073, %v4479
        %v4521 = vmul.f32 %v3075, %v4479
        %v4522 = vmul.f32 %v3077, %v4479
        %v4523 = vmul.f32 %v3079, %v4479
        %v4524 = vmul.f32 %v3081, %v4479
        %v4525 = vmul.f32 %v3083, %v4479
        %v4526 = vmul.f32 %v3085, %v4479
        %v4527 = vmul.f32 %v3087, %v4479
        %v4528 = vmul.f32 %v3089, %v4479
        %v4529 = vmul.f32 %v3091, %v4479
        %v4530 = vmul.f32 %v3093, %v4479
        %v4531 = vmul.f32 %v3095, %v4479
        %v4532 = vmul.f32 %v3097, %v4483
        %v4533 = vmul.f32 %v3099, %v4483
        %v4534 = vmul.f32 %v3101, %v4483
        %v4535 = vmul.f32 %v3103, %v4483
        %v4536 = vmul.f32 %v3105, %v4483
        %v4537 = vmul.f32 %v3107, %v4483
        %v4538 = vmul.f32 %v3109, %v4483
        %v4539 = vmul.f32 %v3111, %v4483
        %v4540 = vmul.f32 %v3113, %v4483
        %v4541 = vmul.f32 %v3115, %v4483
        %v4542 = vmul.f32 %v3117, %v4483
        %v4543 = vmul.f32 %v3119, %v4483
        %v4544 = vmul.f32 %v3121, %v4483
        %v4545 = vmul.f32 %v3123, %v4483
        %v4546 = vmul.f32 %v3125, %v4483
        %v4547 = vmul.f32 %v3127, %v4483
        %v4548 = vmul.f32 %v3129, %v4487
        %v4549 = vmul.f32 %v3131, %v4487
        %v4550 = vmul.f32 %v3133, %v4487
        %v4551 = vmul.f32 %v3135, %v4487
        %v4552 = vmul.f32 %v3137, %v4487
        %v4553 = vmul.f32 %v3139, %v4487
        %v4554 = vmul.f32 %v3141, %v4487
        %v4555 = vmul.f32 %v3143, %v4487
        %v4556 = vmul.f32 %v3145, %v4487
        %v4557 = vmul.f32 %v3147, %v4487
        %v4558 = vmul.f32 %v3149, %v4487
        %v4559 = vmul.f32 %v3151, %v4487
        %v4560 = vmul.f32 %v3153, %v4487
        %v4561 = vmul.f32 %v3155, %v4487
        %v4562 = vmul.f32 %v3157, %v4487
        %v4563 = vmul.f32 %v3159, %v4487
        %v4564 = vmul.f32 %v3161, %v4491
        %v4565 = vmul.f32 %v3163, %v4491
        %v4566 = vmul.f32 %v3165, %v4491
        %v4567 = vmul.f32 %v3167, %v4491
        %v4568 = vmul.f32 %v3169, %v4491
        %v4569 = vmul.f32 %v3171, %v4491
        %v4570 = vmul.f32 %v3173, %v4491
        %v4571 = vmul.f32 %v3175, %v4491
        %v4572 = vmul.f32 %v3177, %v4491
        %v4573 = vmul.f32 %v3179, %v4491
        %v4574 = vmul.f32 %v3181, %v4491
        %v4575 = vmul.f32 %v3183, %v4491
        %v4576 = vmul.f32 %v3185, %v4491
        %v4577 = vmul.f32 %v3187, %v4491
        %v4578 = vmul.f32 %v3189, %v4491
        %v4579 = vmul.f32 %v3191, %v4491
        %v4580 = vmul.f32 %v3193, %v4495
        %v4581 = vmul.f32 %v3195, %v4495
        %v4582 = vmul.f32 %v3197, %v4495
        %v4583 = vmul.f32 %v3199, %v4495
        %v4584 = vmul.f32 %v3201, %v4495
        %v4585 = vmul.f32 %v3203, %v4495
        %v4586 = vmul.f32 %v3205, %v4495
        %v4587 = vmul.f32 %v3207, %v4495
        %v4588 = vmul.f32 %v3209, %v4495
        %v4589 = vmul.f32 %v3211, %v4495
        %v4590 = vmul.f32 %v3213, %v4495
        %v4591 = vmul.f32 %v3215, %v4495
        %v4592 = vmul.f32 %v3217, %v4495
        %v4593 = vmul.f32 %v3219, %v4495
        %v4594 = vmul.f32 %v3221, %v4495
        %v4595 = vmul.f32 %v3223, %v4495
        %v4596 = vmul.f32 %v3225, %v4499
        %v4597 = vmul.f32 %v3227, %v4499
        %v4598 = vmul.f32 %v3229, %v4499
        %v4599 = vmul.f32 %v3231, %v4499
        %v4600 = vmul.f32 %v3233, %v4499
        %v4601 = vmul.f32 %v3235, %v4499
        %v4602 = vmul.f32 %v3237, %v4499
        %v4603 = vmul.f32 %v3239, %v4499
        %v4604 = vmul.f32 %v3241, %v4499
        %v4605 = vmul.f32 %v3243, %v4499
        %v4606 = vmul.f32 %v3245, %v4499
        %v4607 = vmul.f32 %v3247, %v4499
        %v4608 = vmul.f32 %v3249, %v4499
        %v4609 = vmul.f32 %v3251, %v4499
        %v4610 = vmul.f32 %v3253, %v4499
        %v4611 = vmul.f32 %v3255, %v4499
        %v4612 = vmul.f32 %v3257, %v4503
        %v4613 = vmul.f32 %v3259, %v4503
        %v4614 = vmul.f32 %v3261, %v4503
        %v4615 = vmul.f32 %v3263, %v4503
        %v4616 = vmul.f32 %v3265, %v4503
        %v4617 = vmul.f32 %v3267, %v4503
        %v4618 = vmul.f32 %v3269, %v4503
        %v4619 = vmul.f32 %v3271, %v4503
        %v4620 = vmul.f32 %v3273, %v4503
        %v4621 = vmul.f32 %v3275, %v4503
        %v4622 = vmul.f32 %v3277, %v4503
        %v4623 = vmul.f32 %v3279, %v4503
        %v4624 = vmul.f32 %v3281, %v4503
        %v4625 = vmul.f32 %v3283, %v4503
        %v4626 = vmul.f32 %v3285, %v4503
        %v4627 = vmul.f32 %v3287, %v4503
        %v4628 = vmul.f32 %v3289, %v4507
        %v4629 = vmul.f32 %v3291, %v4507
        %v4630 = vmul.f32 %v3293, %v4507
        %v4631 = vmul.f32 %v3295, %v4507
        %v4632 = vmul.f32 %v3297, %v4507
        %v4633 = vmul.f32 %v3299, %v4507
        %v4634 = vmul.f32 %v3301, %v4507
        %v4635 = vmul.f32 %v3303, %v4507
        %v4636 = vmul.f32 %v3305, %v4507
        %v4637 = vmul.f32 %v3307, %v4507
        %v4638 = vmul.f32 %v3309, %v4507
        %v4639 = vmul.f32 %v3311, %v4507
        %v4640 = vmul.f32 %v3313, %v4507
        %v4641 = vmul.f32 %v3315, %v4507
        %v4642 = vmul.f32 %v3317, %v4507
        %v4643 = vmul.f32 %v3319, %v4507
        %4772 = vset.pattern.permute.xlu0 0
        %4773 = vperm.xlu0 %4772, %v4516
        %v4774 = vpop.permute.xlu0 %4773
        %4775 = vset.pattern.permute.xlu0 0
        %4776 = vperm.xlu0 %4775, %v4517
        %v4777 = vpop.permute.xlu0 %4776
        %4778 = vset.pattern.permute.xlu0 0
        %4779 = vperm.xlu0 %4778, %v4518
        %v4780 = vpop.permute.xlu0 %4779
        %4781 = vset.pattern.permute.xlu0 0
        %4782 = vperm.xlu0 %4781, %v4519
        %v4783 = vpop.permute.xlu0 %4782
        %4784 = vset.pattern.permute.xlu0 0
        %4785 = vperm.xlu0 %4784, %v4520
        %v4786 = vpop.permute.xlu0 %4785
        %4787 = vset.pattern.permute.xlu0 0
        %4788 = vperm.xlu0 %4787, %v4521
        %v4789 = vpop.permute.xlu0 %4788
        %4790 = vset.pattern.permute.xlu0 0
        %4791 = vperm.xlu0 %4790, %v4522
        %v4792 = vpop.permute.xlu0 %4791
        %4793 = vset.pattern.permute.xlu0 0
        %4794 = vperm.xlu0 %4793, %v4523
        %v4795 = vpop.permute.xlu0 %4794
        %4796 = vset.pattern.permute.xlu0 0
        %4797 = vperm.xlu0 %4796, %v4524
        %v4798 = vpop.permute.xlu0 %4797
        %4799 = vset.pattern.permute.xlu0 0
        %4800 = vperm.xlu0 %4799, %v4525
        %v4801 = vpop.permute.xlu0 %4800
        %4802 = vset.pattern.permute.xlu0 0
        %4803 = vperm.xlu0 %4802, %v4526
        %v4804 = vpop.permute.xlu0 %4803
        %4805 = vset.pattern.permute.xlu0 0
        %4806 = vperm.xlu0 %4805, %v4527
        %v4807 = vpop.permute.xlu0 %4806
        %4808 = vset.pattern.permute.xlu0 0
        %4809 = vperm.xlu0 %4808, %v4528
        %v4810 = vpop.permute.xlu0 %4809
        %4811 = vset.pattern.permute.xlu0 0
        %4812 = vperm.xlu0 %4811, %v4529
        %v4813 = vpop.permute.xlu0 %4812
        %4814 = vset.pattern.permute.xlu0 0
        %4815 = vperm.xlu0 %4814, %v4530
        %v4816 = vpop.permute.xlu0 %4815
        %4817 = vset.pattern.permute.xlu0 0
        %4818 = vperm.xlu0 %4817, %v4531
        %v4819 = vpop.permute.xlu0 %4818
        %4820 = vset.pattern.permute.xlu0 0
        %4821 = vperm.xlu0 %4820, %v4532
        %v4822 = vpop.permute.xlu0 %4821
        %4823 = vset.pattern.permute.xlu0 0
        %4824 = vperm.xlu0 %4823, %v4533
        %v4825 = vpop.permute.xlu0 %4824
        %4826 = vset.pattern.permute.xlu0 0
        %4827 = vperm.xlu0 %4826, %v4534
        %v4828 = vpop.permute.xlu0 %4827
        %4829 = vset.pattern.permute.xlu0 0
        %4830 = vperm.xlu0 %4829, %v4535
        %v4831 = vpop.permute.xlu0 %4830
        %4832 = vset.pattern.permute.xlu0 0
        %4833 = vperm.xlu0 %4832, %v4536
        %v4834 = vpop.permute.xlu0 %4833
        %4835 = vset.pattern.permute.xlu0 0
        %4836 = vperm.xlu0 %4835, %v4537
        %v4837 = vpop.permute.xlu0 %4836
        %4838 = vset.pattern.permute.xlu0 0
        %4839 = vperm.xlu0 %4838, %v4538
        %v4840 = vpop.permute.xlu0 %4839
        %4841 = vset.pattern.permute.xlu0 0
        %4842 = vperm.xlu0 %4841, %v4539
        %v4843 = vpop.permute.xlu0 %4842
        %4844 = vset.pattern.permute.xlu0 0
        %4845 = vperm.xlu0 %4844, %v4540
        %v4846 = vpop.permute.xlu0 %4845
        %4847 = vset.pattern.permute.xlu0 0
        %4848 = vperm.xlu0 %4847, %v4541
        %v4849 = vpop.permute.xlu0 %4848
        %4850 = vset.pattern.permute.xlu0 0
        %4851 = vperm.xlu0 %4850, %v4542
        %v4852 = vpop.permute.xlu0 %4851
        %4853 = vset.pattern.permute.xlu0 0
        %4854 = vperm.xlu0 %4853, %v4543
        %v4855 = vpop.permute.xlu0 %4854
        %4856 = vset.pattern.permute.xlu0 0
        %4857 = vperm.xlu0 %4856, %v4544
        %v4858 = vpop.permute.xlu0 %4857
        %4859 = vset.pattern.permute.xlu0 0
        %4860 = vperm.xlu0 %4859, %v4545
        %v4861 = vpop.permute.xlu0 %4860
        %4862 = vset.pattern.permute.xlu0 0
        %4863 = vperm.xlu0 %4862, %v4546
        %v4864 = vpop.permute.xlu0 %4863
        %4865 = vset.pattern.permute.xlu0 0
        %4866 = vperm.xlu0 %4865, %v4547
        %v4867 = vpop.permute.xlu0 %4866
        %4868 = vset.pattern.permute.xlu0 0
        %4869 = vperm.xlu0 %4868, %v4548
        %v4870 = vpop.permute.xlu0 %4869
        %4871 = vset.pattern.permute.xlu0 0
        %4872 = vperm.xlu0 %4871, %v4549
        %v4873 = vpop.permute.xlu0 %4872
        %4874 = vset.pattern.permute.xlu0 0
        %4875 = vperm.xlu0 %4874, %v4550
        %v4876 = vpop.permute.xlu0 %4875
        %4877 = vset.pattern.permute.xlu0 0
        %4878 = vperm.xlu0 %4877, %v4551
        %v4879 = vpop.permute.xlu0 %4878
        %4880 = vset.pattern.permute.xlu0 0
        %4881 = vperm.xlu0 %4880, %v4552
        %v4882 = vpop.permute.xlu0 %4881
        %4883 = vset.pattern.permute.xlu0 0
        %4884 = vperm.xlu0 %4883, %v4553
        %v4885 = vpop.permute.xlu0 %4884
        %4886 = vset.pattern.permute.xlu0 0
        %4887 = vperm.xlu0 %4886, %v4554
        %v4888 = vpop.permute.xlu0 %4887
        %4889 = vset.pattern.permute.xlu0 0
        %4890 = vperm.xlu0 %4889, %v4555
        %v4891 = vpop.permute.xlu0 %4890
        %4892 = vset.pattern.permute.xlu0 0
        %4893 = vperm.xlu0 %4892, %v4556
        %v4894 = vpop.permute.xlu0 %4893
        %4895 = vset.pattern.permute.xlu0 0
        %4896 = vperm.xlu0 %4895, %v4557
        %v4897 = vpop.permute.xlu0 %4896
        %4898 = vset.pattern.permute.xlu0 0
        %4899 = vperm.xlu0 %4898, %v4558
        %v4900 = vpop.permute.xlu0 %4899
        %4901 = vset.pattern.permute.xlu0 0
        %4902 = vperm.xlu0 %4901, %v4559
        %v4903 = vpop.permute.xlu0 %4902
        %4904 = vset.pattern.permute.xlu0 0
        %4905 = vperm.xlu0 %4904, %v4560
        %v4906 = vpop.permute.xlu0 %4905
        %4907 = vset.pattern.permute.xlu0 0
        %4908 = vperm.xlu0 %4907, %v4561
        %v4909 = vpop.permute.xlu0 %4908
        %4910 = vset.pattern.permute.xlu0 0
        %4911 = vperm.xlu0 %4910, %v4562
        %v4912 = vpop.permute.xlu0 %4911
        %4913 = vset.pattern.permute.xlu0 0
        %4914 = vperm.xlu0 %4913, %v4563
        %v4915 = vpop.permute.xlu0 %4914
        %4916 = vset.pattern.permute.xlu0 0
        %4917 = vperm.xlu0 %4916, %v4564
        %v4918 = vpop.permute.xlu0 %4917
        %4919 = vset.pattern.permute.xlu0 0
        %4920 = vperm.xlu0 %4919, %v4565
        %v4921 = vpop.permute.xlu0 %4920
        %4922 = vset.pattern.permute.xlu0 0
        %4923 = vperm.xlu0 %4922, %v4566
        %v4924 = vpop.permute.xlu0 %4923
        %4925 = vset.pattern.permute.xlu0 0
        %4926 = vperm.xlu0 %4925, %v4567
        %v4927 = vpop.permute.xlu0 %4926
        %4928 = vset.pattern.permute.xlu0 0
        %4929 = vperm.xlu0 %4928, %v4568
        %v4930 = vpop.permute.xlu0 %4929
        %4931 = vset.pattern.permute.xlu0 0
        %4932 = vperm.xlu0 %4931, %v4569
        %v4933 = vpop.permute.xlu0 %4932
        %4934 = vset.pattern.permute.xlu0 0
        %4935 = vperm.xlu0 %4934, %v4570
        %v4936 = vpop.permute.xlu0 %4935
        %4937 = vset.pattern.permute.xlu0 0
        %4938 = vperm.xlu0 %4937, %v4571
        %v4939 = vpop.permute.xlu0 %4938
        %4940 = vset.pattern.permute.xlu0 0
        %4941 = vperm.xlu0 %4940, %v4572
        %v4942 = vpop.permute.xlu0 %4941
        %4943 = vset.pattern.permute.xlu0 0
        %4944 = vperm.xlu0 %4943, %v4573
        %v4945 = vpop.permute.xlu0 %4944
        %4946 = vset.pattern.permute.xlu0 0
        %4947 = vperm.xlu0 %4946, %v4574
        %v4948 = vpop.permute.xlu0 %4947
        %4949 = vset.pattern.permute.xlu0 0
        %4950 = vperm.xlu0 %4949, %v4575
        %v4951 = vpop.permute.xlu0 %4950
        %4952 = vset.pattern.permute.xlu0 0
        %4953 = vperm.xlu0 %4952, %v4576
        %v4954 = vpop.permute.xlu0 %4953
        %4955 = vset.pattern.permute.xlu0 0
        %4956 = vperm.xlu0 %4955, %v4577
        %v4957 = vpop.permute.xlu0 %4956
        %4958 = vset.pattern.permute.xlu0 0
        %4959 = vperm.xlu0 %4958, %v4578
        %v4960 = vpop.permute.xlu0 %4959
        %4961 = vset.pattern.permute.xlu0 0
        %4962 = vperm.xlu0 %4961, %v4579
        %v4963 = vpop.permute.xlu0 %4962
        %4964 = vset.pattern.permute.xlu0 0
        %4965 = vperm.xlu0 %4964, %v4580
        %v4966 = vpop.permute.xlu0 %4965
        %4967 = vset.pattern.permute.xlu0 0
        %4968 = vperm.xlu0 %4967, %v4581
        %v4969 = vpop.permute.xlu0 %4968
        %4970 = vset.pattern.permute.xlu0 0
        %4971 = vperm.xlu0 %4970, %v4582
        %v4972 = vpop.permute.xlu0 %4971
        %4973 = vset.pattern.permute.xlu0 0
        %4974 = vperm.xlu0 %4973, %v4583
        %v4975 = vpop.permute.xlu0 %4974
        %4976 = vset.pattern.permute.xlu0 0
        %4977 = vperm.xlu0 %4976, %v4584
        %v4978 = vpop.permute.xlu0 %4977
        %4979 = vset.pattern.permute.xlu0 0
        %4980 = vperm.xlu0 %4979, %v4585
        %v4981 = vpop.permute.xlu0 %4980
        %4982 = vset.pattern.permute.xlu0 0
        %4983 = vperm.xlu0 %4982, %v4586
        %v4984 = vpop.permute.xlu0 %4983
        %4985 = vset.pattern.permute.xlu0 0
        %4986 = vperm.xlu0 %4985, %v4587
        %v4987 = vpop.permute.xlu0 %4986
        %4988 = vset.pattern.permute.xlu0 0
        %4989 = vperm.xlu0 %4988, %v4588
        %v4990 = vpop.permute.xlu0 %4989
        %4991 = vset.pattern.permute.xlu0 0
        %4992 = vperm.xlu0 %4991, %v4589
        %v4993 = vpop.permute.xlu0 %4992
        %4994 = vset.pattern.permute.xlu0 0
        %4995 = vperm.xlu0 %4994, %v4590
        %v4996 = vpop.permute.xlu0 %4995
        %4997 = vset.pattern.permute.xlu0 0
        %4998 = vperm.xlu0 %4997, %v4591
        %v4999 = vpop.permute.xlu0 %4998
        %5000 = vset.pattern.permute.xlu0 0
        %5001 = vperm.xlu0 %5000, %v4592
        %v5002 = vpop.permute.xlu0 %5001
        %5003 = vset.pattern.permute.xlu0 0
        %5004 = vperm.xlu0 %5003, %v4593
        %v5005 = vpop.permute.xlu0 %5004
        %5006 = vset.pattern.permute.xlu0 0
        %5007 = vperm.xlu0 %5006, %v4594
        %v5008 = vpop.permute.xlu0 %5007
        %5009 = vset.pattern.permute.xlu0 0
        %5010 = vperm.xlu0 %5009, %v4595
        %v5011 = vpop.permute.xlu0 %5010
        %5012 = vset.pattern.permute.xlu0 0
        %5013 = vperm.xlu0 %5012, %v4596
        %v5014 = vpop.permute.xlu0 %5013
        %5015 = vset.pattern.permute.xlu0 0
        %5016 = vperm.xlu0 %5015, %v4597
        %v5017 = vpop.permute.xlu0 %5016
        %5018 = vset.pattern.permute.xlu0 0
        %5019 = vperm.xlu0 %5018, %v4598
        %v5020 = vpop.permute.xlu0 %5019
        %5021 = vset.pattern.permute.xlu0 0
        %5022 = vperm.xlu0 %5021, %v4599
        %v5023 = vpop.permute.xlu0 %5022
        %5024 = vset.pattern.permute.xlu0 0
        %5025 = vperm.xlu0 %5024, %v4600
        %v5026 = vpop.permute.xlu0 %5025
        %5027 = vset.pattern.permute.xlu0 0
        %5028 = vperm.xlu0 %5027, %v4601
        %v5029 = vpop.permute.xlu0 %5028
        %5030 = vset.pattern.permute.xlu0 0
        %5031 = vperm.xlu0 %5030, %v4602
        %v5032 = vpop.permute.xlu0 %5031
        %5033 = vset.pattern.permute.xlu0 0
        %5034 = vperm.xlu0 %5033, %v4603
        %v5035 = vpop.permute.xlu0 %5034
        %5036 = vset.pattern.permute.xlu0 0
        %5037 = vperm.xlu0 %5036, %v4604
        %v5038 = vpop.permute.xlu0 %5037
        %5039 = vset.pattern.permute.xlu0 0
        %5040 = vperm.xlu0 %5039, %v4605
        %v5041 = vpop.permute.xlu0 %5040
        %5042 = vset.pattern.permute.xlu0 0
        %5043 = vperm.xlu0 %5042, %v4606
        %v5044 = vpop.permute.xlu0 %5043
        %5045 = vset.pattern.permute.xlu0 0
        %5046 = vperm.xlu0 %5045, %v4607
        %v5047 = vpop.permute.xlu0 %5046
        %5048 = vset.pattern.permute.xlu0 0
        %5049 = vperm.xlu0 %5048, %v4608
        %v5050 = vpop.permute.xlu0 %5049
        %5051 = vset.pattern.permute.xlu0 0
        %5052 = vperm.xlu0 %5051, %v4609
        %v5053 = vpop.permute.xlu0 %5052
        %5054 = vset.pattern.permute.xlu0 0
        %5055 = vperm.xlu0 %5054, %v4610
        %v5056 = vpop.permute.xlu0 %5055
        %5057 = vset.pattern.permute.xlu0 0
        %5058 = vperm.xlu0 %5057, %v4611
        %v5059 = vpop.permute.xlu0 %5058
        %5060 = vset.pattern.permute.xlu0 0
        %5061 = vperm.xlu0 %5060, %v4612
        %v5062 = vpop.permute.xlu0 %5061
        %5063 = vset.pattern.permute.xlu0 0
        %5064 = vperm.xlu0 %5063, %v4613
        %v5065 = vpop.permute.xlu0 %5064
        %5066 = vset.pattern.permute.xlu0 0
        %5067 = vperm.xlu0 %5066, %v4614
        %v5068 = vpop.permute.xlu0 %5067
        %5069 = vset.pattern.permute.xlu0 0
        %5070 = vperm.xlu0 %5069, %v4615
        %v5071 = vpop.permute.xlu0 %5070
        %5072 = vset.pattern.permute.xlu0 0
        %5073 = vperm.xlu0 %5072, %v4616
        %v5074 = vpop.permute.xlu0 %5073
        %5075 = vset.pattern.permute.xlu0 0
        %5076 = vperm.xlu0 %5075, %v4617
        %v5077 = vpop.permute.xlu0 %5076
        %5078 = vset.pattern.permute.xlu0 0
        %5079 = vperm.xlu0 %5078, %v4618
        %v5080 = vpop.permute.xlu0 %5079
        %5081 = vset.pattern.permute.xlu0 0
        %5082 = vperm.xlu0 %5081, %v4619
        %v5083 = vpop.permute.xlu0 %5082
        %5084 = vset.pattern.permute.xlu0 0
        %5085 = vperm.xlu0 %5084, %v4620
        %v5086 = vpop.permute.xlu0 %5085
        %5087 = vset.pattern.permute.xlu0 0
        %5088 = vperm.xlu0 %5087, %v4621
        %v5089 = vpop.permute.xlu0 %5088
        %5090 = vset.pattern.permute.xlu0 0
        %5091 = vperm.xlu0 %5090, %v4622
        %v5092 = vpop.permute.xlu0 %5091
        %5093 = vset.pattern.permute.xlu0 0
        %5094 = vperm.xlu0 %5093, %v4623
        %v5095 = vpop.permute.xlu0 %5094
        %5096 = vset.pattern.permute.xlu0 0
        %5097 = vperm.xlu0 %5096, %v4624
        %v5098 = vpop.permute.xlu0 %5097
        %5099 = vset.pattern.permute.xlu0 0
        %5100 = vperm.xlu0 %5099, %v4625
        %v5101 = vpop.permute.xlu0 %5100
        %5102 = vset.pattern.permute.xlu0 0
        %5103 = vperm.xlu0 %5102, %v4626
        %v5104 = vpop.permute.xlu0 %5103
        %5105 = vset.pattern.permute.xlu0 0
        %5106 = vperm.xlu0 %5105, %v4627
        %v5107 = vpop.permute.xlu0 %5106
        %5108 = vset.pattern.permute.xlu0 0
        %5109 = vperm.xlu0 %5108, %v4628
        %v5110 = vpop.permute.xlu0 %5109
        %5111 = vset.pattern.permute.xlu0 0
        %5112 = vperm.xlu0 %5111, %v4629
        %v5113 = vpop.permute.xlu0 %5112
        %5114 = vset.pattern.permute.xlu0 0
        %5115 = vperm.xlu0 %5114, %v4630
        %v5116 = vpop.permute.xlu0 %5115
        %5117 = vset.pattern.permute.xlu0 0
        %5118 = vperm.xlu0 %5117, %v4631
        %v5119 = vpop.permute.xlu0 %5118
        %5120 = vset.pattern.permute.xlu0 0
        %5121 = vperm.xlu0 %5120, %v4632
        %v5122 = vpop.permute.xlu0 %5121
        %5123 = vset.pattern.permute.xlu0 0
        %5124 = vperm.xlu0 %5123, %v4633
        %v5125 = vpop.permute.xlu0 %5124
        %5126 = vset.pattern.permute.xlu0 0
        %5127 = vperm.xlu0 %5126, %v4634
        %v5128 = vpop.permute.xlu0 %5127
        %5129 = vset.pattern.permute.xlu0 0
        %5130 = vperm.xlu0 %5129, %v4635
        %v5131 = vpop.permute.xlu0 %5130
        %5132 = vset.pattern.permute.xlu0 0
        %5133 = vperm.xlu0 %5132, %v4636
        %v5134 = vpop.permute.xlu0 %5133
        %5135 = vset.pattern.permute.xlu0 0
        %5136 = vperm.xlu0 %5135, %v4637
        %v5137 = vpop.permute.xlu0 %5136
        %5138 = vset.pattern.permute.xlu0 0
        %5139 = vperm.xlu0 %5138, %v4638
        %v5140 = vpop.permute.xlu0 %5139
        %5141 = vset.pattern.permute.xlu0 0
        %5142 = vperm.xlu0 %5141, %v4639
        %v5143 = vpop.permute.xlu0 %5142
        %5144 = vset.pattern.permute.xlu0 0
        %5145 = vperm.xlu0 %5144, %v4640
        %v5146 = vpop.permute.xlu0 %5145
        %5147 = vset.pattern.permute.xlu0 0
        %5148 = vperm.xlu0 %5147, %v4641
        %v5149 = vpop.permute.xlu0 %5148
        %5150 = vset.pattern.permute.xlu0 0
        %5151 = vperm.xlu0 %5150, %v4642
        %v5152 = vpop.permute.xlu0 %5151
        %5153 = vset.pattern.permute.xlu0 0
        %5154 = vperm.xlu0 %5153, %v4643
        %v5155 = vpop.permute.xlu0 %5154
        %v5156 = vlaneseq
        %v5157 = vshrl.u32 %v5156, 7
        %v5158 = vsub.s32 %v2215, %v5157
        %v5159 = vrot.slane %v4774, %v5158
        %v5160 = vlaneseq
        %v5161 = vshrl.u32 %v5160, 7
        %v5162 = vsub.s32 %v2220, %v5161
        %v5163 = vrot.slane %v4777, %v5162
        %v5164 = vsel %vm2225, %v5163, %v5159
        %v5165 = vlaneseq
        %v5166 = vshrl.u32 %v5165, 7
        %v5167 = vsub.s32 %v2227, %v5166
        %v5168 = vrot.slane %v4780, %v5167
        %v5169 = vsel %vm2232, %v5168, %v5164
        %v5170 = vlaneseq
        %v5171 = vshrl.u32 %v5170, 7
        %v5172 = vsub.s32 %v2234, %v5171
        %v5173 = vrot.slane %v4783, %v5172
        %v5174 = vsel %vm2239, %v5173, %v5169
        %v5175 = vlaneseq
        %v5176 = vshrl.u32 %v5175, 7
        %v5177 = vsub.s32 %v2241, %v5176
        %v5178 = vrot.slane %v4786, %v5177
        %v5179 = vsel %vm2246, %v5178, %v5174
        %v5180 = vlaneseq
        %v5181 = vshrl.u32 %v5180, 7
        %v5182 = vsub.s32 %v2248, %v5181
        %v5183 = vrot.slane %v4789, %v5182
        %v5184 = vsel %vm2253, %v5183, %v5179
        %v5185 = vlaneseq
        %v5186 = vshrl.u32 %v5185, 7
        %v5187 = vsub.s32 %v2255, %v5186
        %v5188 = vrot.slane %v4792, %v5187
        %v5189 = vsel %vm2260, %v5188, %v5184
        %v5190 = vlaneseq
        %v5191 = vshrl.u32 %v5190, 7
        %v5192 = vsub.s32 %v2262, %v5191
        %v5193 = vrot.slane %v4795, %v5192
        %v5194 = vsel %vm2267, %v5193, %v5189
        %v5195 = vlaneseq
        %v5196 = vshrl.u32 %v5195, 7
        %v5197 = vsub.s32 %v2269, %v5196
        %v5198 = vrot.slane %v4798, %v5197
        %v5199 = vsel %vm2274, %v5198, %v5194
        %v5200 = vlaneseq
        %v5201 = vshrl.u32 %v5200, 7
        %v5202 = vsub.s32 %v2276, %v5201
        %v5203 = vrot.slane %v4801, %v5202
        %v5204 = vsel %vm2281, %v5203, %v5199
        %v5205 = vlaneseq
        %v5206 = vshrl.u32 %v5205, 7
        %v5207 = vsub.s32 %v2283, %v5206
        %v5208 = vrot.slane %v4804, %v5207
        %v5209 = vsel %vm2288, %v5208, %v5204
        %v5210 = vlaneseq
        %v5211 = vshrl.u32 %v5210, 7
        %v5212 = vsub.s32 %v2290, %v5211
        %v5213 = vrot.slane %v4807, %v5212
        %v5214 = vsel %vm2295, %v5213, %v5209
        %v5215 = vlaneseq
        %v5216 = vshrl.u32 %v5215, 7
        %v5217 = vsub.s32 %v2297, %v5216
        %v5218 = vrot.slane %v4810, %v5217
        %v5219 = vsel %vm2302, %v5218, %v5214
        %v5220 = vlaneseq
        %v5221 = vshrl.u32 %v5220, 7
        %v5222 = vsub.s32 %v2304, %v5221
        %v5223 = vrot.slane %v4813, %v5222
        %v5224 = vsel %vm2309, %v5223, %v5219
        %v5225 = vlaneseq
        %v5226 = vshrl.u32 %v5225, 7
        %v5227 = vsub.s32 %v2311, %v5226
        %v5228 = vrot.slane %v4816, %v5227
        %v5229 = vsel %vm2316, %v5228, %v5224
        %v5230 = vlaneseq
        %v5231 = vshrl.u32 %v5230, 7
        %v5232 = vsub.s32 %v2318, %v5231
        %v5233 = vrot.slane %v4819, %v5232
        %v5234 = vsel %vm2323, %v5233, %v5229
        %v5235 = vlaneseq
        %v5236 = vshrl.u32 %v5235, 7
        %v5237 = vsub.s32 %v2215, %v5236
        %v5238 = vrot.slane %v4822, %v5237
        %v5239 = vlaneseq
        %v5240 = vshrl.u32 %v5239, 7
        %v5241 = vsub.s32 %v2220, %v5240
        %v5242 = vrot.slane %v4825, %v5241
        %v5243 = vsel %vm2225, %v5242, %v5238
        %v5244 = vlaneseq
        %v5245 = vshrl.u32 %v5244, 7
        %v5246 = vsub.s32 %v2227, %v5245
        %v5247 = vrot.slane %v4828, %v5246
        %v5248 = vsel %vm2232, %v5247, %v5243
        %v5249 = vlaneseq
        %v5250 = vshrl.u32 %v5249, 7
        %v5251 = vsub.s32 %v2234, %v5250
        %v5252 = vrot.slane %v4831, %v5251
        %v5253 = vsel %vm2239, %v5252, %v5248
        %v5254 = vlaneseq
        %v5255 = vshrl.u32 %v5254, 7
        %v5256 = vsub.s32 %v2241, %v5255
        %v5257 = vrot.slane %v4834, %v5256
        %v5258 = vsel %vm2246, %v5257, %v5253
        %v5259 = vlaneseq
        %v5260 = vshrl.u32 %v5259, 7
        %v5261 = vsub.s32 %v2248, %v5260
        %v5262 = vrot.slane %v4837, %v5261
        %v5263 = vsel %vm2253, %v5262, %v5258
        %v5264 = vlaneseq
        %v5265 = vshrl.u32 %v5264, 7
        %v5266 = vsub.s32 %v2255, %v5265
        %v5267 = vrot.slane %v4840, %v5266
        %v5268 = vsel %vm2260, %v5267, %v5263
        %v5269 = vlaneseq
        %v5270 = vshrl.u32 %v5269, 7
        %v5271 = vsub.s32 %v2262, %v5270
        %v5272 = vrot.slane %v4843, %v5271
        %v5273 = vsel %vm2267, %v5272, %v5268
        %v5274 = vlaneseq
        %v5275 = vshrl.u32 %v5274, 7
        %v5276 = vsub.s32 %v2269, %v5275
        %v5277 = vrot.slane %v4846, %v5276
        %v5278 = vsel %vm2274, %v5277, %v5273
        %v5279 = vlaneseq
        %v5280 = vshrl.u32 %v5279, 7
        %v5281 = vsub.s32 %v2276, %v5280
        %v5282 = vrot.slane %v4849, %v5281
        %v5283 = vsel %vm2281, %v5282, %v5278
        %v5284 = vlaneseq
        %v5285 = vshrl.u32 %v5284, 7
        %v5286 = vsub.s32 %v2283, %v5285
        %v5287 = vrot.slane %v4852, %v5286
        %v5288 = vsel %vm2288, %v5287, %v5283
        %v5289 = vlaneseq
        %v5290 = vshrl.u32 %v5289, 7
        %v5291 = vsub.s32 %v2290, %v5290
        %v5292 = vrot.slane %v4855, %v5291
        %v5293 = vsel %vm2295, %v5292, %v5288
        %v5294 = vlaneseq
        %v5295 = vshrl.u32 %v5294, 7
        %v5296 = vsub.s32 %v2297, %v5295
        %v5297 = vrot.slane %v4858, %v5296
        %v5298 = vsel %vm2302, %v5297, %v5293
        %v5299 = vlaneseq
        %v5300 = vshrl.u32 %v5299, 7
        %v5301 = vsub.s32 %v2304, %v5300
        %v5302 = vrot.slane %v4861, %v5301
        %v5303 = vsel %vm2309, %v5302, %v5298
        %v5304 = vlaneseq
        %v5305 = vshrl.u32 %v5304, 7
        %v5306 = vsub.s32 %v2311, %v5305
        %v5307 = vrot.slane %v4864, %v5306
        %v5308 = vsel %vm2316, %v5307, %v5303
        %v5309 = vlaneseq
        %v5310 = vshrl.u32 %v5309, 7
        %v5311 = vsub.s32 %v2318, %v5310
        %v5312 = vrot.slane %v4867, %v5311
        %v5313 = vsel %vm2323, %v5312, %v5308
        %v5314 = vlaneseq
        %v5315 = vshrl.u32 %v5314, 7
        %v5316 = vsub.s32 %v2215, %v5315
        %v5317 = vrot.slane %v4870, %v5316
        %v5318 = vlaneseq
        %v5319 = vshrl.u32 %v5318, 7
        %v5320 = vsub.s32 %v2220, %v5319
        %v5321 = vrot.slane %v4873, %v5320
        %v5322 = vsel %vm2225, %v5321, %v5317
        %v5323 = vlaneseq
        %v5324 = vshrl.u32 %v5323, 7
        %v5325 = vsub.s32 %v2227, %v5324
        %v5326 = vrot.slane %v4876, %v5325
        %v5327 = vsel %vm2232, %v5326, %v5322
        %v5328 = vlaneseq
        %v5329 = vshrl.u32 %v5328, 7
        %v5330 = vsub.s32 %v2234, %v5329
        %v5331 = vrot.slane %v4879, %v5330
        %v5332 = vsel %vm2239, %v5331, %v5327
        %v5333 = vlaneseq
        %v5334 = vshrl.u32 %v5333, 7
        %v5335 = vsub.s32 %v2241, %v5334
        %v5336 = vrot.slane %v4882, %v5335
        %v5337 = vsel %vm2246, %v5336, %v5332
        %v5338 = vlaneseq
        %v5339 = vshrl.u32 %v5338, 7
        %v5340 = vsub.s32 %v2248, %v5339
        %v5341 = vrot.slane %v4885, %v5340
        %v5342 = vsel %vm2253, %v5341, %v5337
        %v5343 = vlaneseq
        %v5344 = vshrl.u32 %v5343, 7
        %v5345 = vsub.s32 %v2255, %v5344
        %v5346 = vrot.slane %v4888, %v5345
        %v5347 = vsel %vm2260, %v5346, %v5342
        %v5348 = vlaneseq
        %v5349 = vshrl.u32 %v5348, 7
        %v5350 = vsub.s32 %v2262, %v5349
        %v5351 = vrot.slane %v4891, %v5350
        %v5352 = vsel %vm2267, %v5351, %v5347
        %v5353 = vlaneseq
        %v5354 = vshrl.u32 %v5353, 7
        %v5355 = vsub.s32 %v2269, %v5354
        %v5356 = vrot.slane %v4894, %v5355
        %v5357 = vsel %vm2274, %v5356, %v5352
        %v5358 = vlaneseq
        %v5359 = vshrl.u32 %v5358, 7
        %v5360 = vsub.s32 %v2276, %v5359
        %v5361 = vrot.slane %v4897, %v5360
        %v5362 = vsel %vm2281, %v5361, %v5357
        %v5363 = vlaneseq
        %v5364 = vshrl.u32 %v5363, 7
        %v5365 = vsub.s32 %v2283, %v5364
        %v5366 = vrot.slane %v4900, %v5365
        %v5367 = vsel %vm2288, %v5366, %v5362
        %v5368 = vlaneseq
        %v5369 = vshrl.u32 %v5368, 7
        %v5370 = vsub.s32 %v2290, %v5369
        %v5371 = vrot.slane %v4903, %v5370
        %v5372 = vsel %vm2295, %v5371, %v5367
        %v5373 = vlaneseq
        %v5374 = vshrl.u32 %v5373, 7
        %v5375 = vsub.s32 %v2297, %v5374
        %v5376 = vrot.slane %v4906, %v5375
        %v5377 = vsel %vm2302, %v5376, %v5372
        %v5378 = vlaneseq
        %v5379 = vshrl.u32 %v5378, 7
        %v5380 = vsub.s32 %v2304, %v5379
        %v5381 = vrot.slane %v4909, %v5380
        %v5382 = vsel %vm2309, %v5381, %v5377
        %v5383 = vlaneseq
        %v5384 = vshrl.u32 %v5383, 7
        %v5385 = vsub.s32 %v2311, %v5384
        %v5386 = vrot.slane %v4912, %v5385
        %v5387 = vsel %vm2316, %v5386, %v5382
        %v5388 = vlaneseq
        %v5389 = vshrl.u32 %v5388, 7
        %v5390 = vsub.s32 %v2318, %v5389
        %v5391 = vrot.slane %v4915, %v5390
        %v5392 = vsel %vm2323, %v5391, %v5387
        %v5393 = vlaneseq
        %v5394 = vshrl.u32 %v5393, 7
        %v5395 = vsub.s32 %v2215, %v5394
        %v5396 = vrot.slane %v4918, %v5395
        %v5397 = vlaneseq
        %v5398 = vshrl.u32 %v5397, 7
        %v5399 = vsub.s32 %v2220, %v5398
        %v5400 = vrot.slane %v4921, %v5399
        %v5401 = vsel %vm2225, %v5400, %v5396
        %v5402 = vlaneseq
        %v5403 = vshrl.u32 %v5402, 7
        %v5404 = vsub.s32 %v2227, %v5403
        %v5405 = vrot.slane %v4924, %v5404
        %v5406 = vsel %vm2232, %v5405, %v5401
        %v5407 = vlaneseq
        %v5408 = vshrl.u32 %v5407, 7
        %v5409 = vsub.s32 %v2234, %v5408
        %v5410 = vrot.slane %v4927, %v5409
        %v5411 = vsel %vm2239, %v5410, %v5406
        %v5412 = vlaneseq
        %v5413 = vshrl.u32 %v5412, 7
        %v5414 = vsub.s32 %v2241, %v5413
        %v5415 = vrot.slane %v4930, %v5414
        %v5416 = vsel %vm2246, %v5415, %v5411
        %v5417 = vlaneseq
        %v5418 = vshrl.u32 %v5417, 7
        %v5419 = vsub.s32 %v2248, %v5418
        %v5420 = vrot.slane %v4933, %v5419
        %v5421 = vsel %vm2253, %v5420, %v5416
        %v5422 = vlaneseq
        %v5423 = vshrl.u32 %v5422, 7
        %v5424 = vsub.s32 %v2255, %v5423
        %v5425 = vrot.slane %v4936, %v5424
        %v5426 = vsel %vm2260, %v5425, %v5421
        %v5427 = vlaneseq
        %v5428 = vshrl.u32 %v5427, 7
        %v5429 = vsub.s32 %v2262, %v5428
        %v5430 = vrot.slane %v4939, %v5429
        %v5431 = vsel %vm2267, %v5430, %v5426
        %v5432 = vlaneseq
        %v5433 = vshrl.u32 %v5432, 7
        %v5434 = vsub.s32 %v2269, %v5433
        %v5435 = vrot.slane %v4942, %v5434
        %v5436 = vsel %vm2274, %v5435, %v5431
        %v5437 = vlaneseq
        %v5438 = vshrl.u32 %v5437, 7
        %v5439 = vsub.s32 %v2276, %v5438
        %v5440 = vrot.slane %v4945, %v5439
        %v5441 = vsel %vm2281, %v5440, %v5436
        %v5442 = vlaneseq
        %v5443 = vshrl.u32 %v5442, 7
        %v5444 = vsub.s32 %v2283, %v5443
        %v5445 = vrot.slane %v4948, %v5444
        %v5446 = vsel %vm2288, %v5445, %v5441
        %v5447 = vlaneseq
        %v5448 = vshrl.u32 %v5447, 7
        %v5449 = vsub.s32 %v2290, %v5448
        %v5450 = vrot.slane %v4951, %v5449
        %v5451 = vsel %vm2295, %v5450, %v5446
        %v5452 = vlaneseq
        %v5453 = vshrl.u32 %v5452, 7
        %v5454 = vsub.s32 %v2297, %v5453
        %v5455 = vrot.slane %v4954, %v5454
        %v5456 = vsel %vm2302, %v5455, %v5451
        %v5457 = vlaneseq
        %v5458 = vshrl.u32 %v5457, 7
        %v5459 = vsub.s32 %v2304, %v5458
        %v5460 = vrot.slane %v4957, %v5459
        %v5461 = vsel %vm2309, %v5460, %v5456
        %v5462 = vlaneseq
        %v5463 = vshrl.u32 %v5462, 7
        %v5464 = vsub.s32 %v2311, %v5463
        %v5465 = vrot.slane %v4960, %v5464
        %v5466 = vsel %vm2316, %v5465, %v5461
        %v5467 = vlaneseq
        %v5468 = vshrl.u32 %v5467, 7
        %v5469 = vsub.s32 %v2318, %v5468
        %v5470 = vrot.slane %v4963, %v5469
        %v5471 = vsel %vm2323, %v5470, %v5466
        %v5472 = vlaneseq
        %v5473 = vshrl.u32 %v5472, 7
        %v5474 = vsub.s32 %v2215, %v5473
        %v5475 = vrot.slane %v4966, %v5474
        %v5476 = vlaneseq
        %v5477 = vshrl.u32 %v5476, 7
        %v5478 = vsub.s32 %v2220, %v5477
        %v5479 = vrot.slane %v4969, %v5478
        %v5480 = vsel %vm2225, %v5479, %v5475
        %v5481 = vlaneseq
        %v5482 = vshrl.u32 %v5481, 7
        %v5483 = vsub.s32 %v2227, %v5482
        %v5484 = vrot.slane %v4972, %v5483
        %v5485 = vsel %vm2232, %v5484, %v5480
        %v5486 = vlaneseq
        %v5487 = vshrl.u32 %v5486, 7
        %v5488 = vsub.s32 %v2234, %v5487
        %v5489 = vrot.slane %v4975, %v5488
        %v5490 = vsel %vm2239, %v5489, %v5485
        %v5491 = vlaneseq
        %v5492 = vshrl.u32 %v5491, 7
        %v5493 = vsub.s32 %v2241, %v5492
        %v5494 = vrot.slane %v4978, %v5493
        %v5495 = vsel %vm2246, %v5494, %v5490
        %v5496 = vlaneseq
        %v5497 = vshrl.u32 %v5496, 7
        %v5498 = vsub.s32 %v2248, %v5497
        %v5499 = vrot.slane %v4981, %v5498
        %v5500 = vsel %vm2253, %v5499, %v5495
        %v5501 = vlaneseq
        %v5502 = vshrl.u32 %v5501, 7
        %v5503 = vsub.s32 %v2255, %v5502
        %v5504 = vrot.slane %v4984, %v5503
        %v5505 = vsel %vm2260, %v5504, %v5500
        %v5506 = vlaneseq
        %v5507 = vshrl.u32 %v5506, 7
        %v5508 = vsub.s32 %v2262, %v5507
        %v5509 = vrot.slane %v4987, %v5508
        %v5510 = vsel %vm2267, %v5509, %v5505
        %v5511 = vlaneseq
        %v5512 = vshrl.u32 %v5511, 7
        %v5513 = vsub.s32 %v2269, %v5512
        %v5514 = vrot.slane %v4990, %v5513
        %v5515 = vsel %vm2274, %v5514, %v5510
        %v5516 = vlaneseq
        %v5517 = vshrl.u32 %v5516, 7
        %v5518 = vsub.s32 %v2276, %v5517
        %v5519 = vrot.slane %v4993, %v5518
        %v5520 = vsel %vm2281, %v5519, %v5515
        %v5521 = vlaneseq
        %v5522 = vshrl.u32 %v5521, 7
        %v5523 = vsub.s32 %v2283, %v5522
        %v5524 = vrot.slane %v4996, %v5523
        %v5525 = vsel %vm2288, %v5524, %v5520
        %v5526 = vlaneseq
        %v5527 = vshrl.u32 %v5526, 7
        %v5528 = vsub.s32 %v2290, %v5527
        %v5529 = vrot.slane %v4999, %v5528
        %v5530 = vsel %vm2295, %v5529, %v5525
        %v5531 = vlaneseq
        %v5532 = vshrl.u32 %v5531, 7
        %v5533 = vsub.s32 %v2297, %v5532
        %v5534 = vrot.slane %v5002, %v5533
        %v5535 = vsel %vm2302, %v5534, %v5530
        %v5536 = vlaneseq
        %v5537 = vshrl.u32 %v5536, 7
        %v5538 = vsub.s32 %v2304, %v5537
        %v5539 = vrot.slane %v5005, %v5538
        %v5540 = vsel %vm2309, %v5539, %v5535
        %v5541 = vlaneseq
        %v5542 = vshrl.u32 %v5541, 7
        %v5543 = vsub.s32 %v2311, %v5542
        %v5544 = vrot.slane %v5008, %v5543
        %v5545 = vsel %vm2316, %v5544, %v5540
        %v5546 = vlaneseq
        %v5547 = vshrl.u32 %v5546, 7
        %v5548 = vsub.s32 %v2318, %v5547
        %v5549 = vrot.slane %v5011, %v5548
        %v5550 = vsel %vm2323, %v5549, %v5545
        %v5551 = vlaneseq
        %v5552 = vshrl.u32 %v5551, 7
        %v5553 = vsub.s32 %v2215, %v5552
        %v5554 = vrot.slane %v5014, %v5553
        %v5555 = vlaneseq
        %v5556 = vshrl.u32 %v5555, 7
        %v5557 = vsub.s32 %v2220, %v5556
        %v5558 = vrot.slane %v5017, %v5557
        %v5559 = vsel %vm2225, %v5558, %v5554
        %v5560 = vlaneseq
        %v5561 = vshrl.u32 %v5560, 7
        %v5562 = vsub.s32 %v2227, %v5561
        %v5563 = vrot.slane %v5020, %v5562
        %v5564 = vsel %vm2232, %v5563, %v5559
        %v5565 = vlaneseq
        %v5566 = vshrl.u32 %v5565, 7
        %v5567 = vsub.s32 %v2234, %v5566
        %v5568 = vrot.slane %v5023, %v5567
        %v5569 = vsel %vm2239, %v5568, %v5564
        %v5570 = vlaneseq
        %v5571 = vshrl.u32 %v5570, 7
        %v5572 = vsub.s32 %v2241, %v5571
        %v5573 = vrot.slane %v5026, %v5572
        %v5574 = vsel %vm2246, %v5573, %v5569
        %v5575 = vlaneseq
        %v5576 = vshrl.u32 %v5575, 7
        %v5577 = vsub.s32 %v2248, %v5576
        %v5578 = vrot.slane %v5029, %v5577
        %v5579 = vsel %vm2253, %v5578, %v5574
        %v5580 = vlaneseq
        %v5581 = vshrl.u32 %v5580, 7
        %v5582 = vsub.s32 %v2255, %v5581
        %v5583 = vrot.slane %v5032, %v5582
        %v5584 = vsel %vm2260, %v5583, %v5579
        %v5585 = vlaneseq
        %v5586 = vshrl.u32 %v5585, 7
        %v5587 = vsub.s32 %v2262, %v5586
        %v5588 = vrot.slane %v5035, %v5587
        %v5589 = vsel %vm2267, %v5588, %v5584
        %v5590 = vlaneseq
        %v5591 = vshrl.u32 %v5590, 7
        %v5592 = vsub.s32 %v2269, %v5591
        %v5593 = vrot.slane %v5038, %v5592
        %v5594 = vsel %vm2274, %v5593, %v5589
        %v5595 = vlaneseq
        %v5596 = vshrl.u32 %v5595, 7
        %v5597 = vsub.s32 %v2276, %v5596
        %v5598 = vrot.slane %v5041, %v5597
        %v5599 = vsel %vm2281, %v5598, %v5594
        %v5600 = vlaneseq
        %v5601 = vshrl.u32 %v5600, 7
        %v5602 = vsub.s32 %v2283, %v5601
        %v5603 = vrot.slane %v5044, %v5602
        %v5604 = vsel %vm2288, %v5603, %v5599
        %v5605 = vlaneseq
        %v5606 = vshrl.u32 %v5605, 7
        %v5607 = vsub.s32 %v2290, %v5606
        %v5608 = vrot.slane %v5047, %v5607
        %v5609 = vsel %vm2295, %v5608, %v5604
        %v5610 = vlaneseq
        %v5611 = vshrl.u32 %v5610, 7
        %v5612 = vsub.s32 %v2297, %v5611
        %v5613 = vrot.slane %v5050, %v5612
        %v5614 = vsel %vm2302, %v5613, %v5609
        %v5615 = vlaneseq
        %v5616 = vshrl.u32 %v5615, 7
        %v5617 = vsub.s32 %v2304, %v5616
        %v5618 = vrot.slane %v5053, %v5617
        %v5619 = vsel %vm2309, %v5618, %v5614
        %v5620 = vlaneseq
        %v5621 = vshrl.u32 %v5620, 7
        %v5622 = vsub.s32 %v2311, %v5621
        %v5623 = vrot.slane %v5056, %v5622
        %v5624 = vsel %vm2316, %v5623, %v5619
        %v5625 = vlaneseq
        %v5626 = vshrl.u32 %v5625, 7
        %v5627 = vsub.s32 %v2318, %v5626
        %v5628 = vrot.slane %v5059, %v5627
        %v5629 = vsel %vm2323, %v5628, %v5624
        %v5630 = vlaneseq
        %v5631 = vshrl.u32 %v5630, 7
        %v5632 = vsub.s32 %v2215, %v5631
        %v5633 = vrot.slane %v5062, %v5632
        %v5634 = vlaneseq
        %v5635 = vshrl.u32 %v5634, 7
        %v5636 = vsub.s32 %v2220, %v5635
        %v5637 = vrot.slane %v5065, %v5636
        %v5638 = vsel %vm2225, %v5637, %v5633
        %v5639 = vlaneseq
        %v5640 = vshrl.u32 %v5639, 7
        %v5641 = vsub.s32 %v2227, %v5640
        %v5642 = vrot.slane %v5068, %v5641
        %v5643 = vsel %vm2232, %v5642, %v5638
        %v5644 = vlaneseq
        %v5645 = vshrl.u32 %v5644, 7
        %v5646 = vsub.s32 %v2234, %v5645
        %v5647 = vrot.slane %v5071, %v5646
        %v5648 = vsel %vm2239, %v5647, %v5643
        %v5649 = vlaneseq
        %v5650 = vshrl.u32 %v5649, 7
        %v5651 = vsub.s32 %v2241, %v5650
        %v5652 = vrot.slane %v5074, %v5651
        %v5653 = vsel %vm2246, %v5652, %v5648
        %v5654 = vlaneseq
        %v5655 = vshrl.u32 %v5654, 7
        %v5656 = vsub.s32 %v2248, %v5655
        %v5657 = vrot.slane %v5077, %v5656
        %v5658 = vsel %vm2253, %v5657, %v5653
        %v5659 = vlaneseq
        %v5660 = vshrl.u32 %v5659, 7
        %v5661 = vsub.s32 %v2255, %v5660
        %v5662 = vrot.slane %v5080, %v5661
        %v5663 = vsel %vm2260, %v5662, %v5658
        %v5664 = vlaneseq
        %v5665 = vshrl.u32 %v5664, 7
        %v5666 = vsub.s32 %v2262, %v5665
        %v5667 = vrot.slane %v5083, %v5666
        %v5668 = vsel %vm2267, %v5667, %v5663
        %v5669 = vlaneseq
        %v5670 = vshrl.u32 %v5669, 7
        %v5671 = vsub.s32 %v2269, %v5670
        %v5672 = vrot.slane %v5086, %v5671
        %v5673 = vsel %vm2274, %v5672, %v5668
        %v5674 = vlaneseq
        %v5675 = vshrl.u32 %v5674, 7
        %v5676 = vsub.s32 %v2276, %v5675
        %v5677 = vrot.slane %v5089, %v5676
        %v5678 = vsel %vm2281, %v5677, %v5673
        %v5679 = vlaneseq
        %v5680 = vshrl.u32 %v5679, 7
        %v5681 = vsub.s32 %v2283, %v5680
        %v5682 = vrot.slane %v5092, %v5681
        %v5683 = vsel %vm2288, %v5682, %v5678
        %v5684 = vlaneseq
        %v5685 = vshrl.u32 %v5684, 7
        %v5686 = vsub.s32 %v2290, %v5685
        %v5687 = vrot.slane %v5095, %v5686
        %v5688 = vsel %vm2295, %v5687, %v5683
        %v5689 = vlaneseq
        %v5690 = vshrl.u32 %v5689, 7
        %v5691 = vsub.s32 %v2297, %v5690
        %v5692 = vrot.slane %v5098, %v5691
        %v5693 = vsel %vm2302, %v5692, %v5688
        %v5694 = vlaneseq
        %v5695 = vshrl.u32 %v5694, 7
        %v5696 = vsub.s32 %v2304, %v5695
        %v5697 = vrot.slane %v5101, %v5696
        %v5698 = vsel %vm2309, %v5697, %v5693
        %v5699 = vlaneseq
        %v5700 = vshrl.u32 %v5699, 7
        %v5701 = vsub.s32 %v2311, %v5700
        %v5702 = vrot.slane %v5104, %v5701
        %v5703 = vsel %vm2316, %v5702, %v5698
        %v5704 = vlaneseq
        %v5705 = vshrl.u32 %v5704, 7
        %v5706 = vsub.s32 %v2318, %v5705
        %v5707 = vrot.slane %v5107, %v5706
        %v5708 = vsel %vm2323, %v5707, %v5703
        %v5709 = vlaneseq
        %v5710 = vshrl.u32 %v5709, 7
        %v5711 = vsub.s32 %v2215, %v5710
        %v5712 = vrot.slane %v5110, %v5711
        %v5713 = vlaneseq
        %v5714 = vshrl.u32 %v5713, 7
        %v5715 = vsub.s32 %v2220, %v5714
        %v5716 = vrot.slane %v5113, %v5715
        %v5717 = vsel %vm2225, %v5716, %v5712
        %v5718 = vlaneseq
        %v5719 = vshrl.u32 %v5718, 7
        %v5720 = vsub.s32 %v2227, %v5719
        %v5721 = vrot.slane %v5116, %v5720
        %v5722 = vsel %vm2232, %v5721, %v5717
        %v5723 = vlaneseq
        %v5724 = vshrl.u32 %v5723, 7
        %v5725 = vsub.s32 %v2234, %v5724
        %v5726 = vrot.slane %v5119, %v5725
        %v5727 = vsel %vm2239, %v5726, %v5722
        %v5728 = vlaneseq
        %v5729 = vshrl.u32 %v5728, 7
        %v5730 = vsub.s32 %v2241, %v5729
        %v5731 = vrot.slane %v5122, %v5730
        %v5732 = vsel %vm2246, %v5731, %v5727
        %v5733 = vlaneseq
        %v5734 = vshrl.u32 %v5733, 7
        %v5735 = vsub.s32 %v2248, %v5734
        %v5736 = vrot.slane %v5125, %v5735
        %v5737 = vsel %vm2253, %v5736, %v5732
        %v5738 = vlaneseq
        %v5739 = vshrl.u32 %v5738, 7
        %v5740 = vsub.s32 %v2255, %v5739
        %v5741 = vrot.slane %v5128, %v5740
        %v5742 = vsel %vm2260, %v5741, %v5737
        %v5743 = vlaneseq
        %v5744 = vshrl.u32 %v5743, 7
        %v5745 = vsub.s32 %v2262, %v5744
        %v5746 = vrot.slane %v5131, %v5745
        %v5747 = vsel %vm2267, %v5746, %v5742
        %v5748 = vlaneseq
        %v5749 = vshrl.u32 %v5748, 7
        %v5750 = vsub.s32 %v2269, %v5749
        %v5751 = vrot.slane %v5134, %v5750
        %v5752 = vsel %vm2274, %v5751, %v5747
        %v5753 = vlaneseq
        %v5754 = vshrl.u32 %v5753, 7
        %v5755 = vsub.s32 %v2276, %v5754
        %v5756 = vrot.slane %v5137, %v5755
        %v5757 = vsel %vm2281, %v5756, %v5752
        %v5758 = vlaneseq
        %v5759 = vshrl.u32 %v5758, 7
        %v5760 = vsub.s32 %v2283, %v5759
        %v5761 = vrot.slane %v5140, %v5760
        %v5762 = vsel %vm2288, %v5761, %v5757
        %v5763 = vlaneseq
        %v5764 = vshrl.u32 %v5763, 7
        %v5765 = vsub.s32 %v2290, %v5764
        %v5766 = vrot.slane %v5143, %v5765
        %v5767 = vsel %vm2295, %v5766, %v5762
        %v5768 = vlaneseq
        %v5769 = vshrl.u32 %v5768, 7
        %v5770 = vsub.s32 %v2297, %v5769
        %v5771 = vrot.slane %v5146, %v5770
        %v5772 = vsel %vm2302, %v5771, %v5767
        %v5773 = vlaneseq
        %v5774 = vshrl.u32 %v5773, 7
        %v5775 = vsub.s32 %v2304, %v5774
        %v5776 = vrot.slane %v5149, %v5775
        %v5777 = vsel %vm2309, %v5776, %v5772
        %v5778 = vlaneseq
        %v5779 = vshrl.u32 %v5778, 7
        %v5780 = vsub.s32 %v2311, %v5779
        %v5781 = vrot.slane %v5152, %v5780
        %v5782 = vsel %vm2316, %v5781, %v5777
        %v5783 = vlaneseq
        %v5784 = vshrl.u32 %v5783, 7
        %v5785 = vsub.s32 %v2318, %v5784
        %v5786 = vrot.slane %v5155, %v5785
        %v5787 = vsel %vm2323, %v5786, %v5782
        %v5788 = vsel %vm2878, %v5313, %v5234
        %v5789 = vsel %vm2880, %v5392, %v5788
        %v5790 = vsel %vm2882, %v5471, %v5789
        %v5791 = vsel %vm2884, %v5550, %v5790
        %v5792 = vsel %vm2886, %v5629, %v5791
        %v5793 = vsel %vm2888, %v5708, %v5792
        %v5794 = vsel %vm2890, %v5787, %v5793
        %5796 = vst [vmem:[%s401] sm:$0xff] %v5794
        %v5925 = vmul.f32 %v403, %v4774
        %v5926 = vmul.f32 %v404, %v4777
        %v5927 = vmul.f32 %v405, %v4780
        %v5928 = vmul.f32 %v406, %v4783
        %v5929 = vmul.f32 %v407, %v4786
        %v5930 = vmul.f32 %v408, %v4789
        %v5931 = vmul.f32 %v409, %v4792
        %v5932 = vmul.f32 %v410, %v4795
        %v5933 = vmul.f32 %v411, %v4798
        %v5934 = vmul.f32 %v412, %v4801
        %v5935 = vmul.f32 %v413, %v4804
        %v5936 = vmul.f32 %v414, %v4807
        %v5937 = vmul.f32 %v415, %v4810
        %v5938 = vmul.f32 %v416, %v4813
        %v5939 = vmul.f32 %v417, %v4816
        %v5940 = vmul.f32 %v418, %v4819
        %v5941 = vmul.f32 %v419, %v4822
        %v5942 = vmul.f32 %v420, %v4825
        %v5943 = vmul.f32 %v421, %v4828
        %v5944 = vmul.f32 %v422, %v4831
        %v5945 = vmul.f32 %v423, %v4834
        %v5946 = vmul.f32 %v424, %v4837
        %v5947 = vmul.f32 %v425, %v4840
        %v5948 = vmul.f32 %v426, %v4843
        %v5949 = vmul.f32 %v427, %v4846
        %v5950 = vmul.f32 %v428, %v4849
        %v5951 = vmul.f32 %v429, %v4852
        %v5952 = vmul.f32 %v430, %v4855
        %v5953 = vmul.f32 %v431, %v4858
        %v5954 = vmul.f32 %v432, %v4861
        %v5955 = vmul.f32 %v433, %v4864
        %v5956 = vmul.f32 %v434, %v4867
        %v5957 = vmul.f32 %v435, %v4870
        %v5958 = vmul.f32 %v436, %v4873
        %v5959 = vmul.f32 %v437, %v4876
        %v5960 = vmul.f32 %v438, %v4879
        %v5961 = vmul.f32 %v439, %v4882
        %v5962 = vmul.f32 %v440, %v4885
        %v5963 = vmul.f32 %v441, %v4888
        %v5964 = vmul.f32 %v442, %v4891
        %v5965 = vmul.f32 %v443, %v4894
        %v5966 = vmul.f32 %v444, %v4897
        %v5967 = vmul.f32 %v445, %v4900
        %v5968 = vmul.f32 %v446, %v4903
        %v5969 = vmul.f32 %v447, %v4906
        %v5970 = vmul.f32 %v448, %v4909
        %v5971 = vmul.f32 %v449, %v4912
        %v5972 = vmul.f32 %v450, %v4915
        %v5973 = vmul.f32 %v451, %v4918
        %v5974 = vmul.f32 %v452, %v4921
        %v5975 = vmul.f32 %v453, %v4924
        %v5976 = vmul.f32 %v454, %v4927
        %v5977 = vmul.f32 %v455, %v4930
        %v5978 = vmul.f32 %v456, %v4933
        %v5979 = vmul.f32 %v457, %v4936
        %v5980 = vmul.f32 %v458, %v4939
        %v5981 = vmul.f32 %v459, %v4942
        %v5982 = vmul.f32 %v460, %v4945
        %v5983 = vmul.f32 %v461, %v4948
        %v5984 = vmul.f32 %v462, %v4951
        %v5985 = vmul.f32 %v463, %v4954
        %v5986 = vmul.f32 %v464, %v4957
        %v5987 = vmul.f32 %v465, %v4960
        %v5988 = vmul.f32 %v466, %v4963
        %v5989 = vmul.f32 %v467, %v4966
        %v5990 = vmul.f32 %v468, %v4969
        %v5991 = vmul.f32 %v469, %v4972
        %v5992 = vmul.f32 %v470, %v4975
        %v5993 = vmul.f32 %v471, %v4978
        %v5994 = vmul.f32 %v472, %v4981
        %v5995 = vmul.f32 %v473, %v4984
        %v5996 = vmul.f32 %v474, %v4987
        %v5997 = vmul.f32 %v475, %v4990
        %v5998 = vmul.f32 %v476, %v4993
        %v5999 = vmul.f32 %v477, %v4996
        %v6000 = vmul.f32 %v478, %v4999
        %v6001 = vmul.f32 %v479, %v5002
        %v6002 = vmul.f32 %v480, %v5005
        %v6003 = vmul.f32 %v481, %v5008
        %v6004 = vmul.f32 %v482, %v5011
        %v6005 = vmul.f32 %v483, %v5014
        %v6006 = vmul.f32 %v484, %v5017
        %v6007 = vmul.f32 %v485, %v5020
        %v6008 = vmul.f32 %v486, %v5023
        %v6009 = vmul.f32 %v487, %v5026
        %v6010 = vmul.f32 %v488, %v5029
        %v6011 = vmul.f32 %v489, %v5032
        %v6012 = vmul.f32 %v490, %v5035
        %v6013 = vmul.f32 %v491, %v5038
        %v6014 = vmul.f32 %v492, %v5041
        %v6015 = vmul.f32 %v493, %v5044
        %v6016 = vmul.f32 %v494, %v5047
        %v6017 = vmul.f32 %v495, %v5050
        %v6018 = vmul.f32 %v496, %v5053
        %v6019 = vmul.f32 %v497, %v5056
        %v6020 = vmul.f32 %v498, %v5059
        %v6021 = vmul.f32 %v499, %v5062
        %v6022 = vmul.f32 %v500, %v5065
        %v6023 = vmul.f32 %v501, %v5068
        %v6024 = vmul.f32 %v502, %v5071
        %v6025 = vmul.f32 %v503, %v5074
        %v6026 = vmul.f32 %v504, %v5077
        %v6027 = vmul.f32 %v505, %v5080
        %v6028 = vmul.f32 %v506, %v5083
        %v6029 = vmul.f32 %v507, %v5086
        %v6030 = vmul.f32 %v508, %v5089
        %v6031 = vmul.f32 %v509, %v5092
        %v6032 = vmul.f32 %v510, %v5095
        %v6033 = vmul.f32 %v511, %v5098
        %v6034 = vmul.f32 %v512, %v5101
        %v6035 = vmul.f32 %v513, %v5104
        %v6036 = vmul.f32 %v514, %v5107
        %v6037 = vmul.f32 %v515, %v5110
        %v6038 = vmul.f32 %v516, %v5113
        %v6039 = vmul.f32 %v517, %v5116
        %v6040 = vmul.f32 %v518, %v5119
        %v6041 = vmul.f32 %v519, %v5122
        %v6042 = vmul.f32 %v520, %v5125
        %v6043 = vmul.f32 %v521, %v5128
        %v6044 = vmul.f32 %v522, %v5131
        %v6045 = vmul.f32 %v523, %v5134
        %v6046 = vmul.f32 %v524, %v5137
        %v6047 = vmul.f32 %v525, %v5140
        %v6048 = vmul.f32 %v526, %v5143
        %v6049 = vmul.f32 %v527, %v5146
        %v6050 = vmul.f32 %v528, %v5149
        %v6051 = vmul.f32 %v529, %v5152
        %v6052 = vmul.f32 %v530, %v5155
        %v6053 = vadd.f32 %v5925, %v5926
        %v6054 = vadd.f32 %v6053, %v5927
        %v6055 = vadd.f32 %v6054, %v5928
        %v6056 = vadd.f32 %v6055, %v5929
        %v6057 = vadd.f32 %v6056, %v5930
        %v6058 = vadd.f32 %v6057, %v5931
        %v6059 = vadd.f32 %v6058, %v5932
        %v6060 = vadd.f32 %v6059, %v5933
        %v6061 = vadd.f32 %v6060, %v5934
        %v6062 = vadd.f32 %v6061, %v5935
        %v6063 = vadd.f32 %v6062, %v5936
        %v6064 = vadd.f32 %v6063, %v5937
        %v6065 = vadd.f32 %v6064, %v5938
        %v6066 = vadd.f32 %v6065, %v5939
        %v6067 = vadd.f32 %v6066, %v5940
        %v6068 = vrot.slane %v6067, 4
        %v6069 = vadd.f32 %v6067, %v6068
        %v6070 = vrot.slane %v6069, 2
        %v6071 = vadd.f32 %v6069, %v6070
        %v6072 = vrot.slane %v6071, 1
        %v6073 = vadd.f32 %v6071, %v6072
        %v6074 = vadd.f32 %v5941, %v5942
        %v6075 = vadd.f32 %v6074, %v5943
        %v6076 = vadd.f32 %v6075, %v5944
        %v6077 = vadd.f32 %v6076, %v5945
        %v6078 = vadd.f32 %v6077, %v5946
        %v6079 = vadd.f32 %v6078, %v5947
        %v6080 = vadd.f32 %v6079, %v5948
        %v6081 = vadd.f32 %v6080, %v5949
        %v6082 = vadd.f32 %v6081, %v5950
        %v6083 = vadd.f32 %v6082, %v5951
        %v6084 = vadd.f32 %v6083, %v5952
        %v6085 = vadd.f32 %v6084, %v5953
        %v6086 = vadd.f32 %v6085, %v5954
        %v6087 = vadd.f32 %v6086, %v5955
        %v6088 = vadd.f32 %v6087, %v5956
        %v6089 = vrot.slane %v6088, 4
        %v6090 = vadd.f32 %v6088, %v6089
        %v6091 = vrot.slane %v6090, 2
        %v6092 = vadd.f32 %v6090, %v6091
        %v6093 = vrot.slane %v6092, 1
        %v6094 = vadd.f32 %v6092, %v6093
        %v6095 = vadd.f32 %v5957, %v5958
        %v6096 = vadd.f32 %v6095, %v5959
        %v6097 = vadd.f32 %v6096, %v5960
        %v6098 = vadd.f32 %v6097, %v5961
        %v6099 = vadd.f32 %v6098, %v5962
        %v6100 = vadd.f32 %v6099, %v5963
        %v6101 = vadd.f32 %v6100, %v5964
        %v6102 = vadd.f32 %v6101, %v5965
        %v6103 = vadd.f32 %v6102, %v5966
        %v6104 = vadd.f32 %v6103, %v5967
        %v6105 = vadd.f32 %v6104, %v5968
        %v6106 = vadd.f32 %v6105, %v5969
        %v6107 = vadd.f32 %v6106, %v5970
        %v6108 = vadd.f32 %v6107, %v5971
        %v6109 = vadd.f32 %v6108, %v5972
        %v6110 = vrot.slane %v6109, 4
        %v6111 = vadd.f32 %v6109, %v6110
        %v6112 = vrot.slane %v6111, 2
        %v6113 = vadd.f32 %v6111, %v6112
        %v6114 = vrot.slane %v6113, 1
        %v6115 = vadd.f32 %v6113, %v6114
        %v6116 = vadd.f32 %v5973, %v5974
        %v6117 = vadd.f32 %v6116, %v5975
        %v6118 = vadd.f32 %v6117, %v5976
        %v6119 = vadd.f32 %v6118, %v5977
        %v6120 = vadd.f32 %v6119, %v5978
        %v6121 = vadd.f32 %v6120, %v5979
        %v6122 = vadd.f32 %v6121, %v5980
        %v6123 = vadd.f32 %v6122, %v5981
        %v6124 = vadd.f32 %v6123, %v5982
        %v6125 = vadd.f32 %v6124, %v5983
        %v6126 = vadd.f32 %v6125, %v5984
        %v6127 = vadd.f32 %v6126, %v5985
        %v6128 = vadd.f32 %v6127, %v5986
        %v6129 = vadd.f32 %v6128, %v5987
        %v6130 = vadd.f32 %v6129, %v5988
        %v6131 = vrot.slane %v6130, 4
        %v6132 = vadd.f32 %v6130, %v6131
        %v6133 = vrot.slane %v6132, 2
        %v6134 = vadd.f32 %v6132, %v6133
        %v6135 = vrot.slane %v6134, 1
        %v6136 = vadd.f32 %v6134, %v6135
        %v6137 = vadd.f32 %v5989, %v5990
        %v6138 = vadd.f32 %v6137, %v5991
        %v6139 = vadd.f32 %v6138, %v5992
        %v6140 = vadd.f32 %v6139, %v5993
        %v6141 = vadd.f32 %v6140, %v5994
        %v6142 = vadd.f32 %v6141, %v5995
        %v6143 = vadd.f32 %v6142, %v5996
        %v6144 = vadd.f32 %v6143, %v5997
        %v6145 = vadd.f32 %v6144, %v5998
        %v6146 = vadd.f32 %v6145, %v5999
        %v6147 = vadd.f32 %v6146, %v6000
        %v6148 = vadd.f32 %v6147, %v6001
        %v6149 = vadd.f32 %v6148, %v6002
        %v6150 = vadd.f32 %v6149, %v6003
        %v6151 = vadd.f32 %v6150, %v6004
        %v6152 = vrot.slane %v6151, 4
        %v6153 = vadd.f32 %v6151, %v6152
        %v6154 = vrot.slane %v6153, 2
        %v6155 = vadd.f32 %v6153, %v6154
        %v6156 = vrot.slane %v6155, 1
        %v6157 = vadd.f32 %v6155, %v6156
        %v6158 = vadd.f32 %v6005, %v6006
        %v6159 = vadd.f32 %v6158, %v6007
        %v6160 = vadd.f32 %v6159, %v6008
        %v6161 = vadd.f32 %v6160, %v6009
        %v6162 = vadd.f32 %v6161, %v6010
        %v6163 = vadd.f32 %v6162, %v6011
        %v6164 = vadd.f32 %v6163, %v6012
        %v6165 = vadd.f32 %v6164, %v6013
        %v6166 = vadd.f32 %v6165, %v6014
        %v6167 = vadd.f32 %v6166, %v6015
        %v6168 = vadd.f32 %v6167, %v6016
        %v6169 = vadd.f32 %v6168, %v6017
        %v6170 = vadd.f32 %v6169, %v6018
        %v6171 = vadd.f32 %v6170, %v6019
        %v6172 = vadd.f32 %v6171, %v6020
        %v6173 = vrot.slane %v6172, 4
        %v6174 = vadd.f32 %v6172, %v6173
        %v6175 = vrot.slane %v6174, 2
        %v6176 = vadd.f32 %v6174, %v6175
        %v6177 = vrot.slane %v6176, 1
        %v6178 = vadd.f32 %v6176, %v6177
        %v6179 = vadd.f32 %v6021, %v6022
        %v6180 = vadd.f32 %v6179, %v6023
        %v6181 = vadd.f32 %v6180, %v6024
        %v6182 = vadd.f32 %v6181, %v6025
        %v6183 = vadd.f32 %v6182, %v6026
        %v6184 = vadd.f32 %v6183, %v6027
        %v6185 = vadd.f32 %v6184, %v6028
        %v6186 = vadd.f32 %v6185, %v6029
        %v6187 = vadd.f32 %v6186, %v6030
        %v6188 = vadd.f32 %v6187, %v6031
        %v6189 = vadd.f32 %v6188, %v6032
        %v6190 = vadd.f32 %v6189, %v6033
        %v6191 = vadd.f32 %v6190, %v6034
        %v6192 = vadd.f32 %v6191, %v6035
        %v6193 = vadd.f32 %v6192, %v6036
        %v6194 = vrot.slane %v6193, 4
        %v6195 = vadd.f32 %v6193, %v6194
        %v6196 = vrot.slane %v6195, 2
        %v6197 = vadd.f32 %v6195, %v6196
        %v6198 = vrot.slane %v6197, 1
        %v6199 = vadd.f32 %v6197, %v6198
        %v6200 = vadd.f32 %v6037, %v6038
        %v6201 = vadd.f32 %v6200, %v6039
        %v6202 = vadd.f32 %v6201, %v6040
        %v6203 = vadd.f32 %v6202, %v6041
        %v6204 = vadd.f32 %v6203, %v6042
        %v6205 = vadd.f32 %v6204, %v6043
        %v6206 = vadd.f32 %v6205, %v6044
        %v6207 = vadd.f32 %v6206, %v6045
        %v6208 = vadd.f32 %v6207, %v6046
        %v6209 = vadd.f32 %v6208, %v6047
        %v6210 = vadd.f32 %v6209, %v6048
        %v6211 = vadd.f32 %v6210, %v6049
        %v6212 = vadd.f32 %v6211, %v6050
        %v6213 = vadd.f32 %v6212, %v6051
        %v6214 = vadd.f32 %v6213, %v6052
        %v6215 = vrot.slane %v6214, 4
        %v6216 = vadd.f32 %v6214, %v6215
        %v6217 = vrot.slane %v6216, 2
        %v6218 = vadd.f32 %v6216, %v6217
        %v6219 = vrot.slane %v6218, 1
        %v6220 = vadd.f32 %v6218, %v6219
        %v6229 = vsel %vm2878, %v6094, %v6073
        %v6230 = vsel %vm2880, %v6115, %v6229
        %v6231 = vsel %vm2882, %v6136, %v6230
        %v6232 = vsel %vm2884, %v6157, %v6231
        %v6233 = vsel %vm2886, %v6178, %v6232
        %v6234 = vsel %vm2888, %v6199, %v6233
        %v6235 = vsel %vm2890, %v6220, %v6234
        %6237 = vst [vmem:[%s394] sm:$0xff] %v6235
        %s6238 = sand.u32 %s198, 1
        %s6239 = scalar_lea.sflag [#allocation4], %s6238
        %s6240 = sand.u32 %s198, 1
        %s6241 = smul.addr %s6240, 8
        %s6242 = scalar_lea.vmem [#allocation10], %s6241
        %s6243 = sand.u32 %s224, 1
        %s6244 = scalar_lea.sflag [#allocation12], %s6243
        %s6245 = sand.u32 %s224, 1
        %s6246 = smul.addr %s6245, 8
        %s6247 = scalar_lea.vmem [#allocation11], %s6246
        // Predicated region
        $region65: #{tpu_custom_call.1} parent=47 // pred_check
          %p6248 = pneg %p208
        $region66: #{tpu_custom_call.1} parent=47 // pred_check_branch
          %6250 = sbr.rel (%p6248) target = $region68
        $region67: #{tpu_custom_call.1} parent=47 // pred_region
          %s6252 = ssub.s32 128, 128
          %6253 = vsyncadd %s6239, %s6252
          %s6254 = smul.addr %s33, 128
          %s6255 = scalar_lea.hbm %s7, %s6254
          %s6257 = sshll.u32 %s6242, 4
          %s6258 = int_to_ptr.vmem [resolvable:$true] %s6257
          %6260 = dma.vmem_to_hbm [thread:$0]  %s6258, 128, %s6255, %s6239
        $region68: #{tpu_custom_call.1} parent=47 // pred_fallthru
          _
        // Predicated region
        $region69: #{tpu_custom_call.1} parent=47 // pred_check
          %p6261 = pneg %p234
        $region70: #{tpu_custom_call.1} parent=47 // pred_check_branch
          %6263 = sbr.rel (%p6261) target = $region72
        $region71: #{tpu_custom_call.1} parent=47 // pred_region
          %s6265 = ssub.s32 128, 128
          %6266 = vsyncadd %s6244, %s6265
          %s6267 = smul.addr %s33, 128
          %s6268 = scalar_lea.hbm %s8, %s6267
          %s6270 = sshll.u32 %s6247, 4
          %s6271 = int_to_ptr.vmem [resolvable:$true] %s6270
          %6273 = dma.vmem_to_hbm [thread:$0]  %s6271, 128, %s6268, %s6244
        $region72: #{tpu_custom_call.1} parent=47 // pred_fallthru
          _
      $region48: #{tpu_custom_call.1} parent=5 // pred_fallthru
        _
      %p6274 = scmp.le.s32.totalorder 2, %s28
      // Predicated region
      $region73: #{tpu_custom_call.1} parent=5 // pred_check
        %p6275 = pneg %p6274
      $region74: #{tpu_custom_call.1} parent=5 // pred_check_branch
        %6277 = sbr.rel (%p6275) target = $region76
      $region75: #{tpu_custom_call.1} parent=5 // pred_region
        %s6278 = ssub.s32 %s28, 2
        // Predicated region
        $region77: #{tpu_custom_call.1} parent=75 // pred_check
          %p6279 = pneg %p214
        $region78: #{tpu_custom_call.1} parent=75 // pred_check_branch
          %6281 = sbr.rel (%p6279) target = $region80
        $region79: #{tpu_custom_call.1} parent=75 // pred_region
          %s6282 = sand.u32 %s199, 1
          %s6283 = scalar_lea.sflag [#allocation4], %s6282
          %s6284 = sand.u32 %s199, 1
          %s6285 = smul.addr %s6284, 8
          %s6286 = scalar_lea.vmem [#allocation10], %s6285
          %6287 = dma.done %s6283, 128
        $region80: #{tpu_custom_call.1} parent=75 // pred_fallthru
          _
        // Predicated region
        $region81: #{tpu_custom_call.1} parent=75 // pred_check
          %p6288 = pneg %p240
        $region82: #{tpu_custom_call.1} parent=75 // pred_check_branch
          %6290 = sbr.rel (%p6288) target = $region84
        $region83: #{tpu_custom_call.1} parent=75 // pred_region
          %s6291 = sand.u32 %s225, 1
          %s6292 = scalar_lea.sflag [#allocation12], %s6291
          %s6293 = sand.u32 %s225, 1
          %s6294 = smul.addr %s6293, 8
          %s6295 = scalar_lea.vmem [#allocation11], %s6294
          %6296 = dma.done %s6292, 128
        $region84: #{tpu_custom_call.1} parent=75 // pred_fallthru
          _
      $region76: #{tpu_custom_call.1} parent=5 // pred_fallthru
        _
    $region6: #{tpu_custom_call.1} parent=1 // loop_footer
      %s32 = sadd.s32 1, %s28
    $region7: #{tpu_custom_call.1} parent=1 // loop_footer_branch
      %27 = sbr.rel target = $region3
    $region8: #{tpu_custom_call.1} parent=1 // loop_exit
      _
    %6297 = vsyncpa [#allocation3], 1
    %s6298 = scalar_lea.sflag [#allocation3], 1
    %6299 = vsyncpa %s6298, 1
    %6300 = vsyncpa [#allocation6], 1
    %s6301 = scalar_lea.sflag [#allocation6], 1
    %6302 = vsyncpa %s6301, 1
    %6303 = vsyncpa [#allocation9], 1
    %6304 = vsyncpa [#allocation4], 1
    %s6305 = scalar_lea.sflag [#allocation4], 1
    %6306 = vsyncpa %s6305, 1
    %6307 = vsyncpa [#allocation12], 1
    %s6308 = scalar_lea.sflag [#allocation12], 1
    %6309 = vsyncpa %s6308, 1

</llo_original>
